<compile_context>
chip_gen: v5e
topology: v5e:2x2
jax: 0.10.0
libtpu: 0.0.40
codegen_flags: <defaults>
</compile_context>

<pallas_src>
import functools

import jax
import jax.numpy as jnp
import numpy as np
from jax.experimental import pallas as pl
from jax.experimental.pallas import tpu as pltpu


# ---------------- static model geometry ----------------
H1, W1 = 100, 4            # conv1 input spatial (implied by 32*25*1 flatten)
C0, C1, C2 = 1, 16, 32     # channels
K, P = 5, 2                # conv kernel size / padding
H2, W2 = H1 // 2, W1 // 2  # after pool1: (50, 2)
H3, W3 = H2 // 2, W2 // 2  # after pool2: (25, 1)
F_FLAT = C2 * H3 * W3      # 800
N_FC1, N_FC2, N_FC3 = 256, 128, 64
BN_EPS = 1e-5


# ---------------- fused forward kernel (one grid step == one batch element) ----------------
def _cnn_fused_kernel(x_ref, w1_ref, b1_ref, ph1_ref, w2_ref, b2_ref, ph2_ref,
                      wfc1_ref, bfc1_ref, bn1s_ref, bn1b_ref,
                      wfc2_ref, bfc2_ref, bn2s_ref, bn2b_ref,
                      wfc3_ref, bfc3_ref, out_ref):
    f32 = jnp.float32
    x = x_ref[0]            # (W1, H1 + 2P)   rows = W columns of the image, lanes = padded H
    w1 = w1_ref[...]        # (C1, K*K)       ordered (kw, kh)  (C_in == 1)
    b1 = b1_ref[...]        # (C1, 1)
    ph1 = ph1_ref[...]      # (H1, H2 + 2P)   avg-pool-by-2 along H, embeds conv2's zero padding
    w2 = w2_ref[...]        # (C2, K*K*C1)    ordered (kw, kh, ci)
    b2 = b2_ref[...]        # (C2, 1)
    ph2 = ph2_ref[...]      # (H2, H3)

    # ---- conv1 (5x5, pad 2) + ReLU, then H half of AvgPool2d(2,2) as a matmul ----
    pooled1 = []
    for w_out in range(W1):
        acc = jnp.broadcast_to(b1, (C1, H1)).astype(f32)
        for dj in range(K):
            wj = w_out + dj - P
            if 0 <= wj < W1:                      # zero-padded W columns contribute nothing
                row = x[wj:wj + 1, :]             # (1, H1 + 2P)
                for di in range(K):
                    w_col = w1[:, dj * K + di:dj * K + di + 1]     # (C1, 1)
                    acc = acc + w_col * row[:, di:di + H1]         # broadcast MAC (C1, H1)
        y = jnp.maximum(acc, 0.0)
        pooled1.append(jnp.dot(y, ph1, preferred_element_type=f32))   # (C1, H2 + 2P)
    # W half of AvgPool2d(2,2): average adjacent column arrays
    cols1 = [0.5 * (pooled1[2 * w] + pooled1[2 * w + 1]) for w in range(W2)]

    # ---- conv2 (5x5, pad 2) + ReLU + AvgPool2d(2,2) ----
    pooled2 = []
    for w_out in range(W2):
        acc = jnp.broadcast_to(b2, (C2, H2)).astype(f32)
        for dj in range(K):
            wj = w_out + dj - P
            if 0 <= wj < W2:
                col = cols1[wj]                                        # (C1, H2 + 2P)
                patch = jnp.concatenate(
                    [col[:, di:di + H2] for di in range(K)], axis=0)   # (K*C1, H2)
                acc = acc + jnp.dot(w2[:, dj * K * C1:(dj + 1) * K * C1], patch,
                                    preferred_element_type=f32)
        y = jnp.maximum(acc, 0.0)                                      # (C2, H2)
        pooled2.append(jnp.dot(y, ph2, preferred_element_type=f32))    # (C2, H3)
    # final W average -> (C2, H3); row-major flatten of this equals PyTorch's (c, h, w) order
    feat = 0.5 * (pooled2[0] + pooled2[1])

    # ---- fc1 + BatchNorm1d (eval, folded) + ReLU ----
    h = bfc1_ref[...].astype(f32)                                      # (1, N_FC1)
    for c in range(C2):
        h = h + jnp.dot(feat[c:c + 1, :], wfc1_ref[c],                 # (1,25) @ (25,256)
                        preferred_element_type=f32)
    h = jnp.maximum(h * bn1s_ref[...] + bn1b_ref[...], 0.0)

    # ---- fc2 + BatchNorm1d (eval, folded) + ReLU ----
    h = jnp.dot(h, wfc2_ref[...], preferred_element_type=f32) + bfc2_ref[...]
    h = jnp.maximum(h * bn2s_ref[...] + bn2b_ref[...], 0.0)

    # ---- fc3 ----
    out = jnp.dot(h, wfc3_ref[...], preferred_element_type=f32) + bfc3_ref[...]
    out_ref[0] = out.astype(out_ref.dtype)


# ---------------- wrapper: layout prep (cheap JAX glue) + single pallas_call ----------------
def cnn_forward(params, x):
    B = x.shape[0]
    assert x.shape == (B, C0, H1, W1), x.shape
    f32 = jnp.float32

    # image: (B, 1, H, W) -> per-W-column rows, H on lanes, zero-padded by P along H
    x_cols = jnp.transpose(x[:, 0, :, :], (0, 2, 1))           # (B, W1, H1)
    x_cols = jnp.pad(x_cols, ((0, 0), (0, 0), (P, P)))         # (B, W1, H1 + 2P)

    # conv weights (C_out, C_in, kh, kw) -> (C_out, kw*kh*ci) so the kernel slices per-kw blocks
    w1m = jnp.transpose(params["conv1_w"], (0, 3, 2, 1)).reshape(C1, K * K * C0)
    w2m = jnp.transpose(params["conv2_w"], (0, 3, 2, 1)).reshape(C2, K * K * C1)
    b1 = params["conv1_b"].reshape(C1, 1)
    b2 = params["conv2_b"].reshape(C2, 1)

    # avg-pool-by-2 along H as matmul matrices; ph1 also embeds conv2's zero H-padding
    ph1 = 0.5 * jnp.repeat(jnp.eye(H2, dtype=f32), 2, axis=0)      # (H1, H2)
    ph1 = jnp.pad(ph1, ((0, 0), (P, P)))                           # (H1, H2 + 2P)
    ph2 = 0.5 * jnp.repeat(jnp.eye(H3, dtype=f32), 2, axis=0)      # (H2, H3)

    # fc weights (PyTorch (out, in)) -> right-multiply layout; fc1 split per conv channel so the
    # kernel never needs to flatten the (C2, H3) feature map (PyTorch flatten order = c*H3 + h)
    wfc1 = params["fc1_w"].T.reshape(C2, H3 * W3, N_FC1)           # (32, 25, 256)
    wfc2 = params["fc2_w"].T                                       # (256, 128)
    wfc3 = params["fc3_w"].T                                       # (128, 64)
    bfc1 = params["fc1_b"].reshape(1, N_FC1)
    bfc2 = params["fc2_b"].reshape(1, N_FC2)
    bfc3 = params["fc3_b"].reshape(1, N_FC3)

    # BatchNorm1d (eval mode) folded to scale/shift
    bn1s = (params["bn1_gamma"] * jax.lax.rsqrt(params["bn1_var"] + BN_EPS)).reshape(1, N_FC1)
    bn1b = (params["bn1_beta"] - params["bn1_mean"] * bn1s[0]).reshape(1, N_FC1)
    bn2s = (params["bn2_gamma"] * jax.lax.rsqrt(params["bn2_var"] + BN_EPS)).reshape(1, N_FC2)
    bn2b = (params["bn2_beta"] - params["bn2_mean"] * bn2s[0]).reshape(1, N_FC2)

    args = (x_cols, w1m, b1, ph1, w2m, b2, ph2,
            wfc1, bfc1, bn1s, bn1b, wfc2, bfc2, bn2s, bn2b, wfc3, bfc3)

    def const_spec(a):
        return pl.BlockSpec(a.shape, lambda b, _nd=a.ndim: (0,) * _nd)

    in_specs = ([pl.BlockSpec((1, W1, H1 + 2 * P), lambda b: (b, 0, 0))]
                + [const_spec(a) for a in args[1:]])

    out = pl.pallas_call(
        _cnn_fused_kernel,
        out_shape=jax.ShapeDtypeStruct((B, 1, N_FC3), f32),
        grid=(B,),
        in_specs=in_specs,
        out_specs=pl.BlockSpec((1, 1, N_FC3), lambda b: (b, 0, 0)),
        compiler_params=pltpu.CompilerParams(dimension_semantics=("parallel",)),
    )(*args)
    return out.reshape(B, N_FC3)


# ---------------- pure-JAX reference (for a sanity check) ----------------
def cnn_reference(params, x):
    B = x.shape[0]
    dn = ("NCHW", "OIHW", "NCHW")
    y = jax.lax.conv_general_dilated(x, params["conv1_w"], (1, 1), ((P, P), (P, P)),
                                     dimension_numbers=dn)
    y = jax.nn.relu(y + params["conv1_b"][None, :, None, None])
    y = y.reshape(B, C1, H1 // 2, 2, W1 // 2, 2).mean(axis=(3, 5))
    y = jax.lax.conv_general_dilated(y, params["conv2_w"], (1, 1), ((P, P), (P, P)),
                                     dimension_numbers=dn)
    y = jax.nn.relu(y + params["conv2_b"][None, :, None, None])
    y = y.reshape(B, C2, H2 // 2, 2, W2 // 2, 2).mean(axis=(3, 5))
    y = y.reshape(B, -1)                                            # (B, 800), (c, h, w) order
    y = y @ params["fc1_w"].T + params["fc1_b"]
    y = (y - params["bn1_mean"]) * jax.lax.rsqrt(params["bn1_var"] + BN_EPS) \
        * params["bn1_gamma"] + params["bn1_beta"]
    y = jax.nn.relu(y)
    y = y @ params["fc2_w"].T + params["fc2_b"]
    y = (y - params["bn2_mean"]) * jax.lax.rsqrt(params["bn2_var"] + BN_EPS) \
        * params["bn2_gamma"] + params["bn2_beta"]
    y = jax.nn.relu(y)
    return y @ params["fc3_w"].T + params["fc3_b"]


def init_params(key):
    ks = jax.random.split(key, 18)

    def nrm(k, shape, scale=0.05):
        return scale * jax.random.normal(k, shape, dtype=jnp.float32)

    return {
        "conv1_w": nrm(ks[0], (C1, C0, K, K)), "conv1_b": nrm(ks[1], (C1,)),
        "conv2_w": nrm(ks[2], (C2, C1, K, K)), "conv2_b": nrm(ks[3], (C2,)),
        "fc1_w": nrm(ks[4], (N_FC1, F_FLAT)), "fc1_b": nrm(ks[5], (N_FC1,)),
        "bn1_gamma": 1.0 + nrm(ks[6], (N_FC1,)), "bn1_beta": nrm(ks[7], (N_FC1,)),
        "bn1_mean": nrm(ks[8], (N_FC1,)), "bn1_var": 1.0 + jnp.abs(nrm(ks[9], (N_FC1,))),
        "fc2_w": nrm(ks[10], (N_FC2, N_FC1)), "fc2_b": nrm(ks[11], (N_FC2,)),
        "bn2_gamma": 1.0 + nrm(ks[12], (N_FC2,)), "bn2_beta": nrm(ks[13], (N_FC2,)),
        "bn2_mean": nrm(ks[14], (N_FC2,)), "bn2_var": 1.0 + jnp.abs(nrm(ks[15], (N_FC2,))),
        "fc3_w": nrm(ks[16], (N_FC3, N_FC2)), "fc3_b": nrm(ks[17], (N_FC3,)),
    }


if __name__ == "__main__":
    root = jax.random.PRNGKey(0)
    k_x, k_p = jax.random.split(root)

    B = 2
    x = jax.random.normal(k_x, (B, C0, H1, W1), dtype=jnp.float32)   # (2, 1, 100, 4)
    params = init_params(k_p)

    fwd = jax.jit(cnn_forward)
    out = jax.block_until_ready(fwd(params, x))
    assert out.shape == (B, N_FC3), out.shape

    ref = jax.block_until_ready(jax.jit(cnn_reference)(params, x))
    np.testing.assert_allclose(np.asarray(out), np.asarray(ref), rtol=5e-2, atol=2e-2)

    print("KERNEL_OK")
</pallas_src>

<mosaic_0001>
module attributes {stable_mosaic.version = 11 : i64} {
  func.func @_cnn_fused_kernel(%arg0: i32, %arg1: memref<1x4x104xf32, #tpu.memory_space<vmem>>, %arg2: memref<16x25xf32, #tpu.memory_space<vmem>>, %arg3: memref<16x1xf32, #tpu.memory_space<vmem>>, %arg4: memref<100x54xf32, #tpu.memory_space<vmem>>, %arg5: memref<32x400xf32, #tpu.memory_space<vmem>>, %arg6: memref<32x1xf32, #tpu.memory_space<vmem>>, %arg7: memref<50x25xf32, #tpu.memory_space<vmem>>, %arg8: memref<32x25x256xf32, #tpu.memory_space<vmem>>, %arg9: memref<1x256xf32, #tpu.memory_space<vmem>>, %arg10: memref<1x256xf32, #tpu.memory_space<vmem>>, %arg11: memref<1x256xf32, #tpu.memory_space<vmem>>, %arg12: memref<256x128xf32, #tpu.memory_space<vmem>>, %arg13: memref<1x128xf32, #tpu.memory_space<vmem>>, %arg14: memref<1x128xf32, #tpu.memory_space<vmem>>, %arg15: memref<1x128xf32, #tpu.memory_space<vmem>>, %arg16: memref<128x64xf32, #tpu.memory_space<vmem>>, %arg17: memref<1x64xf32, #tpu.memory_space<vmem>>, %arg18: memref<1x1x64xf32, #tpu.memory_space<vmem>>) attributes {dimension_semantics = [#tpu.dimension_semantics<parallel>], iteration_bounds = array<i64: 2>, scalar_prefetch = 0 : i64, scratch_operands = 0 : i64, tpu.core_type = #tpu.core_type<tc>, window_params = [{transform_indices = @transform_0, window_bounds = array<i64: 1, 4, 104>}, {pipeline_mode = #tpu.pipeline_mode<synchronous>, transform_indices = @transform_1, window_bounds = array<i64: 16, 25>}, {pipeline_mode = #tpu.pipeline_mode<synchronous>, transform_indices = @transform_2, window_bounds = array<i64: 16, 1>}, {pipeline_mode = #tpu.pipeline_mode<synchronous>, transform_indices = @transform_3, window_bounds = array<i64: 100, 54>}, {pipeline_mode = #tpu.pipeline_mode<synchronous>, transform_indices = @transform_4, window_bounds = array<i64: 32, 400>}, {pipeline_mode = #tpu.pipeline_mode<synchronous>, transform_indices = @transform_5, window_bounds = array<i64: 32, 1>}, {pipeline_mode = #tpu.pipeline_mode<synchronous>, transform_indices = @transform_6, window_bounds = array<i64: 50, 25>}, {pipeline_mode = #tpu.pipeline_mode<synchronous>, transform_indices = @transform_7, window_bounds = array<i64: 32, 25, 256>}, {pipeline_mode = #tpu.pipeline_mode<synchronous>, transform_indices = @transform_8, window_bounds = array<i64: 1, 256>}, {pipeline_mode = #tpu.pipeline_mode<synchronous>, transform_indices = @transform_9, window_bounds = array<i64: 1, 256>}, {pipeline_mode = #tpu.pipeline_mode<synchronous>, transform_indices = @transform_10, window_bounds = array<i64: 1, 256>}, {pipeline_mode = #tpu.pipeline_mode<synchronous>, transform_indices = @transform_11, window_bounds = array<i64: 256, 128>}, {pipeline_mode = #tpu.pipeline_mode<synchronous>, transform_indices = @transform_12, window_bounds = array<i64: 1, 128>}, {pipeline_mode = #tpu.pipeline_mode<synchronous>, transform_indices = @transform_13, window_bounds = array<i64: 1, 128>}, {pipeline_mode = #tpu.pipeline_mode<synchronous>, transform_indices = @transform_14, window_bounds = array<i64: 1, 128>}, {pipeline_mode = #tpu.pipeline_mode<synchronous>, transform_indices = @transform_15, window_bounds = array<i64: 128, 64>}, {pipeline_mode = #tpu.pipeline_mode<synchronous>, transform_indices = @transform_16, window_bounds = array<i64: 1, 64>}, {transform_indices = @transform_17, window_bounds = array<i64: 1, 1, 64>}]} {
    %c0 = arith.constant 0 : index
    %c0_0 = arith.constant 0 : index
    %c0_1 = arith.constant 0 : index
    %0 = vector.load %arg1[%c0, %c0_0, %c0_1] : memref<1x4x104xf32, #tpu.memory_space<vmem>>, vector<1x4x104xf32>
    %1 = vector.shape_cast %0 : vector<1x4x104xf32> to vector<4x104xf32>
    %c0_2 = arith.constant 0 : index
    %c0_3 = arith.constant 0 : index
    %2 = vector.load %arg2[%c0_2, %c0_3] : memref<16x25xf32, #tpu.memory_space<vmem>>, vector<16x25xf32>
    %c0_4 = arith.constant 0 : index
    %c0_5 = arith.constant 0 : index
    %3 = vector.load %arg3[%c0_4, %c0_5] : memref<16x1xf32, #tpu.memory_space<vmem>>, vector<16x1xf32>
    %c0_6 = arith.constant 0 : index
    %c0_7 = arith.constant 0 : index
    %4 = vector.load %arg4[%c0_6, %c0_7] : memref<100x54xf32, #tpu.memory_space<vmem>>, vector<100x54xf32>
    %c0_8 = arith.constant 0 : index
    %c0_9 = arith.constant 0 : index
    %5 = vector.load %arg5[%c0_8, %c0_9] : memref<32x400xf32, #tpu.memory_space<vmem>>, vector<32x400xf32>
    %c0_10 = arith.constant 0 : index
    %c0_11 = arith.constant 0 : index
    %6 = vector.load %arg6[%c0_10, %c0_11] : memref<32x1xf32, #tpu.memory_space<vmem>>, vector<32x1xf32>
    %c0_12 = arith.constant 0 : index
    %c0_13 = arith.constant 0 : index
    %7 = vector.load %arg7[%c0_12, %c0_13] : memref<50x25xf32, #tpu.memory_space<vmem>>, vector<50x25xf32>
    %8 = vector.shape_cast %3 : vector<16x1xf32> to vector<16x1xf32>
    %9 = vector.broadcast %8 : vector<16x1xf32> to vector<16x100xf32>
    %10 = vector.extract_strided_slice %1 {offsets = [0, 0], sizes = [1, 104], strides = [1, 1]} : vector<4x104xf32> to vector<1x104xf32>
    %11 = vector.extract_strided_slice %2 {offsets = [0, 10], sizes = [16, 1], strides = [1, 1]} : vector<16x25xf32> to vector<16x1xf32>
    %12 = vector.extract_strided_slice %10 {offsets = [0, 0], sizes = [1, 100], strides = [1, 1]} : vector<1x104xf32> to vector<1x100xf32>
    %13 = vector.broadcast %11 : vector<16x1xf32> to vector<16x100xf32>
    %14 = vector.broadcast %12 : vector<1x100xf32> to vector<16x100xf32>
    %15 = arith.mulf %13, %14 : vector<16x100xf32>
    %16 = arith.addf %9, %15 : vector<16x100xf32>
    %17 = vector.extract_strided_slice %2 {offsets = [0, 11], sizes = [16, 1], strides = [1, 1]} : vector<16x25xf32> to vector<16x1xf32>
    %18 = vector.extract_strided_slice %10 {offsets = [0, 1], sizes = [1, 100], strides = [1, 1]} : vector<1x104xf32> to vector<1x100xf32>
    %19 = vector.broadcast %17 : vector<16x1xf32> to vector<16x100xf32>
    %20 = vector.broadcast %18 : vector<1x100xf32> to vector<16x100xf32>
    %21 = arith.mulf %19, %20 : vector<16x100xf32>
    %22 = arith.addf %16, %21 : vector<16x100xf32>
    %23 = vector.extract_strided_slice %2 {offsets = [0, 12], sizes = [16, 1], strides = [1, 1]} : vector<16x25xf32> to vector<16x1xf32>
    %24 = vector.extract_strided_slice %10 {offsets = [0, 2], sizes = [1, 100], strides = [1, 1]} : vector<1x104xf32> to vector<1x100xf32>
    %25 = vector.broadcast %23 : vector<16x1xf32> to vector<16x100xf32>
    %26 = vector.broadcast %24 : vector<1x100xf32> to vector<16x100xf32>
    %27 = arith.mulf %25, %26 : vector<16x100xf32>
    %28 = arith.addf %22, %27 : vector<16x100xf32>
    %29 = vector.extract_strided_slice %2 {offsets = [0, 13], sizes = [16, 1], strides = [1, 1]} : vector<16x25xf32> to vector<16x1xf32>
    %30 = vector.extract_strided_slice %10 {offsets = [0, 3], sizes = [1, 100], strides = [1, 1]} : vector<1x104xf32> to vector<1x100xf32>
    %31 = vector.broadcast %29 : vector<16x1xf32> to vector<16x100xf32>
    %32 = vector.broadcast %30 : vector<1x100xf32> to vector<16x100xf32>
    %33 = arith.mulf %31, %32 : vector<16x100xf32>
    %34 = arith.addf %28, %33 : vector<16x100xf32>
    %35 = vector.extract_strided_slice %2 {offsets = [0, 14], sizes = [16, 1], strides = [1, 1]} : vector<16x25xf32> to vector<16x1xf32>
    %36 = vector.extract_strided_slice %10 {offsets = [0, 4], sizes = [1, 100], strides = [1, 1]} : vector<1x104xf32> to vector<1x100xf32>
    %37 = vector.broadcast %35 : vector<16x1xf32> to vector<16x100xf32>
    %38 = vector.broadcast %36 : vector<1x100xf32> to vector<16x100xf32>
    %39 = arith.mulf %37, %38 : vector<16x100xf32>
    %40 = arith.addf %34, %39 : vector<16x100xf32>
    %41 = vector.extract_strided_slice %1 {offsets = [1, 0], sizes = [1, 104], strides = [1, 1]} : vector<4x104xf32> to vector<1x104xf32>
    %42 = vector.extract_strided_slice %2 {offsets = [0, 15], sizes = [16, 1], strides = [1, 1]} : vector<16x25xf32> to vector<16x1xf32>
    %43 = vector.extract_strided_slice %41 {offsets = [0, 0], sizes = [1, 100], strides = [1, 1]} : vector<1x104xf32> to vector<1x100xf32>
    %44 = vector.broadcast %42 : vector<16x1xf32> to vector<16x100xf32>
    %45 = vector.broadcast %43 : vector<1x100xf32> to vector<16x100xf32>
    %46 = arith.mulf %44, %45 : vector<16x100xf32>
    %47 = arith.addf %40, %46 : vector<16x100xf32>
    %48 = vector.extract_strided_slice %2 {offsets = [0, 16], sizes = [16, 1], strides = [1, 1]} : vector<16x25xf32> to vector<16x1xf32>
    %49 = vector.extract_strided_slice %41 {offsets = [0, 1], sizes = [1, 100], strides = [1, 1]} : vector<1x104xf32> to vector<1x100xf32>
    %50 = vector.broadcast %48 : vector<16x1xf32> to vector<16x100xf32>
    %51 = vector.broadcast %49 : vector<1x100xf32> to vector<16x100xf32>
    %52 = arith.mulf %50, %51 : vector<16x100xf32>
    %53 = arith.addf %47, %52 : vector<16x100xf32>
    %54 = vector.extract_strided_slice %2 {offsets = [0, 17], sizes = [16, 1], strides = [1, 1]} : vector<16x25xf32> to vector<16x1xf32>
    %55 = vector.extract_strided_slice %41 {offsets = [0, 2], sizes = [1, 100], strides = [1, 1]} : vector<1x104xf32> to vector<1x100xf32>
    %56 = vector.broadcast %54 : vector<16x1xf32> to vector<16x100xf32>
    %57 = vector.broadcast %55 : vector<1x100xf32> to vector<16x100xf32>
    %58 = arith.mulf %56, %57 : vector<16x100xf32>
    %59 = arith.addf %53, %58 : vector<16x100xf32>
    %60 = vector.extract_strided_slice %2 {offsets = [0, 18], sizes = [16, 1], strides = [1, 1]} : vector<16x25xf32> to vector<16x1xf32>
    %61 = vector.extract_strided_slice %41 {offsets = [0, 3], sizes = [1, 100], strides = [1, 1]} : vector<1x104xf32> to vector<1x100xf32>
    %62 = vector.broadcast %60 : vector<16x1xf32> to vector<16x100xf32>
    %63 = vector.broadcast %61 : vector<1x100xf32> to vector<16x100xf32>
    %64 = arith.mulf %62, %63 : vector<16x100xf32>
    %65 = arith.addf %59, %64 : vector<16x100xf32>
    %66 = vector.extract_strided_slice %2 {offsets = [0, 19], sizes = [16, 1], strides = [1, 1]} : vector<16x25xf32> to vector<16x1xf32>
    %67 = vector.extract_strided_slice %41 {offsets = [0, 4], sizes = [1, 100], strides = [1, 1]} : vector<1x104xf32> to vector<1x100xf32>
    %68 = vector.broadcast %66 : vector<16x1xf32> to vector<16x100xf32>
    %69 = vector.broadcast %67 : vector<1x100xf32> to vector<16x100xf32>
    %70 = arith.mulf %68, %69 : vector<16x100xf32>
    %71 = arith.addf %65, %70 : vector<16x100xf32>
    %72 = vector.extract_strided_slice %1 {offsets = [2, 0], sizes = [1, 104], strides = [1, 1]} : vector<4x104xf32> to vector<1x104xf32>
    %73 = vector.extract_strided_slice %2 {offsets = [0, 20], sizes = [16, 1], strides = [1, 1]} : vector<16x25xf32> to vector<16x1xf32>
    %74 = vector.extract_strided_slice %72 {offsets = [0, 0], sizes = [1, 100], strides = [1, 1]} : vector<1x104xf32> to vector<1x100xf32>
    %75 = vector.broadcast %73 : vector<16x1xf32> to vector<16x100xf32>
    %76 = vector.broadcast %74 : vector<1x100xf32> to vector<16x100xf32>
    %77 = arith.mulf %75, %76 : vector<16x100xf32>
    %78 = arith.addf %71, %77 : vector<16x100xf32>
    %79 = vector.extract_strided_slice %2 {offsets = [0, 21], sizes = [16, 1], strides = [1, 1]} : vector<16x25xf32> to vector<16x1xf32>
    %80 = vector.extract_strided_slice %72 {offsets = [0, 1], sizes = [1, 100], strides = [1, 1]} : vector<1x104xf32> to vector<1x100xf32>
    %81 = vector.broadcast %79 : vector<16x1xf32> to vector<16x100xf32>
    %82 = vector.broadcast %80 : vector<1x100xf32> to vector<16x100xf32>
    %83 = arith.mulf %81, %82 : vector<16x100xf32>
    %84 = arith.addf %78, %83 : vector<16x100xf32>
    %85 = vector.extract_strided_slice %2 {offsets = [0, 22], sizes = [16, 1], strides = [1, 1]} : vector<16x25xf32> to vector<16x1xf32>
    %86 = vector.extract_strided_slice %72 {offsets = [0, 2], sizes = [1, 100], strides = [1, 1]} : vector<1x104xf32> to vector<1x100xf32>
    %87 = vector.broadcast %85 : vector<16x1xf32> to vector<16x100xf32>
    %88 = vector.broadcast %86 : vector<1x100xf32> to vector<16x100xf32>
    %89 = arith.mulf %87, %88 : vector<16x100xf32>
    %90 = arith.addf %84, %89 : vector<16x100xf32>
    %91 = vector.extract_strided_slice %2 {offsets = [0, 23], sizes = [16, 1], strides = [1, 1]} : vector<16x25xf32> to vector<16x1xf32>
    %92 = vector.extract_strided_slice %72 {offsets = [0, 3], sizes = [1, 100], strides = [1, 1]} : vector<1x104xf32> to vector<1x100xf32>
    %93 = vector.broadcast %91 : vector<16x1xf32> to vector<16x100xf32>
    %94 = vector.broadcast %92 : vector<1x100xf32> to vector<16x100xf32>
    %95 = arith.mulf %93, %94 : vector<16x100xf32>
    %96 = arith.addf %90, %95 : vector<16x100xf32>
    %97 = vector.extract_strided_slice %2 {offsets = [0, 24], sizes = [16, 1], strides = [1, 1]} : vector<16x25xf32> to vector<16x1xf32>
    %98 = vector.extract_strided_slice %72 {offsets = [0, 4], sizes = [1, 100], strides = [1, 1]} : vector<1x104xf32> to vector<1x100xf32>
    %99 = vector.broadcast %97 : vector<16x1xf32> to vector<16x100xf32>
    %100 = vector.broadcast %98 : vector<1x100xf32> to vector<16x100xf32>
    %101 = arith.mulf %99, %100 : vector<16x100xf32>
    %102 = arith.addf %96, %101 : vector<16x100xf32>
    %cst = arith.constant 0.000000e+00 : f32
    %103 = vector.broadcast %cst : f32 to vector<16x100xf32>
    %104 = arith.maximumf %102, %103 : vector<16x100xf32>
    %cst_14 = arith.constant dense<0.000000e+00> : vector<16x54xf32>
    %105 = tpu.matmul %104, %4, %cst_14 {dimension_numbers = #tpu.dot_dimension_numbers<[1], [0], [0], [1], [0, 0, 1, 1], [], []>} : vector<16x100xf32>, vector<100x54xf32>, vector<16x54xf32> -> vector<16x54xf32>
    %106 = vector.shape_cast %3 : vector<16x1xf32> to vector<16x1xf32>
    %107 = vector.broadcast %106 : vector<16x1xf32> to vector<16x100xf32>
    %108 = vector.extract_strided_slice %1 {offsets = [0, 0], sizes = [1, 104], strides = [1, 1]} : vector<4x104xf32> to vector<1x104xf32>
    %109 = vector.extract_strided_slice %2 {offsets = [0, 5], sizes = [16, 1], strides = [1, 1]} : vector<16x25xf32> to vector<16x1xf32>
    %110 = vector.extract_strided_slice %108 {offsets = [0, 0], sizes = [1, 100], strides = [1, 1]} : vector<1x104xf32> to vector<1x100xf32>
    %111 = vector.broadcast %109 : vector<16x1xf32> to vector<16x100xf32>
    %112 = vector.broadcast %110 : vector<1x100xf32> to vector<16x100xf32>
    %113 = arith.mulf %111, %112 : vector<16x100xf32>
    %114 = arith.addf %107, %113 : vector<16x100xf32>
    %115 = vector.extract_strided_slice %2 {offsets = [0, 6], sizes = [16, 1], strides = [1, 1]} : vector<16x25xf32> to vector<16x1xf32>
    %116 = vector.extract_strided_slice %108 {offsets = [0, 1], sizes = [1, 100], strides = [1, 1]} : vector<1x104xf32> to vector<1x100xf32>
    %117 = vector.broadcast %115 : vector<16x1xf32> to vector<16x100xf32>
    %118 = vector.broadcast %116 : vector<1x100xf32> to vector<16x100xf32>
    %119 = arith.mulf %117, %118 : vector<16x100xf32>
    %120 = arith.addf %114, %119 : vector<16x100xf32>
    %121 = vector.extract_strided_slice %2 {offsets = [0, 7], sizes = [16, 1], strides = [1, 1]} : vector<16x25xf32> to vector<16x1xf32>
    %122 = vector.extract_strided_slice %108 {offsets = [0, 2], sizes = [1, 100], strides = [1, 1]} : vector<1x104xf32> to vector<1x100xf32>
    %123 = vector.broadcast %121 : vector<16x1xf32> to vector<16x100xf32>
    %124 = vector.broadcast %122 : vector<1x100xf32> to vector<16x100xf32>
    %125 = arith.mulf %123, %124 : vector<16x100xf32>
    %126 = arith.addf %120, %125 : vector<16x100xf32>
    %127 = vector.extract_strided_slice %2 {offsets = [0, 8], sizes = [16, 1], strides = [1, 1]} : vector<16x25xf32> to vector<16x1xf32>
    %128 = vector.extract_strided_slice %108 {offsets = [0, 3], sizes = [1, 100], strides = [1, 1]} : vector<1x104xf32> to vector<1x100xf32>
    %129 = vector.broadcast %127 : vector<16x1xf32> to vector<16x100xf32>
    %130 = vector.broadcast %128 : vector<1x100xf32> to vector<16x100xf32>
    %131 = arith.mulf %129, %130 : vector<16x100xf32>
    %132 = arith.addf %126, %131 : vector<16x100xf32>
    %133 = vector.extract_strided_slice %2 {offsets = [0, 9], sizes = [16, 1], strides = [1, 1]} : vector<16x25xf32> to vector<16x1xf32>
    %134 = vector.extract_strided_slice %108 {offsets = [0, 4], sizes = [1, 100], strides = [1, 1]} : vector<1x104xf32> to vector<1x100xf32>
    %135 = vector.broadcast %133 : vector<16x1xf32> to vector<16x100xf32>
    %136 = vector.broadcast %134 : vector<1x100xf32> to vector<16x100xf32>
    %137 = arith.mulf %135, %136 : vector<16x100xf32>
    %138 = arith.addf %132, %137 : vector<16x100xf32>
    %139 = vector.extract_strided_slice %1 {offsets = [1, 0], sizes = [1, 104], strides = [1, 1]} : vector<4x104xf32> to vector<1x104xf32>
    %140 = vector.extract_strided_slice %2 {offsets = [0, 10], sizes = [16, 1], strides = [1, 1]} : vector<16x25xf32> to vector<16x1xf32>
    %141 = vector.extract_strided_slice %139 {offsets = [0, 0], sizes = [1, 100], strides = [1, 1]} : vector<1x104xf32> to vector<1x100xf32>
    %142 = vector.broadcast %140 : vector<16x1xf32> to vector<16x100xf32>
    %143 = vector.broadcast %141 : vector<1x100xf32> to vector<16x100xf32>
    %144 = arith.mulf %142, %143 : vector<16x100xf32>
    %145 = arith.addf %138, %144 : vector<16x100xf32>
    %146 = vector.extract_strided_slice %2 {offsets = [0, 11], sizes = [16, 1], strides = [1, 1]} : vector<16x25xf32> to vector<16x1xf32>
    %147 = vector.extract_strided_slice %139 {offsets = [0, 1], sizes = [1, 100], strides = [1, 1]} : vector<1x104xf32> to vector<1x100xf32>
    %148 = vector.broadcast %146 : vector<16x1xf32> to vector<16x100xf32>
    %149 = vector.broadcast %147 : vector<1x100xf32> to vector<16x100xf32>
    %150 = arith.mulf %148, %149 : vector<16x100xf32>
    %151 = arith.addf %145, %150 : vector<16x100xf32>
    %152 = vector.extract_strided_slice %2 {offsets = [0, 12], sizes = [16, 1], strides = [1, 1]} : vector<16x25xf32> to vector<16x1xf32>
    %153 = vector.extract_strided_slice %139 {offsets = [0, 2], sizes = [1, 100], strides = [1, 1]} : vector<1x104xf32> to vector<1x100xf32>
    %154 = vector.broadcast %152 : vector<16x1xf32> to vector<16x100xf32>
    %155 = vector.broadcast %153 : vector<1x100xf32> to vector<16x100xf32>
    %156 = arith.mulf %154, %155 : vector<16x100xf32>
    %157 = arith.addf %151, %156 : vector<16x100xf32>
    %158 = vector.extract_strided_slice %2 {offsets = [0, 13], sizes = [16, 1], strides = [1, 1]} : vector<16x25xf32> to vector<16x1xf32>
    %159 = vector.extract_strided_slice %139 {offsets = [0, 3], sizes = [1, 100], strides = [1, 1]} : vector<1x104xf32> to vector<1x100xf32>
    %160 = vector.broadcast %158 : vector<16x1xf32> to vector<16x100xf32>
    %161 = vector.broadcast %159 : vector<1x100xf32> to vector<16x100xf32>
    %162 = arith.mulf %160, %161 : vector<16x100xf32>
    %163 = arith.addf %157, %162 : vector<16x100xf32>
    %164 = vector.extract_strided_slice %2 {offsets = [0, 14], sizes = [16, 1], strides = [1, 1]} : vector<16x25xf32> to vector<16x1xf32>
    %165 = vector.extract_strided_slice %139 {offsets = [0, 4], sizes = [1, 100], strides = [1, 1]} : vector<1x104xf32> to vector<1x100xf32>
    %166 = vector.broadcast %164 : vector<16x1xf32> to vector<16x100xf32>
    %167 = vector.broadcast %165 : vector<1x100xf32> to vector<16x100xf32>
    %168 = arith.mulf %166, %167 : vector<16x100xf32>
    %169 = arith.addf %163, %168 : vector<16x100xf32>
    %170 = vector.extract_strided_slice %1 {offsets = [2, 0], sizes = [1, 104], strides = [1, 1]} : vector<4x104xf32> to vector<1x104xf32>
    %171 = vector.extract_strided_slice %2 {offsets = [0, 15], sizes = [16, 1], strides = [1, 1]} : vector<16x25xf32> to vector<16x1xf32>
    %172 = vector.extract_strided_slice %170 {offsets = [0, 0], sizes = [1, 100], strides = [1, 1]} : vector<1x104xf32> to vector<1x100xf32>
    %173 = vector.broadcast %171 : vector<16x1xf32> to vector<16x100xf32>
    %174 = vector.broadcast %172 : vector<1x100xf32> to vector<16x100xf32>
    %175 = arith.mulf %173, %174 : vector<16x100xf32>
    %176 = arith.addf %169, %175 : vector<16x100xf32>
    %177 = vector.extract_strided_slice %2 {offsets = [0, 16], sizes = [16, 1], strides = [1, 1]} : vector<16x25xf32> to vector<16x1xf32>
    %178 = vector.extract_strided_slice %170 {offsets = [0, 1], sizes = [1, 100], strides = [1, 1]} : vector<1x104xf32> to vector<1x100xf32>
    %179 = vector.broadcast %177 : vector<16x1xf32> to vector<16x100xf32>
    %180 = vector.broadcast %178 : vector<1x100xf32> to vector<16x100xf32>
    %181 = arith.mulf %179, %180 : vector<16x100xf32>
    %182 = arith.addf %176, %181 : vector<16x100xf32>
    %183 = vector.extract_strided_slice %2 {offsets = [0, 17], sizes = [16, 1], strides = [1, 1]} : vector<16x25xf32> to vector<16x1xf32>
    %184 = vector.extract_strided_slice %170 {offsets = [0, 2], sizes = [1, 100], strides = [1, 1]} : vector<1x104xf32> to vector<1x100xf32>
    %185 = vector.broadcast %183 : vector<16x1xf32> to vector<16x100xf32>
    %186 = vector.broadcast %184 : vector<1x100xf32> to vector<16x100xf32>
    %187 = arith.mulf %185, %186 : vector<16x100xf32>
    %188 = arith.addf %182, %187 : vector<16x100xf32>
    %189 = vector.extract_strided_slice %2 {offsets = [0, 18], sizes = [16, 1], strides = [1, 1]} : vector<16x25xf32> to vector<16x1xf32>
    %190 = vector.extract_strided_slice %170 {offsets = [0, 3], sizes = [1, 100], strides = [1, 1]} : vector<1x104xf32> to vector<1x100xf32>
    %191 = vector.broadcast %189 : vector<16x1xf32> to vector<16x100xf32>
    %192 = vector.broadcast %190 : vector<1x100xf32> to vector<16x100xf32>
    %193 = arith.mulf %191, %192 : vector<16x100xf32>
    %194 = arith.addf %188, %193 : vector<16x100xf32>
    %195 = vector.extract_strided_slice %2 {offsets = [0, 19], sizes = [16, 1], strides = [1, 1]} : vector<16x25xf32> to vector<16x1xf32>
    %196 = vector.extract_strided_slice %170 {offsets = [0, 4], sizes = [1, 100], strides = [1, 1]} : vector<1x104xf32> to vector<1x100xf32>
    %197 = vector.broadcast %195 : vector<16x1xf32> to vector<16x100xf32>
    %198 = vector.broadcast %196 : vector<1x100xf32> to vector<16x100xf32>
    %199 = arith.mulf %197, %198 : vector<16x100xf32>
    %200 = arith.addf %194, %199 : vector<16x100xf32>
    %201 = vector.extract_strided_slice %1 {offsets = [3, 0], sizes = [1, 104], strides = [1, 1]} : vector<4x104xf32> to vector<1x104xf32>
    %202 = vector.extract_strided_slice %2 {offsets = [0, 20], sizes = [16, 1], strides = [1, 1]} : vector<16x25xf32> to vector<16x1xf32>
    %203 = vector.extract_strided_slice %201 {offsets = [0, 0], sizes = [1, 100], strides = [1, 1]} : vector<1x104xf32> to vector<1x100xf32>
    %204 = vector.broadcast %202 : vector<16x1xf32> to vector<16x100xf32>
    %205 = vector.broadcast %203 : vector<1x100xf32> to vector<16x100xf32>
    %206 = arith.mulf %204, %205 : vector<16x100xf32>
    %207 = arith.addf %200, %206 : vector<16x100xf32>
    %208 = vector.extract_strided_slice %2 {offsets = [0, 21], sizes = [16, 1], strides = [1, 1]} : vector<16x25xf32> to vector<16x1xf32>
    %209 = vector.extract_strided_slice %201 {offsets = [0, 1], sizes = [1, 100], strides = [1, 1]} : vector<1x104xf32> to vector<1x100xf32>
    %210 = vector.broadcast %208 : vector<16x1xf32> to vector<16x100xf32>
    %211 = vector.broadcast %209 : vector<1x100xf32> to vector<16x100xf32>
    %212 = arith.mulf %210, %211 : vector<16x100xf32>
    %213 = arith.addf %207, %212 : vector<16x100xf32>
    %214 = vector.extract_strided_slice %2 {offsets = [0, 22], sizes = [16, 1], strides = [1, 1]} : vector<16x25xf32> to vector<16x1xf32>
    %215 = vector.extract_strided_slice %201 {offsets = [0, 2], sizes = [1, 100], strides = [1, 1]} : vector<1x104xf32> to vector<1x100xf32>
    %216 = vector.broadcast %214 : vector<16x1xf32> to vector<16x100xf32>
    %217 = vector.broadcast %215 : vector<1x100xf32> to vector<16x100xf32>
    %218 = arith.mulf %216, %217 : vector<16x100xf32>
    %219 = arith.addf %213, %218 : vector<16x100xf32>
    %220 = vector.extract_strided_slice %2 {offsets = [0, 23], sizes = [16, 1], strides = [1, 1]} : vector<16x25xf32> to vector<16x1xf32>
    %221 = vector.extract_strided_slice %201 {offsets = [0, 3], sizes = [1, 100], strides = [1, 1]} : vector<1x104xf32> to vector<1x100xf32>
    %222 = vector.broadcast %220 : vector<16x1xf32> to vector<16x100xf32>
    %223 = vector.broadcast %221 : vector<1x100xf32> to vector<16x100xf32>
    %224 = arith.mulf %222, %223 : vector<16x100xf32>
    %225 = arith.addf %219, %224 : vector<16x100xf32>
    %226 = vector.extract_strided_slice %2 {offsets = [0, 24], sizes = [16, 1], strides = [1, 1]} : vector<16x25xf32> to vector<16x1xf32>
    %227 = vector.extract_strided_slice %201 {offsets = [0, 4], sizes = [1, 100], strides = [1, 1]} : vector<1x104xf32> to vector<1x100xf32>
    %228 = vector.broadcast %226 : vector<16x1xf32> to vector<16x100xf32>
    %229 = vector.broadcast %227 : vector<1x100xf32> to vector<16x100xf32>
    %230 = arith.mulf %228, %229 : vector<16x100xf32>
    %231 = arith.addf %225, %230 : vector<16x100xf32>
    %cst_15 = arith.constant 0.000000e+00 : f32
    %232 = vector.broadcast %cst_15 : f32 to vector<16x100xf32>
    %233 = arith.maximumf %231, %232 : vector<16x100xf32>
    %cst_16 = arith.constant dense<0.000000e+00> : vector<16x54xf32>
    %234 = tpu.matmul %233, %4, %cst_16 {dimension_numbers = #tpu.dot_dimension_numbers<[1], [0], [0], [1], [0, 0, 1, 1], [], []>} : vector<16x100xf32>, vector<100x54xf32>, vector<16x54xf32> -> vector<16x54xf32>
    %235 = vector.shape_cast %3 : vector<16x1xf32> to vector<16x1xf32>
    %236 = vector.broadcast %235 : vector<16x1xf32> to vector<16x100xf32>
    %237 = vector.extract_strided_slice %1 {offsets = [0, 0], sizes = [1, 104], strides = [1, 1]} : vector<4x104xf32> to vector<1x104xf32>
    %238 = vector.extract_strided_slice %2 {offsets = [0, 0], sizes = [16, 1], strides = [1, 1]} : vector<16x25xf32> to vector<16x1xf32>
    %239 = vector.extract_strided_slice %237 {offsets = [0, 0], sizes = [1, 100], strides = [1, 1]} : vector<1x104xf32> to vector<1x100xf32>
    %240 = vector.broadcast %238 : vector<16x1xf32> to vector<16x100xf32>
    %241 = vector.broadcast %239 : vector<1x100xf32> to vector<16x100xf32>
    %242 = arith.mulf %240, %241 : vector<16x100xf32>
    %243 = arith.addf %236, %242 : vector<16x100xf32>
    %244 = vector.extract_strided_slice %2 {offsets = [0, 1], sizes = [16, 1], strides = [1, 1]} : vector<16x25xf32> to vector<16x1xf32>
    %245 = vector.extract_strided_slice %237 {offsets = [0, 1], sizes = [1, 100], strides = [1, 1]} : vector<1x104xf32> to vector<1x100xf32>
    %246 = vector.broadcast %244 : vector<16x1xf32> to vector<16x100xf32>
    %247 = vector.broadcast %245 : vector<1x100xf32> to vector<16x100xf32>
    %248 = arith.mulf %246, %247 : vector<16x100xf32>
    %249 = arith.addf %243, %248 : vector<16x100xf32>
    %250 = vector.extract_strided_slice %2 {offsets = [0, 2], sizes = [16, 1], strides = [1, 1]} : vector<16x25xf32> to vector<16x1xf32>
    %251 = vector.extract_strided_slice %237 {offsets = [0, 2], sizes = [1, 100], strides = [1, 1]} : vector<1x104xf32> to vector<1x100xf32>
    %252 = vector.broadcast %250 : vector<16x1xf32> to vector<16x100xf32>
    %253 = vector.broadcast %251 : vector<1x100xf32> to vector<16x100xf32>
    %254 = arith.mulf %252, %253 : vector<16x100xf32>
    %255 = arith.addf %249, %254 : vector<16x100xf32>
    %256 = vector.extract_strided_slice %2 {offsets = [0, 3], sizes = [16, 1], strides = [1, 1]} : vector<16x25xf32> to vector<16x1xf32>
    %257 = vector.extract_strided_slice %237 {offsets = [0, 3], sizes = [1, 100], strides = [1, 1]} : vector<1x104xf32> to vector<1x100xf32>
    %258 = vector.broadcast %256 : vector<16x1xf32> to vector<16x100xf32>
    %259 = vector.broadcast %257 : vector<1x100xf32> to vector<16x100xf32>
    %260 = arith.mulf %258, %259 : vector<16x100xf32>
    %261 = arith.addf %255, %260 : vector<16x100xf32>
    %262 = vector.extract_strided_slice %2 {offsets = [0, 4], sizes = [16, 1], strides = [1, 1]} : vector<16x25xf32> to vector<16x1xf32>
    %263 = vector.extract_strided_slice %237 {offsets = [0, 4], sizes = [1, 100], strides = [1, 1]} : vector<1x104xf32> to vector<1x100xf32>
    %264 = vector.broadcast %262 : vector<16x1xf32> to vector<16x100xf32>
    %265 = vector.broadcast %263 : vector<1x100xf32> to vector<16x100xf32>
    %266 = arith.mulf %264, %265 : vector<16x100xf32>
    %267 = arith.addf %261, %266 : vector<16x100xf32>
    %268 = vector.extract_strided_slice %1 {offsets = [1, 0], sizes = [1, 104], strides = [1, 1]} : vector<4x104xf32> to vector<1x104xf32>
    %269 = vector.extract_strided_slice %2 {offsets = [0, 5], sizes = [16, 1], strides = [1, 1]} : vector<16x25xf32> to vector<16x1xf32>
    %270 = vector.extract_strided_slice %268 {offsets = [0, 0], sizes = [1, 100], strides = [1, 1]} : vector<1x104xf32> to vector<1x100xf32>
    %271 = vector.broadcast %269 : vector<16x1xf32> to vector<16x100xf32>
    %272 = vector.broadcast %270 : vector<1x100xf32> to vector<16x100xf32>
    %273 = arith.mulf %271, %272 : vector<16x100xf32>
    %274 = arith.addf %267, %273 : vector<16x100xf32>
    %275 = vector.extract_strided_slice %2 {offsets = [0, 6], sizes = [16, 1], strides = [1, 1]} : vector<16x25xf32> to vector<16x1xf32>
    %276 = vector.extract_strided_slice %268 {offsets = [0, 1], sizes = [1, 100], strides = [1, 1]} : vector<1x104xf32> to vector<1x100xf32>
    %277 = vector.broadcast %275 : vector<16x1xf32> to vector<16x100xf32>
    %278 = vector.broadcast %276 : vector<1x100xf32> to vector<16x100xf32>
    %279 = arith.mulf %277, %278 : vector<16x100xf32>
    %280 = arith.addf %274, %279 : vector<16x100xf32>
    %281 = vector.extract_strided_slice %2 {offsets = [0, 7], sizes = [16, 1], strides = [1, 1]} : vector<16x25xf32> to vector<16x1xf32>
    %282 = vector.extract_strided_slice %268 {offsets = [0, 2], sizes = [1, 100], strides = [1, 1]} : vector<1x104xf32> to vector<1x100xf32>
    %283 = vector.broadcast %281 : vector<16x1xf32> to vector<16x100xf32>
    %284 = vector.broadcast %282 : vector<1x100xf32> to vector<16x100xf32>
    %285 = arith.mulf %283, %284 : vector<16x100xf32>
    %286 = arith.addf %280, %285 : vector<16x100xf32>
    %287 = vector.extract_strided_slice %2 {offsets = [0, 8], sizes = [16, 1], strides = [1, 1]} : vector<16x25xf32> to vector<16x1xf32>
    %288 = vector.extract_strided_slice %268 {offsets = [0, 3], sizes = [1, 100], strides = [1, 1]} : vector<1x104xf32> to vector<1x100xf32>
    %289 = vector.broadcast %287 : vector<16x1xf32> to vector<16x100xf32>
    %290 = vector.broadcast %288 : vector<1x100xf32> to vector<16x100xf32>
    %291 = arith.mulf %289, %290 : vector<16x100xf32>
    %292 = arith.addf %286, %291 : vector<16x100xf32>
    %293 = vector.extract_strided_slice %2 {offsets = [0, 9], sizes = [16, 1], strides = [1, 1]} : vector<16x25xf32> to vector<16x1xf32>
    %294 = vector.extract_strided_slice %268 {offsets = [0, 4], sizes = [1, 100], strides = [1, 1]} : vector<1x104xf32> to vector<1x100xf32>
    %295 = vector.broadcast %293 : vector<16x1xf32> to vector<16x100xf32>
    %296 = vector.broadcast %294 : vector<1x100xf32> to vector<16x100xf32>
    %297 = arith.mulf %295, %296 : vector<16x100xf32>
    %298 = arith.addf %292, %297 : vector<16x100xf32>
    %299 = vector.extract_strided_slice %1 {offsets = [2, 0], sizes = [1, 104], strides = [1, 1]} : vector<4x104xf32> to vector<1x104xf32>
    %300 = vector.extract_strided_slice %2 {offsets = [0, 10], sizes = [16, 1], strides = [1, 1]} : vector<16x25xf32> to vector<16x1xf32>
    %301 = vector.extract_strided_slice %299 {offsets = [0, 0], sizes = [1, 100], strides = [1, 1]} : vector<1x104xf32> to vector<1x100xf32>
    %302 = vector.broadcast %300 : vector<16x1xf32> to vector<16x100xf32>
    %303 = vector.broadcast %301 : vector<1x100xf32> to vector<16x100xf32>
    %304 = arith.mulf %302, %303 : vector<16x100xf32>
    %305 = arith.addf %298, %304 : vector<16x100xf32>
    %306 = vector.extract_strided_slice %2 {offsets = [0, 11], sizes = [16, 1], strides = [1, 1]} : vector<16x25xf32> to vector<16x1xf32>
    %307 = vector.extract_strided_slice %299 {offsets = [0, 1], sizes = [1, 100], strides = [1, 1]} : vector<1x104xf32> to vector<1x100xf32>
    %308 = vector.broadcast %306 : vector<16x1xf32> to vector<16x100xf32>
    %309 = vector.broadcast %307 : vector<1x100xf32> to vector<16x100xf32>
    %310 = arith.mulf %308, %309 : vector<16x100xf32>
    %311 = arith.addf %305, %310 : vector<16x100xf32>
    %312 = vector.extract_strided_slice %2 {offsets = [0, 12], sizes = [16, 1], strides = [1, 1]} : vector<16x25xf32> to vector<16x1xf32>
    %313 = vector.extract_strided_slice %299 {offsets = [0, 2], sizes = [1, 100], strides = [1, 1]} : vector<1x104xf32> to vector<1x100xf32>
    %314 = vector.broadcast %312 : vector<16x1xf32> to vector<16x100xf32>
    %315 = vector.broadcast %313 : vector<1x100xf32> to vector<16x100xf32>
    %316 = arith.mulf %314, %315 : vector<16x100xf32>
    %317 = arith.addf %311, %316 : vector<16x100xf32>
    %318 = vector.extract_strided_slice %2 {offsets = [0, 13], sizes = [16, 1], strides = [1, 1]} : vector<16x25xf32> to vector<16x1xf32>
    %319 = vector.extract_strided_slice %299 {offsets = [0, 3], sizes = [1, 100], strides = [1, 1]} : vector<1x104xf32> to vector<1x100xf32>
    %320 = vector.broadcast %318 : vector<16x1xf32> to vector<16x100xf32>
    %321 = vector.broadcast %319 : vector<1x100xf32> to vector<16x100xf32>
    %322 = arith.mulf %320, %321 : vector<16x100xf32>
    %323 = arith.addf %317, %322 : vector<16x100xf32>
    %324 = vector.extract_strided_slice %2 {offsets = [0, 14], sizes = [16, 1], strides = [1, 1]} : vector<16x25xf32> to vector<16x1xf32>
    %325 = vector.extract_strided_slice %299 {offsets = [0, 4], sizes = [1, 100], strides = [1, 1]} : vector<1x104xf32> to vector<1x100xf32>
    %326 = vector.broadcast %324 : vector<16x1xf32> to vector<16x100xf32>
    %327 = vector.broadcast %325 : vector<1x100xf32> to vector<16x100xf32>
    %328 = arith.mulf %326, %327 : vector<16x100xf32>
    %329 = arith.addf %323, %328 : vector<16x100xf32>
    %330 = vector.extract_strided_slice %1 {offsets = [3, 0], sizes = [1, 104], strides = [1, 1]} : vector<4x104xf32> to vector<1x104xf32>
    %331 = vector.extract_strided_slice %2 {offsets = [0, 15], sizes = [16, 1], strides = [1, 1]} : vector<16x25xf32> to vector<16x1xf32>
    %332 = vector.extract_strided_slice %330 {offsets = [0, 0], sizes = [1, 100], strides = [1, 1]} : vector<1x104xf32> to vector<1x100xf32>
    %333 = vector.broadcast %331 : vector<16x1xf32> to vector<16x100xf32>
    %334 = vector.broadcast %332 : vector<1x100xf32> to vector<16x100xf32>
    %335 = arith.mulf %333, %334 : vector<16x100xf32>
    %336 = arith.addf %329, %335 : vector<16x100xf32>
    %337 = vector.extract_strided_slice %2 {offsets = [0, 16], sizes = [16, 1], strides = [1, 1]} : vector<16x25xf32> to vector<16x1xf32>
    %338 = vector.extract_strided_slice %330 {offsets = [0, 1], sizes = [1, 100], strides = [1, 1]} : vector<1x104xf32> to vector<1x100xf32>
    %339 = vector.broadcast %337 : vector<16x1xf32> to vector<16x100xf32>
    %340 = vector.broadcast %338 : vector<1x100xf32> to vector<16x100xf32>
    %341 = arith.mulf %339, %340 : vector<16x100xf32>
    %342 = arith.addf %336, %341 : vector<16x100xf32>
    %343 = vector.extract_strided_slice %2 {offsets = [0, 17], sizes = [16, 1], strides = [1, 1]} : vector<16x25xf32> to vector<16x1xf32>
    %344 = vector.extract_strided_slice %330 {offsets = [0, 2], sizes = [1, 100], strides = [1, 1]} : vector<1x104xf32> to vector<1x100xf32>
    %345 = vector.broadcast %343 : vector<16x1xf32> to vector<16x100xf32>
    %346 = vector.broadcast %344 : vector<1x100xf32> to vector<16x100xf32>
    %347 = arith.mulf %345, %346 : vector<16x100xf32>
    %348 = arith.addf %342, %347 : vector<16x100xf32>
    %349 = vector.extract_strided_slice %2 {offsets = [0, 18], sizes = [16, 1], strides = [1, 1]} : vector<16x25xf32> to vector<16x1xf32>
    %350 = vector.extract_strided_slice %330 {offsets = [0, 3], sizes = [1, 100], strides = [1, 1]} : vector<1x104xf32> to vector<1x100xf32>
    %351 = vector.broadcast %349 : vector<16x1xf32> to vector<16x100xf32>
    %352 = vector.broadcast %350 : vector<1x100xf32> to vector<16x100xf32>
    %353 = arith.mulf %351, %352 : vector<16x100xf32>
    %354 = arith.addf %348, %353 : vector<16x100xf32>
    %355 = vector.extract_strided_slice %2 {offsets = [0, 19], sizes = [16, 1], strides = [1, 1]} : vector<16x25xf32> to vector<16x1xf32>
    %356 = vector.extract_strided_slice %330 {offsets = [0, 4], sizes = [1, 100], strides = [1, 1]} : vector<1x104xf32> to vector<1x100xf32>
    %357 = vector.broadcast %355 : vector<16x1xf32> to vector<16x100xf32>
    %358 = vector.broadcast %356 : vector<1x100xf32> to vector<16x100xf32>
    %359 = arith.mulf %357, %358 : vector<16x100xf32>
    %360 = arith.addf %354, %359 : vector<16x100xf32>
    %cst_17 = arith.constant 0.000000e+00 : f32
    %361 = vector.broadcast %cst_17 : f32 to vector<16x100xf32>
    %362 = arith.maximumf %360, %361 : vector<16x100xf32>
    %cst_18 = arith.constant dense<0.000000e+00> : vector<16x54xf32>
    %363 = tpu.matmul %362, %4, %cst_18 {dimension_numbers = #tpu.dot_dimension_numbers<[1], [0], [0], [1], [0, 0, 1, 1], [], []>} : vector<16x100xf32>, vector<100x54xf32>, vector<16x54xf32> -> vector<16x54xf32>
    %364 = vector.shape_cast %3 : vector<16x1xf32> to vector<16x1xf32>
    %365 = vector.broadcast %364 : vector<16x1xf32> to vector<16x100xf32>
    %366 = vector.extract_strided_slice %1 {offsets = [1, 0], sizes = [1, 104], strides = [1, 1]} : vector<4x104xf32> to vector<1x104xf32>
    %367 = vector.extract_strided_slice %2 {offsets = [0, 0], sizes = [16, 1], strides = [1, 1]} : vector<16x25xf32> to vector<16x1xf32>
    %368 = vector.extract_strided_slice %366 {offsets = [0, 0], sizes = [1, 100], strides = [1, 1]} : vector<1x104xf32> to vector<1x100xf32>
    %369 = vector.broadcast %367 : vector<16x1xf32> to vector<16x100xf32>
    %370 = vector.broadcast %368 : vector<1x100xf32> to vector<16x100xf32>
    %371 = arith.mulf %369, %370 : vector<16x100xf32>
    %372 = arith.addf %365, %371 : vector<16x100xf32>
    %373 = vector.extract_strided_slice %2 {offsets = [0, 1], sizes = [16, 1], strides = [1, 1]} : vector<16x25xf32> to vector<16x1xf32>
    %374 = vector.extract_strided_slice %366 {offsets = [0, 1], sizes = [1, 100], strides = [1, 1]} : vector<1x104xf32> to vector<1x100xf32>
    %375 = vector.broadcast %373 : vector<16x1xf32> to vector<16x100xf32>
    %376 = vector.broadcast %374 : vector<1x100xf32> to vector<16x100xf32>
    %377 = arith.mulf %375, %376 : vector<16x100xf32>
    %378 = arith.addf %372, %377 : vector<16x100xf32>
    %379 = vector.extract_strided_slice %2 {offsets = [0, 2], sizes = [16, 1], strides = [1, 1]} : vector<16x25xf32> to vector<16x1xf32>
    %380 = vector.extract_strided_slice %366 {offsets = [0, 2], sizes = [1, 100], strides = [1, 1]} : vector<1x104xf32> to vector<1x100xf32>
    %381 = vector.broadcast %379 : vector<16x1xf32> to vector<16x100xf32>
    %382 = vector.broadcast %380 : vector<1x100xf32> to vector<16x100xf32>
    %383 = arith.mulf %381, %382 : vector<16x100xf32>
    %384 = arith.addf %378, %383 : vector<16x100xf32>
    %385 = vector.extract_strided_slice %2 {offsets = [0, 3], sizes = [16, 1], strides = [1, 1]} : vector<16x25xf32> to vector<16x1xf32>
    %386 = vector.extract_strided_slice %366 {offsets = [0, 3], sizes = [1, 100], strides = [1, 1]} : vector<1x104xf32> to vector<1x100xf32>
    %387 = vector.broadcast %385 : vector<16x1xf32> to vector<16x100xf32>
    %388 = vector.broadcast %386 : vector<1x100xf32> to vector<16x100xf32>
    %389 = arith.mulf %387, %388 : vector<16x100xf32>
    %390 = arith.addf %384, %389 : vector<16x100xf32>
    %391 = vector.extract_strided_slice %2 {offsets = [0, 4], sizes = [16, 1], strides = [1, 1]} : vector<16x25xf32> to vector<16x1xf32>
    %392 = vector.extract_strided_slice %366 {offsets = [0, 4], sizes = [1, 100], strides = [1, 1]} : vector<1x104xf32> to vector<1x100xf32>
    %393 = vector.broadcast %391 : vector<16x1xf32> to vector<16x100xf32>
    %394 = vector.broadcast %392 : vector<1x100xf32> to vector<16x100xf32>
    %395 = arith.mulf %393, %394 : vector<16x100xf32>
    %396 = arith.addf %390, %395 : vector<16x100xf32>
    %397 = vector.extract_strided_slice %1 {offsets = [2, 0], sizes = [1, 104], strides = [1, 1]} : vector<4x104xf32> to vector<1x104xf32>
    %398 = vector.extract_strided_slice %2 {offsets = [0, 5], sizes = [16, 1], strides = [1, 1]} : vector<16x25xf32> to vector<16x1xf32>
    %399 = vector.extract_strided_slice %397 {offsets = [0, 0], sizes = [1, 100], strides = [1, 1]} : vector<1x104xf32> to vector<1x100xf32>
    %400 = vector.broadcast %398 : vector<16x1xf32> to vector<16x100xf32>
    %401 = vector.broadcast %399 : vector<1x100xf32> to vector<16x100xf32>
    %402 = arith.mulf %400, %401 : vector<16x100xf32>
    %403 = arith.addf %396, %402 : vector<16x100xf32>
    %404 = vector.extract_strided_slice %2 {offsets = [0, 6], sizes = [16, 1], strides = [1, 1]} : vector<16x25xf32> to vector<16x1xf32>
    %405 = vector.extract_strided_slice %397 {offsets = [0, 1], sizes = [1, 100], strides = [1, 1]} : vector<1x104xf32> to vector<1x100xf32>
    %406 = vector.broadcast %404 : vector<16x1xf32> to vector<16x100xf32>
    %407 = vector.broadcast %405 : vector<1x100xf32> to vector<16x100xf32>
    %408 = arith.mulf %406, %407 : vector<16x100xf32>
    %409 = arith.addf %403, %408 : vector<16x100xf32>
    %410 = vector.extract_strided_slice %2 {offsets = [0, 7], sizes = [16, 1], strides = [1, 1]} : vector<16x25xf32> to vector<16x1xf32>
    %411 = vector.extract_strided_slice %397 {offsets = [0, 2], sizes = [1, 100], strides = [1, 1]} : vector<1x104xf32> to vector<1x100xf32>
    %412 = vector.broadcast %410 : vector<16x1xf32> to vector<16x100xf32>
    %413 = vector.broadcast %411 : vector<1x100xf32> to vector<16x100xf32>
    %414 = arith.mulf %412, %413 : vector<16x100xf32>
    %415 = arith.addf %409, %414 : vector<16x100xf32>
    %416 = vector.extract_strided_slice %2 {offsets = [0, 8], sizes = [16, 1], strides = [1, 1]} : vector<16x25xf32> to vector<16x1xf32>
    %417 = vector.extract_strided_slice %397 {offsets = [0, 3], sizes = [1, 100], strides = [1, 1]} : vector<1x104xf32> to vector<1x100xf32>
    %418 = vector.broadcast %416 : vector<16x1xf32> to vector<16x100xf32>
    %419 = vector.broadcast %417 : vector<1x100xf32> to vector<16x100xf32>
    %420 = arith.mulf %418, %419 : vector<16x100xf32>
    %421 = arith.addf %415, %420 : vector<16x100xf32>
    %422 = vector.extract_strided_slice %2 {offsets = [0, 9], sizes = [16, 1], strides = [1, 1]} : vector<16x25xf32> to vector<16x1xf32>
    %423 = vector.extract_strided_slice %397 {offsets = [0, 4], sizes = [1, 100], strides = [1, 1]} : vector<1x104xf32> to vector<1x100xf32>
    %424 = vector.broadcast %422 : vector<16x1xf32> to vector<16x100xf32>
    %425 = vector.broadcast %423 : vector<1x100xf32> to vector<16x100xf32>
    %426 = arith.mulf %424, %425 : vector<16x100xf32>
    %427 = arith.addf %421, %426 : vector<16x100xf32>
    %428 = vector.extract_strided_slice %1 {offsets = [3, 0], sizes = [1, 104], strides = [1, 1]} : vector<4x104xf32> to vector<1x104xf32>
    %429 = vector.extract_strided_slice %2 {offsets = [0, 10], sizes = [16, 1], strides = [1, 1]} : vector<16x25xf32> to vector<16x1xf32>
    %430 = vector.extract_strided_slice %428 {offsets = [0, 0], sizes = [1, 100], strides = [1, 1]} : vector<1x104xf32> to vector<1x100xf32>
    %431 = vector.broadcast %429 : vector<16x1xf32> to vector<16x100xf32>
    %432 = vector.broadcast %430 : vector<1x100xf32> to vector<16x100xf32>
    %433 = arith.mulf %431, %432 : vector<16x100xf32>
    %434 = arith.addf %427, %433 : vector<16x100xf32>
    %435 = vector.extract_strided_slice %2 {offsets = [0, 11], sizes = [16, 1], strides = [1, 1]} : vector<16x25xf32> to vector<16x1xf32>
    %436 = vector.extract_strided_slice %428 {offsets = [0, 1], sizes = [1, 100], strides = [1, 1]} : vector<1x104xf32> to vector<1x100xf32>
    %437 = vector.broadcast %435 : vector<16x1xf32> to vector<16x100xf32>
    %438 = vector.broadcast %436 : vector<1x100xf32> to vector<16x100xf32>
    %439 = arith.mulf %437, %438 : vector<16x100xf32>
    %440 = arith.addf %434, %439 : vector<16x100xf32>
    %441 = vector.extract_strided_slice %2 {offsets = [0, 12], sizes = [16, 1], strides = [1, 1]} : vector<16x25xf32> to vector<16x1xf32>
    %442 = vector.extract_strided_slice %428 {offsets = [0, 2], sizes = [1, 100], strides = [1, 1]} : vector<1x104xf32> to vector<1x100xf32>
    %443 = vector.broadcast %441 : vector<16x1xf32> to vector<16x100xf32>
    %444 = vector.broadcast %442 : vector<1x100xf32> to vector<16x100xf32>
    %445 = arith.mulf %443, %444 : vector<16x100xf32>
    %446 = arith.addf %440, %445 : vector<16x100xf32>
    %447 = vector.extract_strided_slice %2 {offsets = [0, 13], sizes = [16, 1], strides = [1, 1]} : vector<16x25xf32> to vector<16x1xf32>
    %448 = vector.extract_strided_slice %428 {offsets = [0, 3], sizes = [1, 100], strides = [1, 1]} : vector<1x104xf32> to vector<1x100xf32>
    %449 = vector.broadcast %447 : vector<16x1xf32> to vector<16x100xf32>
    %450 = vector.broadcast %448 : vector<1x100xf32> to vector<16x100xf32>
    %451 = arith.mulf %449, %450 : vector<16x100xf32>
    %452 = arith.addf %446, %451 : vector<16x100xf32>
    %453 = vector.extract_strided_slice %2 {offsets = [0, 14], sizes = [16, 1], strides = [1, 1]} : vector<16x25xf32> to vector<16x1xf32>
    %454 = vector.extract_strided_slice %428 {offsets = [0, 4], sizes = [1, 100], strides = [1, 1]} : vector<1x104xf32> to vector<1x100xf32>
    %455 = vector.broadcast %453 : vector<16x1xf32> to vector<16x100xf32>
    %456 = vector.broadcast %454 : vector<1x100xf32> to vector<16x100xf32>
    %457 = arith.mulf %455, %456 : vector<16x100xf32>
    %458 = arith.addf %452, %457 : vector<16x100xf32>
    %cst_19 = arith.constant 0.000000e+00 : f32
    %459 = vector.broadcast %cst_19 : f32 to vector<16x100xf32>
    %460 = arith.maximumf %458, %459 : vector<16x100xf32>
    %cst_20 = arith.constant dense<0.000000e+00> : vector<16x54xf32>
    %461 = tpu.matmul %460, %4, %cst_20 {dimension_numbers = #tpu.dot_dimension_numbers<[1], [0], [0], [1], [0, 0, 1, 1], [], []>} : vector<16x100xf32>, vector<100x54xf32>, vector<16x54xf32> -> vector<16x54xf32>
    %462 = arith.addf %105, %234 : vector<16x54xf32>
    %cst_21 = arith.constant 5.000000e-01 : f32
    %463 = vector.broadcast %cst_21 : f32 to vector<16x54xf32>
    %464 = arith.mulf %463, %462 : vector<16x54xf32>
    %465 = arith.addf %363, %461 : vector<16x54xf32>
    %cst_22 = arith.constant 5.000000e-01 : f32
    %466 = vector.broadcast %cst_22 : f32 to vector<16x54xf32>
    %467 = arith.mulf %466, %465 : vector<16x54xf32>
    %468 = vector.shape_cast %6 : vector<32x1xf32> to vector<32x1xf32>
    %469 = vector.broadcast %468 : vector<32x1xf32> to vector<32x50xf32>
    %470 = vector.extract_strided_slice %464 {offsets = [0, 0], sizes = [16, 50], strides = [1, 1]} : vector<16x54xf32> to vector<16x50xf32>
    %471 = vector.extract_strided_slice %464 {offsets = [0, 1], sizes = [16, 50], strides = [1, 1]} : vector<16x54xf32> to vector<16x50xf32>
    %472 = vector.extract_strided_slice %464 {offsets = [0, 2], sizes = [16, 50], strides = [1, 1]} : vector<16x54xf32> to vector<16x50xf32>
    %473 = vector.extract_strided_slice %464 {offsets = [0, 3], sizes = [16, 50], strides = [1, 1]} : vector<16x54xf32> to vector<16x50xf32>
    %474 = vector.extract_strided_slice %464 {offsets = [0, 4], sizes = [16, 50], strides = [1, 1]} : vector<16x54xf32> to vector<16x50xf32>
    %475 = tpu.concatenate %470, %471, %472, %473, %474 in 0 : vector<16x50xf32>, vector<16x50xf32>, vector<16x50xf32>, vector<16x50xf32>, vector<16x50xf32> -> vector<80x50xf32>
    %476 = vector.extract_strided_slice %5 {offsets = [0, 160], sizes = [32, 80], strides = [1, 1]} : vector<32x400xf32> to vector<32x80xf32>
    %cst_23 = arith.constant dense<0.000000e+00> : vector<32x50xf32>
    %477 = tpu.matmul %476, %475, %cst_23 {dimension_numbers = #tpu.dot_dimension_numbers<[1], [0], [0], [1], [0, 0, 1, 1], [], []>} : vector<32x80xf32>, vector<80x50xf32>, vector<32x50xf32> -> vector<32x50xf32>
    %478 = arith.addf %469, %477 : vector<32x50xf32>
    %479 = vector.extract_strided_slice %467 {offsets = [0, 0], sizes = [16, 50], strides = [1, 1]} : vector<16x54xf32> to vector<16x50xf32>
    %480 = vector.extract_strided_slice %467 {offsets = [0, 1], sizes = [16, 50], strides = [1, 1]} : vector<16x54xf32> to vector<16x50xf32>
    %481 = vector.extract_strided_slice %467 {offsets = [0, 2], sizes = [16, 50], strides = [1, 1]} : vector<16x54xf32> to vector<16x50xf32>
    %482 = vector.extract_strided_slice %467 {offsets = [0, 3], sizes = [16, 50], strides = [1, 1]} : vector<16x54xf32> to vector<16x50xf32>
    %483 = vector.extract_strided_slice %467 {offsets = [0, 4], sizes = [16, 50], strides = [1, 1]} : vector<16x54xf32> to vector<16x50xf32>
    %484 = tpu.concatenate %479, %480, %481, %482, %483 in 0 : vector<16x50xf32>, vector<16x50xf32>, vector<16x50xf32>, vector<16x50xf32>, vector<16x50xf32> -> vector<80x50xf32>
    %485 = vector.extract_strided_slice %5 {offsets = [0, 240], sizes = [32, 80], strides = [1, 1]} : vector<32x400xf32> to vector<32x80xf32>
    %cst_24 = arith.constant dense<0.000000e+00> : vector<32x50xf32>
    %486 = tpu.matmul %485, %484, %cst_24 {dimension_numbers = #tpu.dot_dimension_numbers<[1], [0], [0], [1], [0, 0, 1, 1], [], []>} : vector<32x80xf32>, vector<80x50xf32>, vector<32x50xf32> -> vector<32x50xf32>
    %487 = arith.addf %478, %486 : vector<32x50xf32>
    %cst_25 = arith.constant 0.000000e+00 : f32
    %488 = vector.broadcast %cst_25 : f32 to vector<32x50xf32>
    %489 = arith.maximumf %487, %488 : vector<32x50xf32>
    %cst_26 = arith.constant dense<0.000000e+00> : vector<32x25xf32>
    %490 = tpu.matmul %489, %7, %cst_26 {dimension_numbers = #tpu.dot_dimension_numbers<[1], [0], [0], [1], [0, 0, 1, 1], [], []>} : vector<32x50xf32>, vector<50x25xf32>, vector<32x25xf32> -> vector<32x25xf32>
    %491 = vector.shape_cast %6 : vector<32x1xf32> to vector<32x1xf32>
    %492 = vector.broadcast %491 : vector<32x1xf32> to vector<32x50xf32>
    %493 = vector.extract_strided_slice %464 {offsets = [0, 0], sizes = [16, 50], strides = [1, 1]} : vector<16x54xf32> to vector<16x50xf32>
    %494 = vector.extract_strided_slice %464 {offsets = [0, 1], sizes = [16, 50], strides = [1, 1]} : vector<16x54xf32> to vector<16x50xf32>
    %495 = vector.extract_strided_slice %464 {offsets = [0, 2], sizes = [16, 50], strides = [1, 1]} : vector<16x54xf32> to vector<16x50xf32>
    %496 = vector.extract_strided_slice %464 {offsets = [0, 3], sizes = [16, 50], strides = [1, 1]} : vector<16x54xf32> to vector<16x50xf32>
    %497 = vector.extract_strided_slice %464 {offsets = [0, 4], sizes = [16, 50], strides = [1, 1]} : vector<16x54xf32> to vector<16x50xf32>
    %498 = tpu.concatenate %493, %494, %495, %496, %497 in 0 : vector<16x50xf32>, vector<16x50xf32>, vector<16x50xf32>, vector<16x50xf32>, vector<16x50xf32> -> vector<80x50xf32>
    %499 = vector.extract_strided_slice %5 {offsets = [0, 80], sizes = [32, 80], strides = [1, 1]} : vector<32x400xf32> to vector<32x80xf32>
    %cst_27 = arith.constant dense<0.000000e+00> : vector<32x50xf32>
    %500 = tpu.matmul %499, %498, %cst_27 {dimension_numbers = #tpu.dot_dimension_numbers<[1], [0], [0], [1], [0, 0, 1, 1], [], []>} : vector<32x80xf32>, vector<80x50xf32>, vector<32x50xf32> -> vector<32x50xf32>
    %501 = arith.addf %492, %500 : vector<32x50xf32>
    %502 = vector.extract_strided_slice %467 {offsets = [0, 0], sizes = [16, 50], strides = [1, 1]} : vector<16x54xf32> to vector<16x50xf32>
    %503 = vector.extract_strided_slice %467 {offsets = [0, 1], sizes = [16, 50], strides = [1, 1]} : vector<16x54xf32> to vector<16x50xf32>
    %504 = vector.extract_strided_slice %467 {offsets = [0, 2], sizes = [16, 50], strides = [1, 1]} : vector<16x54xf32> to vector<16x50xf32>
    %505 = vector.extract_strided_slice %467 {offsets = [0, 3], sizes = [16, 50], strides = [1, 1]} : vector<16x54xf32> to vector<16x50xf32>
    %506 = vector.extract_strided_slice %467 {offsets = [0, 4], sizes = [16, 50], strides = [1, 1]} : vector<16x54xf32> to vector<16x50xf32>
    %507 = tpu.concatenate %502, %503, %504, %505, %506 in 0 : vector<16x50xf32>, vector<16x50xf32>, vector<16x50xf32>, vector<16x50xf32>, vector<16x50xf32> -> vector<80x50xf32>
    %508 = vector.extract_strided_slice %5 {offsets = [0, 160], sizes = [32, 80], strides = [1, 1]} : vector<32x400xf32> to vector<32x80xf32>
    %cst_28 = arith.constant dense<0.000000e+00> : vector<32x50xf32>
    %509 = tpu.matmul %508, %507, %cst_28 {dimension_numbers = #tpu.dot_dimension_numbers<[1], [0], [0], [1], [0, 0, 1, 1], [], []>} : vector<32x80xf32>, vector<80x50xf32>, vector<32x50xf32> -> vector<32x50xf32>
    %510 = arith.addf %501, %509 : vector<32x50xf32>
    %cst_29 = arith.constant 0.000000e+00 : f32
    %511 = vector.broadcast %cst_29 : f32 to vector<32x50xf32>
    %512 = arith.maximumf %510, %511 : vector<32x50xf32>
    %cst_30 = arith.constant dense<0.000000e+00> : vector<32x25xf32>
    %513 = tpu.matmul %512, %7, %cst_30 {dimension_numbers = #tpu.dot_dimension_numbers<[1], [0], [0], [1], [0, 0, 1, 1], [], []>} : vector<32x50xf32>, vector<50x25xf32>, vector<32x25xf32> -> vector<32x25xf32>
    %514 = arith.addf %490, %513 : vector<32x25xf32>
    %cst_31 = arith.constant 5.000000e-01 : f32
    %515 = vector.broadcast %cst_31 : f32 to vector<32x25xf32>
    %516 = arith.mulf %515, %514 : vector<32x25xf32>
    %c0_32 = arith.constant 0 : index
    %c0_33 = arith.constant 0 : index
    %517 = vector.load %arg9[%c0_32, %c0_33] : memref<1x256xf32, #tpu.memory_space<vmem>>, vector<1x256xf32>
    %518 = vector.extract_strided_slice %516 {offsets = [0, 0], sizes = [1, 25], strides = [1, 1]} : vector<32x25xf32> to vector<1x25xf32>
    %c0_34 = arith.constant 0 : index
    %c0_35 = arith.constant 0 : index
    %c0_36 = arith.constant 0 : index
    %519 = vector.load %arg8[%c0_34, %c0_35, %c0_36] : memref<32x25x256xf32, #tpu.memory_space<vmem>>, vector<1x25x256xf32>
    %520 = vector.shape_cast %519 : vector<1x25x256xf32> to vector<25x256xf32>
    %cst_37 = arith.constant dense<0.000000e+00> : vector<1x256xf32>
    %521 = tpu.matmul %518, %520, %cst_37 {dimension_numbers = #tpu.dot_dimension_numbers<[1], [0], [0], [1], [0, 0, 1, 1], [], []>} : vector<1x25xf32>, vector<25x256xf32>, vector<1x256xf32> -> vector<1x256xf32>
    %522 = arith.addf %517, %521 : vector<1x256xf32>
    %523 = vector.extract_strided_slice %516 {offsets = [1, 0], sizes = [1, 25], strides = [1, 1]} : vector<32x25xf32> to vector<1x25xf32>
    %c1 = arith.constant 1 : index
    %c0_38 = arith.constant 0 : index
    %c0_39 = arith.constant 0 : index
    %524 = vector.load %arg8[%c1, %c0_38, %c0_39] : memref<32x25x256xf32, #tpu.memory_space<vmem>>, vector<1x25x256xf32>
    %525 = vector.shape_cast %524 : vector<1x25x256xf32> to vector<25x256xf32>
    %cst_40 = arith.constant dense<0.000000e+00> : vector<1x256xf32>
    %526 = tpu.matmul %523, %525, %cst_40 {dimension_numbers = #tpu.dot_dimension_numbers<[1], [0], [0], [1], [0, 0, 1, 1], [], []>} : vector<1x25xf32>, vector<25x256xf32>, vector<1x256xf32> -> vector<1x256xf32>
    %527 = arith.addf %522, %526 : vector<1x256xf32>
    %528 = vector.extract_strided_slice %516 {offsets = [2, 0], sizes = [1, 25], strides = [1, 1]} : vector<32x25xf32> to vector<1x25xf32>
    %c2 = arith.constant 2 : index
    %c0_41 = arith.constant 0 : index
    %c0_42 = arith.constant 0 : index
    %529 = vector.load %arg8[%c2, %c0_41, %c0_42] : memref<32x25x256xf32, #tpu.memory_space<vmem>>, vector<1x25x256xf32>
    %530 = vector.shape_cast %529 : vector<1x25x256xf32> to vector<25x256xf32>
    %cst_43 = arith.constant dense<0.000000e+00> : vector<1x256xf32>
    %531 = tpu.matmul %528, %530, %cst_43 {dimension_numbers = #tpu.dot_dimension_numbers<[1], [0], [0], [1], [0, 0, 1, 1], [], []>} : vector<1x25xf32>, vector<25x256xf32>, vector<1x256xf32> -> vector<1x256xf32>
    %532 = arith.addf %527, %531 : vector<1x256xf32>
    %533 = vector.extract_strided_slice %516 {offsets = [3, 0], sizes = [1, 25], strides = [1, 1]} : vector<32x25xf32> to vector<1x25xf32>
    %c3 = arith.constant 3 : index
    %c0_44 = arith.constant 0 : index
    %c0_45 = arith.constant 0 : index
    %534 = vector.load %arg8[%c3, %c0_44, %c0_45] : memref<32x25x256xf32, #tpu.memory_space<vmem>>, vector<1x25x256xf32>
    %535 = vector.shape_cast %534 : vector<1x25x256xf32> to vector<25x256xf32>
    %cst_46 = arith.constant dense<0.000000e+00> : vector<1x256xf32>
    %536 = tpu.matmul %533, %535, %cst_46 {dimension_numbers = #tpu.dot_dimension_numbers<[1], [0], [0], [1], [0, 0, 1, 1], [], []>} : vector<1x25xf32>, vector<25x256xf32>, vector<1x256xf32> -> vector<1x256xf32>
    %537 = arith.addf %532, %536 : vector<1x256xf32>
    %538 = vector.extract_strided_slice %516 {offsets = [4, 0], sizes = [1, 25], strides = [1, 1]} : vector<32x25xf32> to vector<1x25xf32>
    %c4 = arith.constant 4 : index
    %c0_47 = arith.constant 0 : index
    %c0_48 = arith.constant 0 : index
    %539 = vector.load %arg8[%c4, %c0_47, %c0_48] : memref<32x25x256xf32, #tpu.memory_space<vmem>>, vector<1x25x256xf32>
    %540 = vector.shape_cast %539 : vector<1x25x256xf32> to vector<25x256xf32>
    %cst_49 = arith.constant dense<0.000000e+00> : vector<1x256xf32>
    %541 = tpu.matmul %538, %540, %cst_49 {dimension_numbers = #tpu.dot_dimension_numbers<[1], [0], [0], [1], [0, 0, 1, 1], [], []>} : vector<1x25xf32>, vector<25x256xf32>, vector<1x256xf32> -> vector<1x256xf32>
    %542 = arith.addf %537, %541 : vector<1x256xf32>
    %543 = vector.extract_strided_slice %516 {offsets = [5, 0], sizes = [1, 25], strides = [1, 1]} : vector<32x25xf32> to vector<1x25xf32>
    %c5 = arith.constant 5 : index
    %c0_50 = arith.constant 0 : index
    %c0_51 = arith.constant 0 : index
    %544 = vector.load %arg8[%c5, %c0_50, %c0_51] : memref<32x25x256xf32, #tpu.memory_space<vmem>>, vector<1x25x256xf32>
    %545 = vector.shape_cast %544 : vector<1x25x256xf32> to vector<25x256xf32>
    %cst_52 = arith.constant dense<0.000000e+00> : vector<1x256xf32>
    %546 = tpu.matmul %543, %545, %cst_52 {dimension_numbers = #tpu.dot_dimension_numbers<[1], [0], [0], [1], [0, 0, 1, 1], [], []>} : vector<1x25xf32>, vector<25x256xf32>, vector<1x256xf32> -> vector<1x256xf32>
    %547 = arith.addf %542, %546 : vector<1x256xf32>
    %548 = vector.extract_strided_slice %516 {offsets = [6, 0], sizes = [1, 25], strides = [1, 1]} : vector<32x25xf32> to vector<1x25xf32>
    %c6 = arith.constant 6 : index
    %c0_53 = arith.constant 0 : index
    %c0_54 = arith.constant 0 : index
    %549 = vector.load %arg8[%c6, %c0_53, %c0_54] : memref<32x25x256xf32, #tpu.memory_space<vmem>>, vector<1x25x256xf32>
    %550 = vector.shape_cast %549 : vector<1x25x256xf32> to vector<25x256xf32>
    %cst_55 = arith.constant dense<0.000000e+00> : vector<1x256xf32>
    %551 = tpu.matmul %548, %550, %cst_55 {dimension_numbers = #tpu.dot_dimension_numbers<[1], [0], [0], [1], [0, 0, 1, 1], [], []>} : vector<1x25xf32>, vector<25x256xf32>, vector<1x256xf32> -> vector<1x256xf32>
    %552 = arith.addf %547, %551 : vector<1x256xf32>
    %553 = vector.extract_strided_slice %516 {offsets = [7, 0], sizes = [1, 25], strides = [1, 1]} : vector<32x25xf32> to vector<1x25xf32>
    %c7 = arith.constant 7 : index
    %c0_56 = arith.constant 0 : index
    %c0_57 = arith.constant 0 : index
    %554 = vector.load %arg8[%c7, %c0_56, %c0_57] : memref<32x25x256xf32, #tpu.memory_space<vmem>>, vector<1x25x256xf32>
    %555 = vector.shape_cast %554 : vector<1x25x256xf32> to vector<25x256xf32>
    %cst_58 = arith.constant dense<0.000000e+00> : vector<1x256xf32>
    %556 = tpu.matmul %553, %555, %cst_58 {dimension_numbers = #tpu.dot_dimension_numbers<[1], [0], [0], [1], [0, 0, 1, 1], [], []>} : vector<1x25xf32>, vector<25x256xf32>, vector<1x256xf32> -> vector<1x256xf32>
    %557 = arith.addf %552, %556 : vector<1x256xf32>
    %558 = vector.extract_strided_slice %516 {offsets = [8, 0], sizes = [1, 25], strides = [1, 1]} : vector<32x25xf32> to vector<1x25xf32>
    %c8 = arith.constant 8 : index
    %c0_59 = arith.constant 0 : index
    %c0_60 = arith.constant 0 : index
    %559 = vector.load %arg8[%c8, %c0_59, %c0_60] : memref<32x25x256xf32, #tpu.memory_space<vmem>>, vector<1x25x256xf32>
    %560 = vector.shape_cast %559 : vector<1x25x256xf32> to vector<25x256xf32>
    %cst_61 = arith.constant dense<0.000000e+00> : vector<1x256xf32>
    %561 = tpu.matmul %558, %560, %cst_61 {dimension_numbers = #tpu.dot_dimension_numbers<[1], [0], [0], [1], [0, 0, 1, 1], [], []>} : vector<1x25xf32>, vector<25x256xf32>, vector<1x256xf32> -> vector<1x256xf32>
    %562 = arith.addf %557, %561 : vector<1x256xf32>
    %563 = vector.extract_strided_slice %516 {offsets = [9, 0], sizes = [1, 25], strides = [1, 1]} : vector<32x25xf32> to vector<1x25xf32>
    %c9 = arith.constant 9 : index
    %c0_62 = arith.constant 0 : index
    %c0_63 = arith.constant 0 : index
    %564 = vector.load %arg8[%c9, %c0_62, %c0_63] : memref<32x25x256xf32, #tpu.memory_space<vmem>>, vector<1x25x256xf32>
    %565 = vector.shape_cast %564 : vector<1x25x256xf32> to vector<25x256xf32>
    %cst_64 = arith.constant dense<0.000000e+00> : vector<1x256xf32>
    %566 = tpu.matmul %563, %565, %cst_64 {dimension_numbers = #tpu.dot_dimension_numbers<[1], [0], [0], [1], [0, 0, 1, 1], [], []>} : vector<1x25xf32>, vector<25x256xf32>, vector<1x256xf32> -> vector<1x256xf32>
    %567 = arith.addf %562, %566 : vector<1x256xf32>
    %568 = vector.extract_strided_slice %516 {offsets = [10, 0], sizes = [1, 25], strides = [1, 1]} : vector<32x25xf32> to vector<1x25xf32>
    %c10 = arith.constant 10 : index
    %c0_65 = arith.constant 0 : index
    %c0_66 = arith.constant 0 : index
    %569 = vector.load %arg8[%c10, %c0_65, %c0_66] : memref<32x25x256xf32, #tpu.memory_space<vmem>>, vector<1x25x256xf32>
    %570 = vector.shape_cast %569 : vector<1x25x256xf32> to vector<25x256xf32>
    %cst_67 = arith.constant dense<0.000000e+00> : vector<1x256xf32>
    %571 = tpu.matmul %568, %570, %cst_67 {dimension_numbers = #tpu.dot_dimension_numbers<[1], [0], [0], [1], [0, 0, 1, 1], [], []>} : vector<1x25xf32>, vector<25x256xf32>, vector<1x256xf32> -> vector<1x256xf32>
    %572 = arith.addf %567, %571 : vector<1x256xf32>
    %573 = vector.extract_strided_slice %516 {offsets = [11, 0], sizes = [1, 25], strides = [1, 1]} : vector<32x25xf32> to vector<1x25xf32>
    %c11 = arith.constant 11 : index
    %c0_68 = arith.constant 0 : index
    %c0_69 = arith.constant 0 : index
    %574 = vector.load %arg8[%c11, %c0_68, %c0_69] : memref<32x25x256xf32, #tpu.memory_space<vmem>>, vector<1x25x256xf32>
    %575 = vector.shape_cast %574 : vector<1x25x256xf32> to vector<25x256xf32>
    %cst_70 = arith.constant dense<0.000000e+00> : vector<1x256xf32>
    %576 = tpu.matmul %573, %575, %cst_70 {dimension_numbers = #tpu.dot_dimension_numbers<[1], [0], [0], [1], [0, 0, 1, 1], [], []>} : vector<1x25xf32>, vector<25x256xf32>, vector<1x256xf32> -> vector<1x256xf32>
    %577 = arith.addf %572, %576 : vector<1x256xf32>
    %578 = vector.extract_strided_slice %516 {offsets = [12, 0], sizes = [1, 25], strides = [1, 1]} : vector<32x25xf32> to vector<1x25xf32>
    %c12 = arith.constant 12 : index
    %c0_71 = arith.constant 0 : index
    %c0_72 = arith.constant 0 : index
    %579 = vector.load %arg8[%c12, %c0_71, %c0_72] : memref<32x25x256xf32, #tpu.memory_space<vmem>>, vector<1x25x256xf32>
    %580 = vector.shape_cast %579 : vector<1x25x256xf32> to vector<25x256xf32>
    %cst_73 = arith.constant dense<0.000000e+00> : vector<1x256xf32>
    %581 = tpu.matmul %578, %580, %cst_73 {dimension_numbers = #tpu.dot_dimension_numbers<[1], [0], [0], [1], [0, 0, 1, 1], [], []>} : vector<1x25xf32>, vector<25x256xf32>, vector<1x256xf32> -> vector<1x256xf32>
    %582 = arith.addf %577, %581 : vector<1x256xf32>
    %583 = vector.extract_strided_slice %516 {offsets = [13, 0], sizes = [1, 25], strides = [1, 1]} : vector<32x25xf32> to vector<1x25xf32>
    %c13 = arith.constant 13 : index
    %c0_74 = arith.constant 0 : index
    %c0_75 = arith.constant 0 : index
    %584 = vector.load %arg8[%c13, %c0_74, %c0_75] : memref<32x25x256xf32, #tpu.memory_space<vmem>>, vector<1x25x256xf32>
    %585 = vector.shape_cast %584 : vector<1x25x256xf32> to vector<25x256xf32>
    %cst_76 = arith.constant dense<0.000000e+00> : vector<1x256xf32>
    %586 = tpu.matmul %583, %585, %cst_76 {dimension_numbers = #tpu.dot_dimension_numbers<[1], [0], [0], [1], [0, 0, 1, 1], [], []>} : vector<1x25xf32>, vector<25x256xf32>, vector<1x256xf32> -> vector<1x256xf32>
    %587 = arith.addf %582, %586 : vector<1x256xf32>
    %588 = vector.extract_strided_slice %516 {offsets = [14, 0], sizes = [1, 25], strides = [1, 1]} : vector<32x25xf32> to vector<1x25xf32>
    %c14 = arith.constant 14 : index
    %c0_77 = arith.constant 0 : index
    %c0_78 = arith.constant 0 : index
    %589 = vector.load %arg8[%c14, %c0_77, %c0_78] : memref<32x25x256xf32, #tpu.memory_space<vmem>>, vector<1x25x256xf32>
    %590 = vector.shape_cast %589 : vector<1x25x256xf32> to vector<25x256xf32>
    %cst_79 = arith.constant dense<0.000000e+00> : vector<1x256xf32>
    %591 = tpu.matmul %588, %590, %cst_79 {dimension_numbers = #tpu.dot_dimension_numbers<[1], [0], [0], [1], [0, 0, 1, 1], [], []>} : vector<1x25xf32>, vector<25x256xf32>, vector<1x256xf32> -> vector<1x256xf32>
    %592 = arith.addf %587, %591 : vector<1x256xf32>
    %593 = vector.extract_strided_slice %516 {offsets = [15, 0], sizes = [1, 25], strides = [1, 1]} : vector<32x25xf32> to vector<1x25xf32>
    %c15 = arith.constant 15 : index
    %c0_80 = arith.constant 0 : index
    %c0_81 = arith.constant 0 : index
    %594 = vector.load %arg8[%c15, %c0_80, %c0_81] : memref<32x25x256xf32, #tpu.memory_space<vmem>>, vector<1x25x256xf32>
    %595 = vector.shape_cast %594 : vector<1x25x256xf32> to vector<25x256xf32>
    %cst_82 = arith.constant dense<0.000000e+00> : vector<1x256xf32>
    %596 = tpu.matmul %593, %595, %cst_82 {dimension_numbers = #tpu.dot_dimension_numbers<[1], [0], [0], [1], [0, 0, 1, 1], [], []>} : vector<1x25xf32>, vector<25x256xf32>, vector<1x256xf32> -> vector<1x256xf32>
    %597 = arith.addf %592, %596 : vector<1x256xf32>
    %598 = vector.extract_strided_slice %516 {offsets = [16, 0], sizes = [1, 25], strides = [1, 1]} : vector<32x25xf32> to vector<1x25xf32>
    %c16 = arith.constant 16 : index
    %c0_83 = arith.constant 0 : index
    %c0_84 = arith.constant 0 : index
    %599 = vector.load %arg8[%c16, %c0_83, %c0_84] : memref<32x25x256xf32, #tpu.memory_space<vmem>>, vector<1x25x256xf32>
    %600 = vector.shape_cast %599 : vector<1x25x256xf32> to vector<25x256xf32>
    %cst_85 = arith.constant dense<0.000000e+00> : vector<1x256xf32>
    %601 = tpu.matmul %598, %600, %cst_85 {dimension_numbers = #tpu.dot_dimension_numbers<[1], [0], [0], [1], [0, 0, 1, 1], [], []>} : vector<1x25xf32>, vector<25x256xf32>, vector<1x256xf32> -> vector<1x256xf32>
    %602 = arith.addf %597, %601 : vector<1x256xf32>
    %603 = vector.extract_strided_slice %516 {offsets = [17, 0], sizes = [1, 25], strides = [1, 1]} : vector<32x25xf32> to vector<1x25xf32>
    %c17 = arith.constant 17 : index
    %c0_86 = arith.constant 0 : index
    %c0_87 = arith.constant 0 : index
    %604 = vector.load %arg8[%c17, %c0_86, %c0_87] : memref<32x25x256xf32, #tpu.memory_space<vmem>>, vector<1x25x256xf32>
    %605 = vector.shape_cast %604 : vector<1x25x256xf32> to vector<25x256xf32>
    %cst_88 = arith.constant dense<0.000000e+00> : vector<1x256xf32>
    %606 = tpu.matmul %603, %605, %cst_88 {dimension_numbers = #tpu.dot_dimension_numbers<[1], [0], [0], [1], [0, 0, 1, 1], [], []>} : vector<1x25xf32>, vector<25x256xf32>, vector<1x256xf32> -> vector<1x256xf32>
    %607 = arith.addf %602, %606 : vector<1x256xf32>
    %608 = vector.extract_strided_slice %516 {offsets = [18, 0], sizes = [1, 25], strides = [1, 1]} : vector<32x25xf32> to vector<1x25xf32>
    %c18 = arith.constant 18 : index
    %c0_89 = arith.constant 0 : index
    %c0_90 = arith.constant 0 : index
    %609 = vector.load %arg8[%c18, %c0_89, %c0_90] : memref<32x25x256xf32, #tpu.memory_space<vmem>>, vector<1x25x256xf32>
    %610 = vector.shape_cast %609 : vector<1x25x256xf32> to vector<25x256xf32>
    %cst_91 = arith.constant dense<0.000000e+00> : vector<1x256xf32>
    %611 = tpu.matmul %608, %610, %cst_91 {dimension_numbers = #tpu.dot_dimension_numbers<[1], [0], [0], [1], [0, 0, 1, 1], [], []>} : vector<1x25xf32>, vector<25x256xf32>, vector<1x256xf32> -> vector<1x256xf32>
    %612 = arith.addf %607, %611 : vector<1x256xf32>
    %613 = vector.extract_strided_slice %516 {offsets = [19, 0], sizes = [1, 25], strides = [1, 1]} : vector<32x25xf32> to vector<1x25xf32>
    %c19 = arith.constant 19 : index
    %c0_92 = arith.constant 0 : index
    %c0_93 = arith.constant 0 : index
    %614 = vector.load %arg8[%c19, %c0_92, %c0_93] : memref<32x25x256xf32, #tpu.memory_space<vmem>>, vector<1x25x256xf32>
    %615 = vector.shape_cast %614 : vector<1x25x256xf32> to vector<25x256xf32>
    %cst_94 = arith.constant dense<0.000000e+00> : vector<1x256xf32>
    %616 = tpu.matmul %613, %615, %cst_94 {dimension_numbers = #tpu.dot_dimension_numbers<[1], [0], [0], [1], [0, 0, 1, 1], [], []>} : vector<1x25xf32>, vector<25x256xf32>, vector<1x256xf32> -> vector<1x256xf32>
    %617 = arith.addf %612, %616 : vector<1x256xf32>
    %618 = vector.extract_strided_slice %516 {offsets = [20, 0], sizes = [1, 25], strides = [1, 1]} : vector<32x25xf32> to vector<1x25xf32>
    %c20 = arith.constant 20 : index
    %c0_95 = arith.constant 0 : index
    %c0_96 = arith.constant 0 : index
    %619 = vector.load %arg8[%c20, %c0_95, %c0_96] : memref<32x25x256xf32, #tpu.memory_space<vmem>>, vector<1x25x256xf32>
    %620 = vector.shape_cast %619 : vector<1x25x256xf32> to vector<25x256xf32>
    %cst_97 = arith.constant dense<0.000000e+00> : vector<1x256xf32>
    %621 = tpu.matmul %618, %620, %cst_97 {dimension_numbers = #tpu.dot_dimension_numbers<[1], [0], [0], [1], [0, 0, 1, 1], [], []>} : vector<1x25xf32>, vector<25x256xf32>, vector<1x256xf32> -> vector<1x256xf32>
    %622 = arith.addf %617, %621 : vector<1x256xf32>
    %623 = vector.extract_strided_slice %516 {offsets = [21, 0], sizes = [1, 25], strides = [1, 1]} : vector<32x25xf32> to vector<1x25xf32>
    %c21 = arith.constant 21 : index
    %c0_98 = arith.constant 0 : index
    %c0_99 = arith.constant 0 : index
    %624 = vector.load %arg8[%c21, %c0_98, %c0_99] : memref<32x25x256xf32, #tpu.memory_space<vmem>>, vector<1x25x256xf32>
    %625 = vector.shape_cast %624 : vector<1x25x256xf32> to vector<25x256xf32>
    %cst_100 = arith.constant dense<0.000000e+00> : vector<1x256xf32>
    %626 = tpu.matmul %623, %625, %cst_100 {dimension_numbers = #tpu.dot_dimension_numbers<[1], [0], [0], [1], [0, 0, 1, 1], [], []>} : vector<1x25xf32>, vector<25x256xf32>, vector<1x256xf32> -> vector<1x256xf32>
    %627 = arith.addf %622, %626 : vector<1x256xf32>
    %628 = vector.extract_strided_slice %516 {offsets = [22, 0], sizes = [1, 25], strides = [1, 1]} : vector<32x25xf32> to vector<1x25xf32>
    %c22 = arith.constant 22 : index
    %c0_101 = arith.constant 0 : index
    %c0_102 = arith.constant 0 : index
    %629 = vector.load %arg8[%c22, %c0_101, %c0_102] : memref<32x25x256xf32, #tpu.memory_space<vmem>>, vector<1x25x256xf32>
    %630 = vector.shape_cast %629 : vector<1x25x256xf32> to vector<25x256xf32>
    %cst_103 = arith.constant dense<0.000000e+00> : vector<1x256xf32>
    %631 = tpu.matmul %628, %630, %cst_103 {dimension_numbers = #tpu.dot_dimension_numbers<[1], [0], [0], [1], [0, 0, 1, 1], [], []>} : vector<1x25xf32>, vector<25x256xf32>, vector<1x256xf32> -> vector<1x256xf32>
    %632 = arith.addf %627, %631 : vector<1x256xf32>
    %633 = vector.extract_strided_slice %516 {offsets = [23, 0], sizes = [1, 25], strides = [1, 1]} : vector<32x25xf32> to vector<1x25xf32>
    %c23 = arith.constant 23 : index
    %c0_104 = arith.constant 0 : index
    %c0_105 = arith.constant 0 : index
    %634 = vector.load %arg8[%c23, %c0_104, %c0_105] : memref<32x25x256xf32, #tpu.memory_space<vmem>>, vector<1x25x256xf32>
    %635 = vector.shape_cast %634 : vector<1x25x256xf32> to vector<25x256xf32>
    %cst_106 = arith.constant dense<0.000000e+00> : vector<1x256xf32>
    %636 = tpu.matmul %633, %635, %cst_106 {dimension_numbers = #tpu.dot_dimension_numbers<[1], [0], [0], [1], [0, 0, 1, 1], [], []>} : vector<1x25xf32>, vector<25x256xf32>, vector<1x256xf32> -> vector<1x256xf32>
    %637 = arith.addf %632, %636 : vector<1x256xf32>
    %638 = vector.extract_strided_slice %516 {offsets = [24, 0], sizes = [1, 25], strides = [1, 1]} : vector<32x25xf32> to vector<1x25xf32>
    %c24 = arith.constant 24 : index
    %c0_107 = arith.constant 0 : index
    %c0_108 = arith.constant 0 : index
    %639 = vector.load %arg8[%c24, %c0_107, %c0_108] : memref<32x25x256xf32, #tpu.memory_space<vmem>>, vector<1x25x256xf32>
    %640 = vector.shape_cast %639 : vector<1x25x256xf32> to vector<25x256xf32>
    %cst_109 = arith.constant dense<0.000000e+00> : vector<1x256xf32>
    %641 = tpu.matmul %638, %640, %cst_109 {dimension_numbers = #tpu.dot_dimension_numbers<[1], [0], [0], [1], [0, 0, 1, 1], [], []>} : vector<1x25xf32>, vector<25x256xf32>, vector<1x256xf32> -> vector<1x256xf32>
    %642 = arith.addf %637, %641 : vector<1x256xf32>
    %643 = vector.extract_strided_slice %516 {offsets = [25, 0], sizes = [1, 25], strides = [1, 1]} : vector<32x25xf32> to vector<1x25xf32>
    %c25 = arith.constant 25 : index
    %c0_110 = arith.constant 0 : index
    %c0_111 = arith.constant 0 : index
    %644 = vector.load %arg8[%c25, %c0_110, %c0_111] : memref<32x25x256xf32, #tpu.memory_space<vmem>>, vector<1x25x256xf32>
    %645 = vector.shape_cast %644 : vector<1x25x256xf32> to vector<25x256xf32>
    %cst_112 = arith.constant dense<0.000000e+00> : vector<1x256xf32>
    %646 = tpu.matmul %643, %645, %cst_112 {dimension_numbers = #tpu.dot_dimension_numbers<[1], [0], [0], [1], [0, 0, 1, 1], [], []>} : vector<1x25xf32>, vector<25x256xf32>, vector<1x256xf32> -> vector<1x256xf32>
    %647 = arith.addf %642, %646 : vector<1x256xf32>
    %648 = vector.extract_strided_slice %516 {offsets = [26, 0], sizes = [1, 25], strides = [1, 1]} : vector<32x25xf32> to vector<1x25xf32>
    %c26 = arith.constant 26 : index
    %c0_113 = arith.constant 0 : index
    %c0_114 = arith.constant 0 : index
    %649 = vector.load %arg8[%c26, %c0_113, %c0_114] : memref<32x25x256xf32, #tpu.memory_space<vmem>>, vector<1x25x256xf32>
    %650 = vector.shape_cast %649 : vector<1x25x256xf32> to vector<25x256xf32>
    %cst_115 = arith.constant dense<0.000000e+00> : vector<1x256xf32>
    %651 = tpu.matmul %648, %650, %cst_115 {dimension_numbers = #tpu.dot_dimension_numbers<[1], [0], [0], [1], [0, 0, 1, 1], [], []>} : vector<1x25xf32>, vector<25x256xf32>, vector<1x256xf32> -> vector<1x256xf32>
    %652 = arith.addf %647, %651 : vector<1x256xf32>
    %653 = vector.extract_strided_slice %516 {offsets = [27, 0], sizes = [1, 25], strides = [1, 1]} : vector<32x25xf32> to vector<1x25xf32>
    %c27 = arith.constant 27 : index
    %c0_116 = arith.constant 0 : index
    %c0_117 = arith.constant 0 : index
    %654 = vector.load %arg8[%c27, %c0_116, %c0_117] : memref<32x25x256xf32, #tpu.memory_space<vmem>>, vector<1x25x256xf32>
    %655 = vector.shape_cast %654 : vector<1x25x256xf32> to vector<25x256xf32>
    %cst_118 = arith.constant dense<0.000000e+00> : vector<1x256xf32>
    %656 = tpu.matmul %653, %655, %cst_118 {dimension_numbers = #tpu.dot_dimension_numbers<[1], [0], [0], [1], [0, 0, 1, 1], [], []>} : vector<1x25xf32>, vector<25x256xf32>, vector<1x256xf32> -> vector<1x256xf32>
    %657 = arith.addf %652, %656 : vector<1x256xf32>
    %658 = vector.extract_strided_slice %516 {offsets = [28, 0], sizes = [1, 25], strides = [1, 1]} : vector<32x25xf32> to vector<1x25xf32>
    %c28 = arith.constant 28 : index
    %c0_119 = arith.constant 0 : index
    %c0_120 = arith.constant 0 : index
    %659 = vector.load %arg8[%c28, %c0_119, %c0_120] : memref<32x25x256xf32, #tpu.memory_space<vmem>>, vector<1x25x256xf32>
    %660 = vector.shape_cast %659 : vector<1x25x256xf32> to vector<25x256xf32>
    %cst_121 = arith.constant dense<0.000000e+00> : vector<1x256xf32>
    %661 = tpu.matmul %658, %660, %cst_121 {dimension_numbers = #tpu.dot_dimension_numbers<[1], [0], [0], [1], [0, 0, 1, 1], [], []>} : vector<1x25xf32>, vector<25x256xf32>, vector<1x256xf32> -> vector<1x256xf32>
    %662 = arith.addf %657, %661 : vector<1x256xf32>
    %663 = vector.extract_strided_slice %516 {offsets = [29, 0], sizes = [1, 25], strides = [1, 1]} : vector<32x25xf32> to vector<1x25xf32>
    %c29 = arith.constant 29 : index
    %c0_122 = arith.constant 0 : index
    %c0_123 = arith.constant 0 : index
    %664 = vector.load %arg8[%c29, %c0_122, %c0_123] : memref<32x25x256xf32, #tpu.memory_space<vmem>>, vector<1x25x256xf32>
    %665 = vector.shape_cast %664 : vector<1x25x256xf32> to vector<25x256xf32>
    %cst_124 = arith.constant dense<0.000000e+00> : vector<1x256xf32>
    %666 = tpu.matmul %663, %665, %cst_124 {dimension_numbers = #tpu.dot_dimension_numbers<[1], [0], [0], [1], [0, 0, 1, 1], [], []>} : vector<1x25xf32>, vector<25x256xf32>, vector<1x256xf32> -> vector<1x256xf32>
    %667 = arith.addf %662, %666 : vector<1x256xf32>
    %668 = vector.extract_strided_slice %516 {offsets = [30, 0], sizes = [1, 25], strides = [1, 1]} : vector<32x25xf32> to vector<1x25xf32>
    %c30 = arith.constant 30 : index
    %c0_125 = arith.constant 0 : index
    %c0_126 = arith.constant 0 : index
    %669 = vector.load %arg8[%c30, %c0_125, %c0_126] : memref<32x25x256xf32, #tpu.memory_space<vmem>>, vector<1x25x256xf32>
    %670 = vector.shape_cast %669 : vector<1x25x256xf32> to vector<25x256xf32>
    %cst_127 = arith.constant dense<0.000000e+00> : vector<1x256xf32>
    %671 = tpu.matmul %668, %670, %cst_127 {dimension_numbers = #tpu.dot_dimension_numbers<[1], [0], [0], [1], [0, 0, 1, 1], [], []>} : vector<1x25xf32>, vector<25x256xf32>, vector<1x256xf32> -> vector<1x256xf32>
    %672 = arith.addf %667, %671 : vector<1x256xf32>
    %673 = vector.extract_strided_slice %516 {offsets = [31, 0], sizes = [1, 25], strides = [1, 1]} : vector<32x25xf32> to vector<1x25xf32>
    %c31 = arith.constant 31 : index
    %c0_128 = arith.constant 0 : index
    %c0_129 = arith.constant 0 : index
    %674 = vector.load %arg8[%c31, %c0_128, %c0_129] : memref<32x25x256xf32, #tpu.memory_space<vmem>>, vector<1x25x256xf32>
    %675 = vector.shape_cast %674 : vector<1x25x256xf32> to vector<25x256xf32>
    %cst_130 = arith.constant dense<0.000000e+00> : vector<1x256xf32>
    %676 = tpu.matmul %673, %675, %cst_130 {dimension_numbers = #tpu.dot_dimension_numbers<[1], [0], [0], [1], [0, 0, 1, 1], [], []>} : vector<1x25xf32>, vector<25x256xf32>, vector<1x256xf32> -> vector<1x256xf32>
    %677 = arith.addf %672, %676 : vector<1x256xf32>
    %c0_131 = arith.constant 0 : index
    %c0_132 = arith.constant 0 : index
    %678 = vector.load %arg10[%c0_131, %c0_132] : memref<1x256xf32, #tpu.memory_space<vmem>>, vector<1x256xf32>
    %679 = arith.mulf %677, %678 : vector<1x256xf32>
    %c0_133 = arith.constant 0 : index
    %c0_134 = arith.constant 0 : index
    %680 = vector.load %arg11[%c0_133, %c0_134] : memref<1x256xf32, #tpu.memory_space<vmem>>, vector<1x256xf32>
    %681 = arith.addf %679, %680 : vector<1x256xf32>
    %cst_135 = arith.constant 0.000000e+00 : f32
    %682 = vector.broadcast %cst_135 : f32 to vector<1x256xf32>
    %683 = arith.maximumf %681, %682 : vector<1x256xf32>
    %c0_136 = arith.constant 0 : index
    %c0_137 = arith.constant 0 : index
    %684 = vector.load %arg12[%c0_136, %c0_137] : memref<256x128xf32, #tpu.memory_space<vmem>>, vector<256x128xf32>
    %cst_138 = arith.constant dense<0.000000e+00> : vector<1x128xf32>
    %685 = tpu.matmul %683, %684, %cst_138 {dimension_numbers = #tpu.dot_dimension_numbers<[1], [0], [0], [1], [0, 0, 1, 1], [], []>} : vector<1x256xf32>, vector<256x128xf32>, vector<1x128xf32> -> vector<1x128xf32>
    %c0_139 = arith.constant 0 : index
    %c0_140 = arith.constant 0 : index
    %686 = vector.load %arg13[%c0_139, %c0_140] : memref<1x128xf32, #tpu.memory_space<vmem>>, vector<1x128xf32>
    %687 = arith.addf %685, %686 : vector<1x128xf32>
    %c0_141 = arith.constant 0 : index
    %c0_142 = arith.constant 0 : index
    %688 = vector.load %arg14[%c0_141, %c0_142] : memref<1x128xf32, #tpu.memory_space<vmem>>, vector<1x128xf32>
    %689 = arith.mulf %687, %688 : vector<1x128xf32>
    %c0_143 = arith.constant 0 : index
    %c0_144 = arith.constant 0 : index
    %690 = vector.load %arg15[%c0_143, %c0_144] : memref<1x128xf32, #tpu.memory_space<vmem>>, vector<1x128xf32>
    %691 = arith.addf %689, %690 : vector<1x128xf32>
    %cst_145 = arith.constant 0.000000e+00 : f32
    %692 = vector.broadcast %cst_145 : f32 to vector<1x128xf32>
    %693 = arith.maximumf %691, %692 : vector<1x128xf32>
    %c0_146 = arith.constant 0 : index
    %c0_147 = arith.constant 0 : index
    %694 = vector.load %arg16[%c0_146, %c0_147] : memref<128x64xf32, #tpu.memory_space<vmem>>, vector<128x64xf32>
    %cst_148 = arith.constant dense<0.000000e+00> : vector<1x64xf32>
    %695 = tpu.matmul %693, %694, %cst_148 {dimension_numbers = #tpu.dot_dimension_numbers<[1], [0], [0], [1], [0, 0, 1, 1], [], []>} : vector<1x128xf32>, vector<128x64xf32>, vector<1x64xf32> -> vector<1x64xf32>
    %c0_149 = arith.constant 0 : index
    %c0_150 = arith.constant 0 : index
    %696 = vector.load %arg17[%c0_149, %c0_150] : memref<1x64xf32, #tpu.memory_space<vmem>>, vector<1x64xf32>
    %697 = arith.addf %695, %696 : vector<1x64xf32>
    %c0_151 = arith.constant 0 : index
    %c0_152 = arith.constant 0 : index
    %c0_153 = arith.constant 0 : index
    %698 = vector.load %arg18[%c0_151, %c0_152, %c0_153] : memref<1x1x64xf32, #tpu.memory_space<vmem>>, vector<1x1x64xf32>
    %699 = vector.shape_cast %698 : vector<1x1x64xf32> to vector<1x64xf32>
    %700 = vector.shape_cast %697 : vector<1x64xf32> to vector<1x1x64xf32>
    tpu.vector_store %arg18[%c0_151, %c0_152, %c0_153], %700 {strides = array<i32>} : memref<1x1x64xf32, #tpu.memory_space<vmem>>, vector<1x1x64xf32>,
    return
  }
  func.func @transform_0(%arg0: i32) -> (i32, i32, i32) {
    %c0_i32 = arith.constant 0 : i32
    %c0_i32_0 = arith.constant 0 : i32
    %c0_i32_1 = arith.constant 0 : i32
    return %arg0, %c0_i32, %c0_i32_0 : i32, i32, i32
  }
  func.func @transform_1(%arg0: i32) -> (i32, i32) {
    %c0_i32 = arith.constant 0 : i32
    %c0_i32_0 = arith.constant 0 : i32
    %c0_i32_1 = arith.constant 0 : i32
    return %c0_i32, %c0_i32_0 : i32, i32
  }
  func.func @transform_2(%arg0: i32) -> (i32, i32) {
    %c0_i32 = arith.constant 0 : i32
    %c0_i32_0 = arith.constant 0 : i32
    %c0_i32_1 = arith.constant 0 : i32
    return %c0_i32, %c0_i32_0 : i32, i32
  }
  func.func @transform_3(%arg0: i32) -> (i32, i32) {
    %c0_i32 = arith.constant 0 : i32
    %c0_i32_0 = arith.constant 0 : i32
    %c0_i32_1 = arith.constant 0 : i32
    return %c0_i32, %c0_i32_0 : i32, i32
  }
  func.func @transform_4(%arg0: i32) -> (i32, i32) {
    %c0_i32 = arith.constant 0 : i32
    %c0_i32_0 = arith.constant 0 : i32
    %c0_i32_1 = arith.constant 0 : i32
    return %c0_i32, %c0_i32_0 : i32, i32
  }
  func.func @transform_5(%arg0: i32) -> (i32, i32) {
    %c0_i32 = arith.constant 0 : i32
    %c0_i32_0 = arith.constant 0 : i32
    %c0_i32_1 = arith.constant 0 : i32
    return %c0_i32, %c0_i32_0 : i32, i32
  }
  func.func @transform_6(%arg0: i32) -> (i32, i32) {
    %c0_i32 = arith.constant 0 : i32
    %c0_i32_0 = arith.constant 0 : i32
    %c0_i32_1 = arith.constant 0 : i32
    return %c0_i32, %c0_i32_0 : i32, i32
  }
  func.func @transform_7(%arg0: i32) -> (i32, i32, i32) {
    %c0_i32 = arith.constant 0 : i32
    %c0_i32_0 = arith.constant 0 : i32
    %c0_i32_1 = arith.constant 0 : i32
    %c0_i32_2 = arith.constant 0 : i32
    return %c0_i32, %c0_i32_0, %c0_i32_1 : i32, i32, i32
  }
  func.func @transform_8(%arg0: i32) -> (i32, i32) {
    %c0_i32 = arith.constant 0 : i32
    %c0_i32_0 = arith.constant 0 : i32
    %c0_i32_1 = arith.constant 0 : i32
    return %c0_i32, %c0_i32_0 : i32, i32
  }
  func.func @transform_9(%arg0: i32) -> (i32, i32) {
    %c0_i32 = arith.constant 0 : i32
    %c0_i32_0 = arith.constant 0 : i32
    %c0_i32_1 = arith.constant 0 : i32
    return %c0_i32, %c0_i32_0 : i32, i32
  }
  func.func @transform_10(%arg0: i32) -> (i32, i32) {
    %c0_i32 = arith.constant 0 : i32
    %c0_i32_0 = arith.constant 0 : i32
    %c0_i32_1 = arith.constant 0 : i32
    return %c0_i32, %c0_i32_0 : i32, i32
  }
  func.func @transform_11(%arg0: i32) -> (i32, i32) {
    %c0_i32 = arith.constant 0 : i32
    %c0_i32_0 = arith.constant 0 : i32
    %c0_i32_1 = arith.constant 0 : i32
    return %c0_i32, %c0_i32_0 : i32, i32
  }
  func.func @transform_12(%arg0: i32) -> (i32, i32) {
    %c0_i32 = arith.constant 0 : i32
    %c0_i32_0 = arith.constant 0 : i32
    %c0_i32_1 = arith.constant 0 : i32
    return %c0_i32, %c0_i32_0 : i32, i32
  }
  func.func @transform_13(%arg0: i32) -> (i32, i32) {
    %c0_i32 = arith.constant 0 : i32
    %c0_i32_0 = arith.constant 0 : i32
    %c0_i32_1 = arith.constant 0 : i32
    return %c0_i32, %c0_i32_0 : i32, i32
  }
  func.func @transform_14(%arg0: i32) -> (i32, i32) {
    %c0_i32 = arith.constant 0 : i32
    %c0_i32_0 = arith.constant 0 : i32
    %c0_i32_1 = arith.constant 0 : i32
    return %c0_i32, %c0_i32_0 : i32, i32
  }
  func.func @transform_15(%arg0: i32) -> (i32, i32) {
    %c0_i32 = arith.constant 0 : i32
    %c0_i32_0 = arith.constant 0 : i32
    %c0_i32_1 = arith.constant 0 : i32
    return %c0_i32, %c0_i32_0 : i32, i32
  }
  func.func @transform_16(%arg0: i32) -> (i32, i32) {
    %c0_i32 = arith.constant 0 : i32
    %c0_i32_0 = arith.constant 0 : i32
    %c0_i32_1 = arith.constant 0 : i32
    return %c0_i32, %c0_i32_0 : i32, i32
  }
  func.func @transform_17(%arg0: i32) -> (i32, i32, i32) {
    %c0_i32 = arith.constant 0 : i32
    %c0_i32_0 = arith.constant 0 : i32
    %c0_i32_1 = arith.constant 0 : i32
    return %arg0, %c0_i32, %c0_i32_0 : i32, i32, i32
  }
}

</mosaic_0001>

<llo_original>
// kernel: cnn_forward.1
$region0: #{cnn_forward.1}
  #allocation0 [shape = 'u32[]', space=smem, size = 0x4, offset = 0x4, fixed_abs, tag = 'smem constant byte address 0x4 - core index']
  #allocation1 [shape = 'u32[72,128]{1,0:T(1,128)}', space=vmem, size = 0x9000, scoped, tag = 'internal scratch']
  %s0 = inlined_call_operand.vmem [shape: f32[2,4,104], index: 0, kind: input, shape index: {}]
  %s1 = inlined_call_operand.vmem [shape: f32[16,25], index: 1, kind: input, shape index: {}]
  %s2 = inlined_call_operand.vmem [shape: f32[16,1], index: 2, kind: input, shape index: {}]
  %s3 = inlined_call_operand.vmem [shape: f32[100,54], index: 3, kind: input, shape index: {}]
  %s4 = inlined_call_operand.vmem [shape: f32[32,400], index: 4, kind: input, shape index: {}]
  %s5 = inlined_call_operand.vmem [shape: f32[32,1], index: 5, kind: input, shape index: {}]
  %s6 = inlined_call_operand.vmem [shape: f32[50,25], index: 6, kind: input, shape index: {}]
  %s7 = inlined_call_operand.vmem [shape: f32[32,25,256], index: 7, kind: input, shape index: {}]
  %s8 = inlined_call_operand.vmem [shape: f32[1,256], index: 8, kind: input, shape index: {}]
  %s9 = inlined_call_operand.vmem [shape: f32[1,256], index: 9, kind: input, shape index: {}]
  %s10 = inlined_call_operand.vmem [shape: f32[1,256], index: 10, kind: input, shape index: {}]
  %s11 = inlined_call_operand.vmem [shape: f32[256,128], index: 11, kind: input, shape index: {}]
  %s12 = inlined_call_operand.vmem [shape: f32[1,128], index: 12, kind: input, shape index: {}]
  %s13 = inlined_call_operand.vmem [shape: f32[1,128], index: 13, kind: input, shape index: {}]
  %s14 = inlined_call_operand.vmem [shape: f32[1,128], index: 14, kind: input, shape index: {}]
  %s15 = inlined_call_operand.vmem [shape: f32[128,64], index: 15, kind: input, shape index: {}]
  %s16 = inlined_call_operand.vmem [shape: f32[1,64], index: 16, kind: input, shape index: {}]
  %s17 = inlined_call_operand.hbm [shape: f32[2,1,64], index: 17, kind: output, shape index: {}]
  %s18 = sld [smem:[#allocation0]]
  $region101: #{cnn_forward.1} parent=0
    _
  %s20 = ssub.s32 1, %s18
  %s21 = scalar_select 0, %s20, %s18
  $region1: #{cnn_forward.1} parent=0
    #allocation2 [shape = 'u8[1024]{0}', space=vmem, size = 0x400, scoped, tag = 'output window, operand 0']
    #allocation3 [shape = 's32[2]{0}', space=sflag, size = 0x8, scoped, tag = 'scoped memory for cnn_forward.1']
    %22 = vsyncpa [#allocation3], 0
    %s23 = scalar_lea.sflag [#allocation3], 1
    %24 = vsyncpa %s23, 0
    loop: start=0, step=1, limit=4
    $region2: #{cnn_forward.1} parent=1 // loop_pre_header
      _
    $region3: #{cnn_forward.1} parent=1 // loop_header
      %s26 = sphi 0, %s30
      %p27 = scmp.ge.s32.totalorder %s26, 4
      %s36 = sphi 0, %s38
      %s39 = sphi 0, %s36
      %s40 = sphi 0, %s39
      %s56 = sphi 0, %s40
      %s60 = sphi 0, %s60
      %s62 = sphi 0, %s60
      %s63 = sphi 0, %s62
      %s77 = sphi 0, %s63
      %s81 = sphi 0, %s81
      %s83 = sphi 0, %s81
      %s84 = sphi 0, %s83
      %s98 = sphi 0, %s84
      %s102 = sphi 0, %s102
      %s104 = sphi 0, %s102
      %s105 = sphi 0, %s104
      %s119 = sphi 0, %s105
      %s123 = sphi 0, %s123
      %s125 = sphi 0, %s123
      %s126 = sphi 0, %s125
      %s140 = sphi 0, %s126
      %s144 = sphi 0, %s144
      %s146 = sphi 0, %s144
      %s147 = sphi 0, %s146
      %s161 = sphi 0, %s147
      %s165 = sphi 0, %s165
      %s167 = sphi 0, %s165
      %s168 = sphi 0, %s167
      %s182 = sphi 0, %s168
      %s186 = sphi 0, %s186
      %s188 = sphi 0, %s186
      %s189 = sphi 0, %s188
      %s203 = sphi 0, %s189
      %s207 = sphi 0, %s207
      %s209 = sphi 0, %s207
      %s210 = sphi 0, %s209
      %s224 = sphi 0, %s210
      %s228 = sphi 0, %s228
      %s230 = sphi 0, %s228
      %s231 = sphi 0, %s230
      %s245 = sphi 0, %s231
      %s249 = sphi 0, %s249
      %s251 = sphi 0, %s249
      %s252 = sphi 0, %s251
      %s266 = sphi 0, %s252
      %s270 = sphi 0, %s270
      %s272 = sphi 0, %s270
      %s273 = sphi 0, %s272
      %s287 = sphi 0, %s273
      %s291 = sphi 0, %s291
      %s293 = sphi 0, %s291
      %s294 = sphi 0, %s293
      %s308 = sphi 0, %s294
      %s312 = sphi 0, %s312
      %s314 = sphi 0, %s312
      %s315 = sphi 0, %s314
      %s329 = sphi 0, %s315
      %s333 = sphi 0, %s333
      %s335 = sphi 0, %s333
      %s336 = sphi 0, %s335
      %s350 = sphi 0, %s336
      %s354 = sphi 0, %s354
      %s356 = sphi 0, %s354
      %s357 = sphi 0, %s356
      %s371 = sphi 0, %s357
      %s375 = sphi 0, %s375
      %s377 = sphi 0, %s375
      %s378 = sphi 0, %s377
      %s392 = sphi 0, %s378
      %s398 = sphi 0, %s400
      %s401 = sphi 0, %s398
      %s402 = sphi 0, %s401
      %s418 = sphi 0, %s402
    $region4: #{cnn_forward.1} parent=1 // loop_header_branch
      %29 = sbr.rel (%p27) target = $region8
    $region5: #{cnn_forward.1} parent=1 // loop_body
      %s31 = ssub.s32 %s26, 1
      %s32 = ssub.s32 %s26, 2
      %s33 = sadd.s32 %s26, 1
      %s34 = ssub.s32 %s26, %s33
      %p35 = scmp.eq.s32.totalorder %s34, 0
      %s37 = sadd.s32 %s36, 1
      %s38 = scalar_select %p35, %s36, %s37
      %p41 = pneg %p35
      %p42 = scmp.eq.s32.totalorder %s26, 1
      %p43 = por %p41, %p42
      %p44 = scmp.ne.s32.totalorder %s36, %s39
      %p45 = scmp.eq.s32.totalorder %s26, 0
      %p46 = por %p44, %p45
      %p47 = scmp.ne.s32.totalorder %s36, %s39
      %p48 = scmp.eq.s32.totalorder %s31, 1
      %p49 = por %p47, %p48
      %p50 = scmp.ne.s32.totalorder %s39, %s40
      %p51 = scmp.eq.s32.totalorder %s31, 0
      %p52 = por %p50, %p51
      %p53 = scmp.ne.s32.totalorder %s39, %s40
      %p54 = scmp.eq.s32.totalorder %s32, 1
      %p55 = por %p53, %p54
      %p57 = scmp.ne.s32.totalorder %s40, %s56
      %p58 = scmp.eq.s32.totalorder %s32, 0
      %p59 = por %p57, %p58
      %s61 = sadd.s32 %s60, 1
      %p64 = scmp.eq.s32.totalorder %s26, 1
      %p65 = scmp.ne.s32.totalorder %s60, %s62
      %p66 = scmp.eq.s32.totalorder %s26, 0
      %p67 = por %p65, %p66
      %p68 = scmp.ne.s32.totalorder %s60, %s62
      %p69 = scmp.eq.s32.totalorder %s31, 1
      %p70 = por %p68, %p69
      %p71 = scmp.ne.s32.totalorder %s62, %s63
      %p72 = scmp.eq.s32.totalorder %s31, 0
      %p73 = por %p71, %p72
      %p74 = scmp.ne.s32.totalorder %s62, %s63
      %p75 = scmp.eq.s32.totalorder %s32, 1
      %p76 = por %p74, %p75
      %p78 = scmp.ne.s32.totalorder %s63, %s77
      %p79 = scmp.eq.s32.totalorder %s32, 0
      %p80 = por %p78, %p79
      %s82 = sadd.s32 %s81, 1
      %p85 = scmp.eq.s32.totalorder %s26, 1
      %p86 = scmp.ne.s32.totalorder %s81, %s83
      %p87 = scmp.eq.s32.totalorder %s26, 0
      %p88 = por %p86, %p87
      %p89 = scmp.ne.s32.totalorder %s81, %s83
      %p90 = scmp.eq.s32.totalorder %s31, 1
      %p91 = por %p89, %p90
      %p92 = scmp.ne.s32.totalorder %s83, %s84
      %p93 = scmp.eq.s32.totalorder %s31, 0
      %p94 = por %p92, %p93
      %p95 = scmp.ne.s32.totalorder %s83, %s84
      %p96 = scmp.eq.s32.totalorder %s32, 1
      %p97 = por %p95, %p96
      %p99 = scmp.ne.s32.totalorder %s84, %s98
      %p100 = scmp.eq.s32.totalorder %s32, 0
      %p101 = por %p99, %p100
      %s103 = sadd.s32 %s102, 1
      %p106 = scmp.eq.s32.totalorder %s26, 1
      %p107 = scmp.ne.s32.totalorder %s102, %s104
      %p108 = scmp.eq.s32.totalorder %s26, 0
      %p109 = por %p107, %p108
      %p110 = scmp.ne.s32.totalorder %s102, %s104
      %p111 = scmp.eq.s32.totalorder %s31, 1
      %p112 = por %p110, %p111
      %p113 = scmp.ne.s32.totalorder %s104, %s105
      %p114 = scmp.eq.s32.totalorder %s31, 0
      %p115 = por %p113, %p114
      %p116 = scmp.ne.s32.totalorder %s104, %s105
      %p117 = scmp.eq.s32.totalorder %s32, 1
      %p118 = por %p116, %p117
      %p120 = scmp.ne.s32.totalorder %s105, %s119
      %p121 = scmp.eq.s32.totalorder %s32, 0
      %p122 = por %p120, %p121
      %s124 = sadd.s32 %s123, 1
      %p127 = scmp.eq.s32.totalorder %s26, 1
      %p128 = scmp.ne.s32.totalorder %s123, %s125
      %p129 = scmp.eq.s32.totalorder %s26, 0
      %p130 = por %p128, %p129
      %p131 = scmp.ne.s32.totalorder %s123, %s125
      %p132 = scmp.eq.s32.totalorder %s31, 1
      %p133 = por %p131, %p132
      %p134 = scmp.ne.s32.totalorder %s125, %s126
      %p135 = scmp.eq.s32.totalorder %s31, 0
      %p136 = por %p134, %p135
      %p137 = scmp.ne.s32.totalorder %s125, %s126
      %p138 = scmp.eq.s32.totalorder %s32, 1
      %p139 = por %p137, %p138
      %p141 = scmp.ne.s32.totalorder %s126, %s140
      %p142 = scmp.eq.s32.totalorder %s32, 0
      %p143 = por %p141, %p142
      %s145 = sadd.s32 %s144, 1
      %p148 = scmp.eq.s32.totalorder %s26, 1
      %p149 = scmp.ne.s32.totalorder %s144, %s146
      %p150 = scmp.eq.s32.totalorder %s26, 0
      %p151 = por %p149, %p150
      %p152 = scmp.ne.s32.totalorder %s144, %s146
      %p153 = scmp.eq.s32.totalorder %s31, 1
      %p154 = por %p152, %p153
      %p155 = scmp.ne.s32.totalorder %s146, %s147
      %p156 = scmp.eq.s32.totalorder %s31, 0
      %p157 = por %p155, %p156
      %p158 = scmp.ne.s32.totalorder %s146, %s147
      %p159 = scmp.eq.s32.totalorder %s32, 1
      %p160 = por %p158, %p159
      %p162 = scmp.ne.s32.totalorder %s147, %s161
      %p163 = scmp.eq.s32.totalorder %s32, 0
      %p164 = por %p162, %p163
      %s166 = sadd.s32 %s165, 1
      %p169 = scmp.eq.s32.totalorder %s26, 1
      %p170 = scmp.ne.s32.totalorder %s165, %s167
      %p171 = scmp.eq.s32.totalorder %s26, 0
      %p172 = por %p170, %p171
      %p173 = scmp.ne.s32.totalorder %s165, %s167
      %p174 = scmp.eq.s32.totalorder %s31, 1
      %p175 = por %p173, %p174
      %p176 = scmp.ne.s32.totalorder %s167, %s168
      %p177 = scmp.eq.s32.totalorder %s31, 0
      %p178 = por %p176, %p177
      %p179 = scmp.ne.s32.totalorder %s167, %s168
      %p180 = scmp.eq.s32.totalorder %s32, 1
      %p181 = por %p179, %p180
      %p183 = scmp.ne.s32.totalorder %s168, %s182
      %p184 = scmp.eq.s32.totalorder %s32, 0
      %p185 = por %p183, %p184
      %s187 = sadd.s32 %s186, 1
      %p190 = scmp.eq.s32.totalorder %s26, 1
      %p191 = scmp.ne.s32.totalorder %s186, %s188
      %p192 = scmp.eq.s32.totalorder %s26, 0
      %p193 = por %p191, %p192
      %p194 = scmp.ne.s32.totalorder %s186, %s188
      %p195 = scmp.eq.s32.totalorder %s31, 1
      %p196 = por %p194, %p195
      %p197 = scmp.ne.s32.totalorder %s188, %s189
      %p198 = scmp.eq.s32.totalorder %s31, 0
      %p199 = por %p197, %p198
      %p200 = scmp.ne.s32.totalorder %s188, %s189
      %p201 = scmp.eq.s32.totalorder %s32, 1
      %p202 = por %p200, %p201
      %p204 = scmp.ne.s32.totalorder %s189, %s203
      %p205 = scmp.eq.s32.totalorder %s32, 0
      %p206 = por %p204, %p205
      %s208 = sadd.s32 %s207, 1
      %p211 = scmp.eq.s32.totalorder %s26, 1
      %p212 = scmp.ne.s32.totalorder %s207, %s209
      %p213 = scmp.eq.s32.totalorder %s26, 0
      %p214 = por %p212, %p213
      %p215 = scmp.ne.s32.totalorder %s207, %s209
      %p216 = scmp.eq.s32.totalorder %s31, 1
      %p217 = por %p215, %p216
      %p218 = scmp.ne.s32.totalorder %s209, %s210
      %p219 = scmp.eq.s32.totalorder %s31, 0
      %p220 = por %p218, %p219
      %p221 = scmp.ne.s32.totalorder %s209, %s210
      %p222 = scmp.eq.s32.totalorder %s32, 1
      %p223 = por %p221, %p222
      %p225 = scmp.ne.s32.totalorder %s210, %s224
      %p226 = scmp.eq.s32.totalorder %s32, 0
      %p227 = por %p225, %p226
      %s229 = sadd.s32 %s228, 1
      %p232 = scmp.eq.s32.totalorder %s26, 1
      %p233 = scmp.ne.s32.totalorder %s228, %s230
      %p234 = scmp.eq.s32.totalorder %s26, 0
      %p235 = por %p233, %p234
      %p236 = scmp.ne.s32.totalorder %s228, %s230
      %p237 = scmp.eq.s32.totalorder %s31, 1
      %p238 = por %p236, %p237
      %p239 = scmp.ne.s32.totalorder %s230, %s231
      %p240 = scmp.eq.s32.totalorder %s31, 0
      %p241 = por %p239, %p240
      %p242 = scmp.ne.s32.totalorder %s230, %s231
      %p243 = scmp.eq.s32.totalorder %s32, 1
      %p244 = por %p242, %p243
      %p246 = scmp.ne.s32.totalorder %s231, %s245
      %p247 = scmp.eq.s32.totalorder %s32, 0
      %p248 = por %p246, %p247
      %s250 = sadd.s32 %s249, 1
      %p253 = scmp.eq.s32.totalorder %s26, 1
      %p254 = scmp.ne.s32.totalorder %s249, %s251
      %p255 = scmp.eq.s32.totalorder %s26, 0
      %p256 = por %p254, %p255
      %p257 = scmp.ne.s32.totalorder %s249, %s251
      %p258 = scmp.eq.s32.totalorder %s31, 1
      %p259 = por %p257, %p258
      %p260 = scmp.ne.s32.totalorder %s251, %s252
      %p261 = scmp.eq.s32.totalorder %s31, 0
      %p262 = por %p260, %p261
      %p263 = scmp.ne.s32.totalorder %s251, %s252
      %p264 = scmp.eq.s32.totalorder %s32, 1
      %p265 = por %p263, %p264
      %p267 = scmp.ne.s32.totalorder %s252, %s266
      %p268 = scmp.eq.s32.totalorder %s32, 0
      %p269 = por %p267, %p268
      %s271 = sadd.s32 %s270, 1
      %p274 = scmp.eq.s32.totalorder %s26, 1
      %p275 = scmp.ne.s32.totalorder %s270, %s272
      %p276 = scmp.eq.s32.totalorder %s26, 0
      %p277 = por %p275, %p276
      %p278 = scmp.ne.s32.totalorder %s270, %s272
      %p279 = scmp.eq.s32.totalorder %s31, 1
      %p280 = por %p278, %p279
      %p281 = scmp.ne.s32.totalorder %s272, %s273
      %p282 = scmp.eq.s32.totalorder %s31, 0
      %p283 = por %p281, %p282
      %p284 = scmp.ne.s32.totalorder %s272, %s273
      %p285 = scmp.eq.s32.totalorder %s32, 1
      %p286 = por %p284, %p285
      %p288 = scmp.ne.s32.totalorder %s273, %s287
      %p289 = scmp.eq.s32.totalorder %s32, 0
      %p290 = por %p288, %p289
      %s292 = sadd.s32 %s291, 1
      %p295 = scmp.eq.s32.totalorder %s26, 1
      %p296 = scmp.ne.s32.totalorder %s291, %s293
      %p297 = scmp.eq.s32.totalorder %s26, 0
      %p298 = por %p296, %p297
      %p299 = scmp.ne.s32.totalorder %s291, %s293
      %p300 = scmp.eq.s32.totalorder %s31, 1
      %p301 = por %p299, %p300
      %p302 = scmp.ne.s32.totalorder %s293, %s294
      %p303 = scmp.eq.s32.totalorder %s31, 0
      %p304 = por %p302, %p303
      %p305 = scmp.ne.s32.totalorder %s293, %s294
      %p306 = scmp.eq.s32.totalorder %s32, 1
      %p307 = por %p305, %p306
      %p309 = scmp.ne.s32.totalorder %s294, %s308
      %p310 = scmp.eq.s32.totalorder %s32, 0
      %p311 = por %p309, %p310
      %s313 = sadd.s32 %s312, 1
      %p316 = scmp.eq.s32.totalorder %s26, 1
      %p317 = scmp.ne.s32.totalorder %s312, %s314
      %p318 = scmp.eq.s32.totalorder %s26, 0
      %p319 = por %p317, %p318
      %p320 = scmp.ne.s32.totalorder %s312, %s314
      %p321 = scmp.eq.s32.totalorder %s31, 1
      %p322 = por %p320, %p321
      %p323 = scmp.ne.s32.totalorder %s314, %s315
      %p324 = scmp.eq.s32.totalorder %s31, 0
      %p325 = por %p323, %p324
      %p326 = scmp.ne.s32.totalorder %s314, %s315
      %p327 = scmp.eq.s32.totalorder %s32, 1
      %p328 = por %p326, %p327
      %p330 = scmp.ne.s32.totalorder %s315, %s329
      %p331 = scmp.eq.s32.totalorder %s32, 0
      %p332 = por %p330, %p331
      %s334 = sadd.s32 %s333, 1
      %p337 = scmp.eq.s32.totalorder %s26, 1
      %p338 = scmp.ne.s32.totalorder %s333, %s335
      %p339 = scmp.eq.s32.totalorder %s26, 0
      %p340 = por %p338, %p339
      %p341 = scmp.ne.s32.totalorder %s333, %s335
      %p342 = scmp.eq.s32.totalorder %s31, 1
      %p343 = por %p341, %p342
      %p344 = scmp.ne.s32.totalorder %s335, %s336
      %p345 = scmp.eq.s32.totalorder %s31, 0
      %p346 = por %p344, %p345
      %p347 = scmp.ne.s32.totalorder %s335, %s336
      %p348 = scmp.eq.s32.totalorder %s32, 1
      %p349 = por %p347, %p348
      %p351 = scmp.ne.s32.totalorder %s336, %s350
      %p352 = scmp.eq.s32.totalorder %s32, 0
      %p353 = por %p351, %p352
      %s355 = sadd.s32 %s354, 1
      %p358 = scmp.eq.s32.totalorder %s26, 1
      %p359 = scmp.ne.s32.totalorder %s354, %s356
      %p360 = scmp.eq.s32.totalorder %s26, 0
      %p361 = por %p359, %p360
      %p362 = scmp.ne.s32.totalorder %s354, %s356
      %p363 = scmp.eq.s32.totalorder %s31, 1
      %p364 = por %p362, %p363
      %p365 = scmp.ne.s32.totalorder %s356, %s357
      %p366 = scmp.eq.s32.totalorder %s31, 0
      %p367 = por %p365, %p366
      %p368 = scmp.ne.s32.totalorder %s356, %s357
      %p369 = scmp.eq.s32.totalorder %s32, 1
      %p370 = por %p368, %p369
      %p372 = scmp.ne.s32.totalorder %s357, %s371
      %p373 = scmp.eq.s32.totalorder %s32, 0
      %p374 = por %p372, %p373
      %s376 = sadd.s32 %s375, 1
      %p379 = scmp.eq.s32.totalorder %s26, 1
      %p380 = scmp.ne.s32.totalorder %s375, %s377
      %p381 = scmp.eq.s32.totalorder %s26, 0
      %p382 = por %p380, %p381
      %p383 = scmp.ne.s32.totalorder %s375, %s377
      %p384 = scmp.eq.s32.totalorder %s31, 1
      %p385 = por %p383, %p384
      %p386 = scmp.ne.s32.totalorder %s377, %s378
      %p387 = scmp.eq.s32.totalorder %s31, 0
      %p388 = por %p386, %p387
      %p389 = scmp.ne.s32.totalorder %s377, %s378
      %p390 = scmp.eq.s32.totalorder %s32, 1
      %p391 = por %p389, %p390
      %p393 = scmp.ne.s32.totalorder %s378, %s392
      %p394 = scmp.eq.s32.totalorder %s32, 0
      %p395 = por %p393, %p394
      %s396 = ssub.s32 %s26, %s33
      %p397 = scmp.eq.s32.totalorder %s396, 0
      %s399 = sadd.s32 %s398, 1
      %s400 = scalar_select %p397, %s398, %s399
      %p403 = pneg %p397
      %p404 = scmp.eq.s32.totalorder %s26, 1
      %p405 = por %p403, %p404
      %p406 = scmp.ne.s32.totalorder %s398, %s401
      %p407 = scmp.eq.s32.totalorder %s26, 0
      %p408 = por %p406, %p407
      %p409 = scmp.ne.s32.totalorder %s398, %s401
      %p410 = scmp.eq.s32.totalorder %s31, 1
      %p411 = por %p409, %p410
      %p412 = scmp.ne.s32.totalorder %s401, %s402
      %p413 = scmp.eq.s32.totalorder %s31, 0
      %p414 = por %p412, %p413
      %p415 = scmp.ne.s32.totalorder %s401, %s402
      %p416 = scmp.eq.s32.totalorder %s32, 1
      %p417 = por %p415, %p416
      %p419 = scmp.ne.s32.totalorder %s402, %s418
      %p420 = scmp.eq.s32.totalorder %s32, 0
      %p421 = por %p419, %p420
      %p422 = scmp.le.s32.totalorder 1, %s26
      %p423 = scmp.lt.s32.totalorder %s26, 3
      %p424 = pnand %p422, %p423
      %p425 = pneg %p424
      // Predicated region
      $region9: #{cnn_forward.1} parent=5 // pred_check
        _
      $region10: #{cnn_forward.1} parent=5 // pred_check_branch
        %427 = sbr.rel (%p424) target = $region12
      $region11: #{cnn_forward.1} parent=5 // pred_region
        %s428 = ssub.s32 %s26, 1
        // Predicated region
        $region13: #{cnn_forward.1} parent=11 // pred_check
          %p429 = pneg %p73
        $region14: #{cnn_forward.1} parent=11 // pred_check_branch
          %431 = sbr.rel (%p429) target = $region16
        $region15: #{cnn_forward.1} parent=11 // pred_region
          _
        $region16: #{cnn_forward.1} parent=11 // pred_fallthru
          _
        // Predicated region
        $region17: #{cnn_forward.1} parent=11 // pred_check
          %p432 = pneg %p94
        $region18: #{cnn_forward.1} parent=11 // pred_check_branch
          %434 = sbr.rel (%p432) target = $region20
        $region19: #{cnn_forward.1} parent=11 // pred_region
          _
        $region20: #{cnn_forward.1} parent=11 // pred_fallthru
          _
        // Predicated region
        $region21: #{cnn_forward.1} parent=11 // pred_check
          %p435 = pneg %p115
        $region22: #{cnn_forward.1} parent=11 // pred_check_branch
          %437 = sbr.rel (%p435) target = $region24
        $region23: #{cnn_forward.1} parent=11 // pred_region
          _
        $region24: #{cnn_forward.1} parent=11 // pred_fallthru
          _
        // Predicated region
        $region25: #{cnn_forward.1} parent=11 // pred_check
          %p438 = pneg %p136
        $region26: #{cnn_forward.1} parent=11 // pred_check_branch
          %440 = sbr.rel (%p438) target = $region28
        $region27: #{cnn_forward.1} parent=11 // pred_region
          _
        $region28: #{cnn_forward.1} parent=11 // pred_fallthru
          _
        // Predicated region
        $region29: #{cnn_forward.1} parent=11 // pred_check
          %p441 = pneg %p157
        $region30: #{cnn_forward.1} parent=11 // pred_check_branch
          %443 = sbr.rel (%p441) target = $region32
        $region31: #{cnn_forward.1} parent=11 // pred_region
          _
        $region32: #{cnn_forward.1} parent=11 // pred_fallthru
          _
        // Predicated region
        $region33: #{cnn_forward.1} parent=11 // pred_check
          %p444 = pneg %p178
        $region34: #{cnn_forward.1} parent=11 // pred_check_branch
          %446 = sbr.rel (%p444) target = $region36
        $region35: #{cnn_forward.1} parent=11 // pred_region
          _
        $region36: #{cnn_forward.1} parent=11 // pred_fallthru
          _
        // Predicated region
        $region37: #{cnn_forward.1} parent=11 // pred_check
          %p447 = pneg %p199
        $region38: #{cnn_forward.1} parent=11 // pred_check_branch
          %449 = sbr.rel (%p447) target = $region40
        $region39: #{cnn_forward.1} parent=11 // pred_region
          _
        $region40: #{cnn_forward.1} parent=11 // pred_fallthru
          _
        // Predicated region
        $region41: #{cnn_forward.1} parent=11 // pred_check
          %p450 = pneg %p220
        $region42: #{cnn_forward.1} parent=11 // pred_check_branch
          %452 = sbr.rel (%p450) target = $region44
        $region43: #{cnn_forward.1} parent=11 // pred_region
          _
        $region44: #{cnn_forward.1} parent=11 // pred_fallthru
          _
        // Predicated region
        $region45: #{cnn_forward.1} parent=11 // pred_check
          %p453 = pneg %p241
        $region46: #{cnn_forward.1} parent=11 // pred_check_branch
          %455 = sbr.rel (%p453) target = $region48
        $region47: #{cnn_forward.1} parent=11 // pred_region
          _
        $region48: #{cnn_forward.1} parent=11 // pred_fallthru
          _
        // Predicated region
        $region49: #{cnn_forward.1} parent=11 // pred_check
          %p456 = pneg %p262
        $region50: #{cnn_forward.1} parent=11 // pred_check_branch
          %458 = sbr.rel (%p456) target = $region52
        $region51: #{cnn_forward.1} parent=11 // pred_region
          _
        $region52: #{cnn_forward.1} parent=11 // pred_fallthru
          _
        // Predicated region
        $region53: #{cnn_forward.1} parent=11 // pred_check
          %p459 = pneg %p283
        $region54: #{cnn_forward.1} parent=11 // pred_check_branch
          %461 = sbr.rel (%p459) target = $region56
        $region55: #{cnn_forward.1} parent=11 // pred_region
          _
        $region56: #{cnn_forward.1} parent=11 // pred_fallthru
          _
        // Predicated region
        $region57: #{cnn_forward.1} parent=11 // pred_check
          %p462 = pneg %p304
        $region58: #{cnn_forward.1} parent=11 // pred_check_branch
          %464 = sbr.rel (%p462) target = $region60
        $region59: #{cnn_forward.1} parent=11 // pred_region
          _
        $region60: #{cnn_forward.1} parent=11 // pred_fallthru
          _
        // Predicated region
        $region61: #{cnn_forward.1} parent=11 // pred_check
          %p465 = pneg %p325
        $region62: #{cnn_forward.1} parent=11 // pred_check_branch
          %467 = sbr.rel (%p465) target = $region64
        $region63: #{cnn_forward.1} parent=11 // pred_region
          _
        $region64: #{cnn_forward.1} parent=11 // pred_fallthru
          _
        // Predicated region
        $region65: #{cnn_forward.1} parent=11 // pred_check
          %p468 = pneg %p346
        $region66: #{cnn_forward.1} parent=11 // pred_check_branch
          %470 = sbr.rel (%p468) target = $region68
        $region67: #{cnn_forward.1} parent=11 // pred_region
          _
        $region68: #{cnn_forward.1} parent=11 // pred_fallthru
          _
        // Predicated region
        $region69: #{cnn_forward.1} parent=11 // pred_check
          %p471 = pneg %p367
        $region70: #{cnn_forward.1} parent=11 // pred_check_branch
          %473 = sbr.rel (%p471) target = $region72
        $region71: #{cnn_forward.1} parent=11 // pred_region
          _
        $region72: #{cnn_forward.1} parent=11 // pred_fallthru
          _
        // Predicated region
        $region73: #{cnn_forward.1} parent=11 // pred_check
          %p474 = pneg %p388
        $region74: #{cnn_forward.1} parent=11 // pred_check_branch
          %476 = sbr.rel (%p474) target = $region76
        $region75: #{cnn_forward.1} parent=11 // pred_region
          _
        $region76: #{cnn_forward.1} parent=11 // pred_fallthru
          _
      $region12: #{cnn_forward.1} parent=5 // pred_fallthru
        _
      %p477 = scmp.lt.s32.totalorder %s26, 2
      // Predicated region
      $region77: #{cnn_forward.1} parent=5 // pred_check
        %p478 = pneg %p477
      $region78: #{cnn_forward.1} parent=5 // pred_check_branch
        %480 = sbr.rel (%p478) target = $region80
      $region79: #{cnn_forward.1} parent=5 // pred_region
        // Predicated region
        $region81: #{cnn_forward.1} parent=79 // pred_check
          %p481 = pneg %p46
        $region82: #{cnn_forward.1} parent=79 // pred_check_branch
          %483 = sbr.rel (%p481) target = $region84
        $region83: #{cnn_forward.1} parent=79 // pred_region
          %p484 = scmp.lt.s32.totalorder %s26, 1
          %s485 = scalar_select %p484, %s26, 1
          %s486 = smul.addr %s485, 4
          %s487 = scalar_lea.vmem %s0, %s486
        $region84: #{cnn_forward.1} parent=79 // pred_fallthru
          _
      $region80: #{cnn_forward.1} parent=5 // pred_fallthru
        _
      %p488 = scmp.le.s32.totalorder 1, %s26
      %p489 = scmp.lt.s32.totalorder %s26, 3
      %p490 = pnand %p488, %p489
      %p491 = pneg %p490
      // Predicated region
      $region85: #{cnn_forward.1} parent=5 // pred_check
        _
      $region86: #{cnn_forward.1} parent=5 // pred_check_branch
        %493 = sbr.rel (%p490) target = $region88
      $region87: #{cnn_forward.1} parent=5 // pred_region
        %s494 = ssub.s32 %s26, 1
        %p495 = scmp.lt.s32.totalorder %s31, 1
        %s496 = scalar_select %p495, %s31, 1
        %s497 = smul.addr %s496, 4
        %s498 = scalar_lea.vmem %s0, %s497
        %p499 = pneg %p52
        %p500 = pneg %p49
        %p501 = pneg %p73
        %p502 = pneg %p70
        %p503 = pneg %p94
        %p504 = pneg %p91
        %p505 = pneg %p115
        %p506 = pneg %p112
        %p507 = pneg %p136
        %p508 = pneg %p133
        %p509 = pneg %p157
        %p510 = pneg %p154
        %p511 = pneg %p178
        %p512 = pneg %p175
        %p513 = pneg %p199
        %p514 = pneg %p196
        %p515 = pneg %p220
        %p516 = pneg %p217
        %p517 = pneg %p241
        %p518 = pneg %p238
        %p519 = pneg %p262
        %p520 = pneg %p259
        %p521 = pneg %p283
        %p522 = pneg %p280
        %p523 = pneg %p304
        %p524 = pneg %p301
        %p525 = pneg %p325
        %p526 = pneg %p322
        %p527 = pneg %p346
        %p528 = pneg %p343
        %p529 = pneg %p367
        %p530 = pneg %p364
        %p531 = pneg %p388
        %p532 = pneg %p385
        %p533 = pneg %p414
        %p534 = pneg %p411
        %s535 = sand.u32 %s401, 1
        %s536 = scalar_lea.sflag [#allocation3], %s535
        %s537 = sand.u32 %s401, 1
        %s538 = scalar_lea.vmem [#allocation2], %s537
        %p539 = scmp.lt.s32.totalorder %s31, 1
        %s540 = scalar_select %p539, %s31, 1
        %s541 = smul.addr %s540, 4
        %s542 = scalar_lea.vmem %s0, %s541
        %v543 = vld [vmem:[%s542] sm:$0xf]
        %v544 = vld [vmem:[%s1] sm:$0xff]
        %v545 = vld [vmem:[%s1 + $0x8] sm:$0xff]
        %v546 = vld [vmem:[%s2] sm:$0xff]
        %v547 = vld [vmem:[%s2 + $0x8] sm:$0xff]
        %v548 = vld [vmem:[%s3] sm:$0xff]
        %v549 = vld [vmem:[%s3 + $0x8] sm:$0xff]
        %v550 = vld [vmem:[%s3 + $0x10] sm:$0xff]
        %v551 = vld [vmem:[%s3 + $0x18] sm:$0xff]
        %v552 = vld [vmem:[%s3 + $0x20] sm:$0xff]
        %v553 = vld [vmem:[%s3 + $0x28] sm:$0xff]
        %v554 = vld [vmem:[%s3 + $0x30] sm:$0xff]
        %v555 = vld [vmem:[%s3 + $0x38] sm:$0xff]
        %v556 = vld [vmem:[%s3 + $0x40] sm:$0xff]
        %v557 = vld [vmem:[%s3 + $0x48] sm:$0xff]
        %v558 = vld [vmem:[%s3 + $0x50] sm:$0xff]
        %v559 = vld [vmem:[%s3 + $0x58] sm:$0xff]
        %v560 = vld [vmem:[%s3 + $0x60] sm:$0xf]
        %v561 = vld [vmem:[%s4] sm:$0xff]
        %v562 = vld [vmem:[%s4 + $0x8] sm:$0xff]
        %v563 = vld [vmem:[%s4 + $0x10] sm:$0xff]
        %v564 = vld [vmem:[%s4 + $0x20] sm:$0xff]
        %v565 = vld [vmem:[%s4 + $0x28] sm:$0xff]
        %v566 = vld [vmem:[%s4 + $0x30] sm:$0xff]
        %v567 = vld [vmem:[%s4 + $0x40] sm:$0xff]
        %v568 = vld [vmem:[%s4 + $0x48] sm:$0xff]
        %v569 = vld [vmem:[%s4 + $0x50] sm:$0xff]
        %v570 = vld [vmem:[%s4 + $0x60] sm:$0xff]
        %v571 = vld [vmem:[%s4 + $0x68] sm:$0xff]
        %v572 = vld [vmem:[%s4 + $0x70] sm:$0xff]
        %v573 = vld [vmem:[%s5] sm:$0xff]
        %v574 = vld [vmem:[%s5 + $0x8] sm:$0xff]
        %v575 = vld [vmem:[%s5 + $0x10] sm:$0xff]
        %v576 = vld [vmem:[%s5 + $0x18] sm:$0xff]
        %v577 = vld [vmem:[%s6] sm:$0xff]
        %v578 = vld [vmem:[%s6 + $0x8] sm:$0xff]
        %v579 = vld [vmem:[%s6 + $0x10] sm:$0xff]
        %v580 = vld [vmem:[%s6 + $0x18] sm:$0xff]
        %v581 = vld [vmem:[%s6 + $0x20] sm:$0xff]
        %v582 = vld [vmem:[%s6 + $0x28] sm:$0xff]
        %v583 = vld [vmem:[%s6 + $0x30] sm:$0x3]
        %585 = vset.pattern.permute.xlu0 0
        %586 = vperm.xlu0 %585, %v546
        %v587 = vpop.permute.xlu0 %586
        %590 = vset.pattern.permute.xlu0 0
        %591 = vperm.xlu0 %590, %v547
        %v592 = vpop.permute.xlu0 %591
        %595 = vset.pattern.permute.xlu0 10
        %596 = vperm.xlu0 %595, %v544
        %v597 = vpop.permute.xlu0 %596
        %600 = vset.pattern.permute.xlu0 10
        %601 = vperm.xlu0 %600, %v545
        %v602 = vpop.permute.xlu0 %601
        %v604 = vperm.slane %v543, 0
        %v605 = vmul.f32 %v597, %v604
        %v606 = vmul.f32 %v602, %v604
        %v607 = vadd.f32 %v587, %v605
        %v608 = vadd.f32 %v592, %v606
        %609 = vset.pattern.permute.xlu0 11
        %610 = vperm.xlu0 %609, %v544
        %v611 = vpop.permute.xlu0 %610
        %613 = vset.pattern.permute.xlu0 11
        %614 = vperm.xlu0 %613, %v545
        %v615 = vpop.permute.xlu0 %614
        %v617 = vmul.f32 %v611, %v604
        %v618 = vmul.f32 %v615, %v604
        %621 = vrot.lane.b32.xlu0 %v617, 127
        %v622 = vpop.permute.xlu0 %621
        %623 = vrot.lane.b32.xlu0 %v618, 127
        %v624 = vpop.permute.xlu0 %623
        %v627 = vadd.f32 %v607, %v622
        %v628 = vadd.f32 %v608, %v624
        %629 = vset.pattern.permute.xlu0 12
        %630 = vperm.xlu0 %629, %v544
        %v631 = vpop.permute.xlu0 %630
        %633 = vset.pattern.permute.xlu0 12
        %634 = vperm.xlu0 %633, %v545
        %v635 = vpop.permute.xlu0 %634
        %v637 = vmul.f32 %v631, %v604
        %v638 = vmul.f32 %v635, %v604
        %641 = vrot.lane.b32.xlu0 %v637, 126
        %v642 = vpop.permute.xlu0 %641
        %643 = vrot.lane.b32.xlu0 %v638, 126
        %v644 = vpop.permute.xlu0 %643
        %v647 = vadd.f32 %v627, %v642
        %v648 = vadd.f32 %v628, %v644
        %649 = vset.pattern.permute.xlu0 13
        %650 = vperm.xlu0 %649, %v544
        %v651 = vpop.permute.xlu0 %650
        %653 = vset.pattern.permute.xlu0 13
        %654 = vperm.xlu0 %653, %v545
        %v655 = vpop.permute.xlu0 %654
        %v657 = vmul.f32 %v651, %v604
        %v658 = vmul.f32 %v655, %v604
        %661 = vrot.lane.b32.xlu0 %v657, 125
        %v662 = vpop.permute.xlu0 %661
        %663 = vrot.lane.b32.xlu0 %v658, 125
        %v664 = vpop.permute.xlu0 %663
        %v667 = vadd.f32 %v647, %v662
        %v668 = vadd.f32 %v648, %v664
        %669 = vset.pattern.permute.xlu0 14
        %670 = vperm.xlu0 %669, %v544
        %v671 = vpop.permute.xlu0 %670
        %673 = vset.pattern.permute.xlu0 14
        %674 = vperm.xlu0 %673, %v545
        %v675 = vpop.permute.xlu0 %674
        %v677 = vmul.f32 %v671, %v604
        %v678 = vmul.f32 %v675, %v604
        %681 = vrot.lane.b32.xlu0 %v677, 124
        %v682 = vpop.permute.xlu0 %681
        %683 = vrot.lane.b32.xlu0 %v678, 124
        %v684 = vpop.permute.xlu0 %683
        %v687 = vadd.f32 %v667, %v682
        %v688 = vadd.f32 %v668, %v684
        %689 = vset.pattern.permute.xlu0 15
        %690 = vperm.xlu0 %689, %v544
        %v691 = vpop.permute.xlu0 %690
        %693 = vset.pattern.permute.xlu0 15
        %694 = vperm.xlu0 %693, %v545
        %v695 = vpop.permute.xlu0 %694
        %v697 = vperm.slane %v543, 1
        %v698 = vmul.f32 %v691, %v697
        %v699 = vmul.f32 %v695, %v697
        %v700 = vadd.f32 %v687, %v698
        %v701 = vadd.f32 %v688, %v699
        %702 = vset.pattern.permute.xlu0 16
        %703 = vperm.xlu0 %702, %v544
        %v704 = vpop.permute.xlu0 %703
        %706 = vset.pattern.permute.xlu0 16
        %707 = vperm.xlu0 %706, %v545
        %v708 = vpop.permute.xlu0 %707
        %v710 = vmul.f32 %v704, %v697
        %v711 = vmul.f32 %v708, %v697
        %714 = vrot.lane.b32.xlu0 %v710, 127
        %v715 = vpop.permute.xlu0 %714
        %716 = vrot.lane.b32.xlu0 %v711, 127
        %v717 = vpop.permute.xlu0 %716
        %v720 = vadd.f32 %v700, %v715
        %v721 = vadd.f32 %v701, %v717
        %722 = vset.pattern.permute.xlu0 17
        %723 = vperm.xlu0 %722, %v544
        %v724 = vpop.permute.xlu0 %723
        %726 = vset.pattern.permute.xlu0 17
        %727 = vperm.xlu0 %726, %v545
        %v728 = vpop.permute.xlu0 %727
        %v730 = vmul.f32 %v724, %v697
        %v731 = vmul.f32 %v728, %v697
        %734 = vrot.lane.b32.xlu0 %v730, 126
        %v735 = vpop.permute.xlu0 %734
        %736 = vrot.lane.b32.xlu0 %v731, 126
        %v737 = vpop.permute.xlu0 %736
        %v740 = vadd.f32 %v720, %v735
        %v741 = vadd.f32 %v721, %v737
        %742 = vset.pattern.permute.xlu0 18
        %743 = vperm.xlu0 %742, %v544
        %v744 = vpop.permute.xlu0 %743
        %746 = vset.pattern.permute.xlu0 18
        %747 = vperm.xlu0 %746, %v545
        %v748 = vpop.permute.xlu0 %747
        %v750 = vmul.f32 %v744, %v697
        %v751 = vmul.f32 %v748, %v697
        %754 = vrot.lane.b32.xlu0 %v750, 125
        %v755 = vpop.permute.xlu0 %754
        %756 = vrot.lane.b32.xlu0 %v751, 125
        %v757 = vpop.permute.xlu0 %756
        %v760 = vadd.f32 %v740, %v755
        %v761 = vadd.f32 %v741, %v757
        %762 = vset.pattern.permute.xlu0 19
        %763 = vperm.xlu0 %762, %v544
        %v764 = vpop.permute.xlu0 %763
        %766 = vset.pattern.permute.xlu0 19
        %767 = vperm.xlu0 %766, %v545
        %v768 = vpop.permute.xlu0 %767
        %v770 = vmul.f32 %v764, %v697
        %v771 = vmul.f32 %v768, %v697
        %774 = vrot.lane.b32.xlu0 %v770, 124
        %v775 = vpop.permute.xlu0 %774
        %776 = vrot.lane.b32.xlu0 %v771, 124
        %v777 = vpop.permute.xlu0 %776
        %v780 = vadd.f32 %v760, %v775
        %v781 = vadd.f32 %v761, %v777
        %782 = vset.pattern.permute.xlu0 20
        %783 = vperm.xlu0 %782, %v544
        %v784 = vpop.permute.xlu0 %783
        %786 = vset.pattern.permute.xlu0 20
        %787 = vperm.xlu0 %786, %v545
        %v788 = vpop.permute.xlu0 %787
        %v790 = vperm.slane %v543, 2
        %v791 = vmul.f32 %v784, %v790
        %v792 = vmul.f32 %v788, %v790
        %v793 = vadd.f32 %v780, %v791
        %v794 = vadd.f32 %v781, %v792
        %795 = vset.pattern.permute.xlu0 21
        %796 = vperm.xlu0 %795, %v544
        %v797 = vpop.permute.xlu0 %796
        %799 = vset.pattern.permute.xlu0 21
        %800 = vperm.xlu0 %799, %v545
        %v801 = vpop.permute.xlu0 %800
        %v803 = vmul.f32 %v797, %v790
        %v804 = vmul.f32 %v801, %v790
        %807 = vrot.lane.b32.xlu0 %v803, 127
        %v808 = vpop.permute.xlu0 %807
        %809 = vrot.lane.b32.xlu0 %v804, 127
        %v810 = vpop.permute.xlu0 %809
        %v813 = vadd.f32 %v793, %v808
        %v814 = vadd.f32 %v794, %v810
        %815 = vset.pattern.permute.xlu0 22
        %816 = vperm.xlu0 %815, %v544
        %v817 = vpop.permute.xlu0 %816
        %819 = vset.pattern.permute.xlu0 22
        %820 = vperm.xlu0 %819, %v545
        %v821 = vpop.permute.xlu0 %820
        %v823 = vmul.f32 %v817, %v790
        %v824 = vmul.f32 %v821, %v790
        %827 = vrot.lane.b32.xlu0 %v823, 126
        %v828 = vpop.permute.xlu0 %827
        %829 = vrot.lane.b32.xlu0 %v824, 126
        %v830 = vpop.permute.xlu0 %829
        %v833 = vadd.f32 %v813, %v828
        %v834 = vadd.f32 %v814, %v830
        %835 = vset.pattern.permute.xlu0 23
        %836 = vperm.xlu0 %835, %v544
        %v837 = vpop.permute.xlu0 %836
        %839 = vset.pattern.permute.xlu0 23
        %840 = vperm.xlu0 %839, %v545
        %v841 = vpop.permute.xlu0 %840
        %v843 = vmul.f32 %v837, %v790
        %v844 = vmul.f32 %v841, %v790
        %847 = vrot.lane.b32.xlu0 %v843, 125
        %v848 = vpop.permute.xlu0 %847
        %849 = vrot.lane.b32.xlu0 %v844, 125
        %v850 = vpop.permute.xlu0 %849
        %v853 = vadd.f32 %v833, %v848
        %v854 = vadd.f32 %v834, %v850
        %855 = vset.pattern.permute.xlu0 24
        %856 = vperm.xlu0 %855, %v544
        %v857 = vpop.permute.xlu0 %856
        %859 = vset.pattern.permute.xlu0 24
        %860 = vperm.xlu0 %859, %v545
        %v861 = vpop.permute.xlu0 %860
        %v863 = vmul.f32 %v857, %v790
        %v864 = vmul.f32 %v861, %v790
        %867 = vrot.lane.b32.xlu0 %v863, 124
        %v868 = vpop.permute.xlu0 %867
        %869 = vrot.lane.b32.xlu0 %v864, 124
        %v870 = vpop.permute.xlu0 %869
        %v873 = vadd.f32 %v853, %v868
        %v874 = vadd.f32 %v854, %v870
        %v875 = vmax.f32 %v873, 0.0
        %v876 = vmax.f32 %v874, 0.0
        %877 = vset.pattern.permute.xlu0 5
        %878 = vperm.xlu0 %877, %v544
        %v879 = vpop.permute.xlu0 %878
        %881 = vset.pattern.permute.xlu0 5
        %882 = vperm.xlu0 %881, %v545
        %v883 = vpop.permute.xlu0 %882
        %v885 = vmul.f32 %v879, %v604
        %v886 = vmul.f32 %v883, %v604
        %v887 = vadd.f32 %v587, %v885
        %v888 = vadd.f32 %v592, %v886
        %889 = vset.pattern.permute.xlu0 6
        %890 = vperm.xlu0 %889, %v544
        %v891 = vpop.permute.xlu0 %890
        %893 = vset.pattern.permute.xlu0 6
        %894 = vperm.xlu0 %893, %v545
        %v895 = vpop.permute.xlu0 %894
        %v897 = vmul.f32 %v891, %v604
        %v898 = vmul.f32 %v895, %v604
        %901 = vrot.lane.b32.xlu0 %v897, 127
        %v902 = vpop.permute.xlu0 %901
        %903 = vrot.lane.b32.xlu0 %v898, 127
        %v904 = vpop.permute.xlu0 %903
        %v907 = vadd.f32 %v887, %v902
        %v908 = vadd.f32 %v888, %v904
        %909 = vset.pattern.permute.xlu0 7
        %910 = vperm.xlu0 %909, %v544
        %v911 = vpop.permute.xlu0 %910
        %913 = vset.pattern.permute.xlu0 7
        %914 = vperm.xlu0 %913, %v545
        %v915 = vpop.permute.xlu0 %914
        %v917 = vmul.f32 %v911, %v604
        %v918 = vmul.f32 %v915, %v604
        %921 = vrot.lane.b32.xlu0 %v917, 126
        %v922 = vpop.permute.xlu0 %921
        %923 = vrot.lane.b32.xlu0 %v918, 126
        %v924 = vpop.permute.xlu0 %923
        %v927 = vadd.f32 %v907, %v922
        %v928 = vadd.f32 %v908, %v924
        %929 = vset.pattern.permute.xlu0 8
        %930 = vperm.xlu0 %929, %v544
        %v931 = vpop.permute.xlu0 %930
        %933 = vset.pattern.permute.xlu0 8
        %934 = vperm.xlu0 %933, %v545
        %v935 = vpop.permute.xlu0 %934
        %v937 = vmul.f32 %v931, %v604
        %v938 = vmul.f32 %v935, %v604
        %941 = vrot.lane.b32.xlu0 %v937, 125
        %v942 = vpop.permute.xlu0 %941
        %943 = vrot.lane.b32.xlu0 %v938, 125
        %v944 = vpop.permute.xlu0 %943
        %v947 = vadd.f32 %v927, %v942
        %v948 = vadd.f32 %v928, %v944
        %949 = vset.pattern.permute.xlu0 9
        %950 = vperm.xlu0 %949, %v544
        %v951 = vpop.permute.xlu0 %950
        %953 = vset.pattern.permute.xlu0 9
        %954 = vperm.xlu0 %953, %v545
        %v955 = vpop.permute.xlu0 %954
        %v957 = vmul.f32 %v951, %v604
        %v958 = vmul.f32 %v955, %v604
        %961 = vrot.lane.b32.xlu0 %v957, 124
        %v962 = vpop.permute.xlu0 %961
        %963 = vrot.lane.b32.xlu0 %v958, 124
        %v964 = vpop.permute.xlu0 %963
        %v967 = vadd.f32 %v947, %v962
        %v968 = vadd.f32 %v948, %v964
        %v969 = vmul.f32 %v597, %v697
        %v970 = vmul.f32 %v602, %v697
        %v971 = vadd.f32 %v967, %v969
        %v972 = vadd.f32 %v968, %v970
        %v973 = vmul.f32 %v611, %v697
        %v974 = vmul.f32 %v615, %v697
        %977 = vrot.lane.b32.xlu0 %v973, 127
        %v978 = vpop.permute.xlu0 %977
        %979 = vrot.lane.b32.xlu0 %v974, 127
        %v980 = vpop.permute.xlu0 %979
        %v983 = vadd.f32 %v971, %v978
        %v984 = vadd.f32 %v972, %v980
        %v985 = vmul.f32 %v631, %v697
        %v986 = vmul.f32 %v635, %v697
        %989 = vrot.lane.b32.xlu0 %v985, 126
        %v990 = vpop.permute.xlu0 %989
        %991 = vrot.lane.b32.xlu0 %v986, 126
        %v992 = vpop.permute.xlu0 %991
        %v995 = vadd.f32 %v983, %v990
        %v996 = vadd.f32 %v984, %v992
        %v997 = vmul.f32 %v651, %v697
        %v998 = vmul.f32 %v655, %v697
        %1001 = vrot.lane.b32.xlu0 %v997, 125
        %v1002 = vpop.permute.xlu0 %1001
        %1003 = vrot.lane.b32.xlu0 %v998, 125
        %v1004 = vpop.permute.xlu0 %1003
        %v1007 = vadd.f32 %v995, %v1002
        %v1008 = vadd.f32 %v996, %v1004
        %v1009 = vmul.f32 %v671, %v697
        %v1010 = vmul.f32 %v675, %v697
        %1013 = vrot.lane.b32.xlu0 %v1009, 124
        %v1014 = vpop.permute.xlu0 %1013
        %1015 = vrot.lane.b32.xlu0 %v1010, 124
        %v1016 = vpop.permute.xlu0 %1015
        %v1019 = vadd.f32 %v1007, %v1014
        %v1020 = vadd.f32 %v1008, %v1016
        %v1021 = vmul.f32 %v691, %v790
        %v1022 = vmul.f32 %v695, %v790
        %v1023 = vadd.f32 %v1019, %v1021
        %v1024 = vadd.f32 %v1020, %v1022
        %v1025 = vmul.f32 %v704, %v790
        %v1026 = vmul.f32 %v708, %v790
        %1029 = vrot.lane.b32.xlu0 %v1025, 127
        %v1030 = vpop.permute.xlu0 %1029
        %1031 = vrot.lane.b32.xlu0 %v1026, 127
        %v1032 = vpop.permute.xlu0 %1031
        %v1035 = vadd.f32 %v1023, %v1030
        %v1036 = vadd.f32 %v1024, %v1032
        %v1037 = vmul.f32 %v724, %v790
        %v1038 = vmul.f32 %v728, %v790
        %1041 = vrot.lane.b32.xlu0 %v1037, 126
        %v1042 = vpop.permute.xlu0 %1041
        %1043 = vrot.lane.b32.xlu0 %v1038, 126
        %v1044 = vpop.permute.xlu0 %1043
        %v1047 = vadd.f32 %v1035, %v1042
        %v1048 = vadd.f32 %v1036, %v1044
        %v1049 = vmul.f32 %v744, %v790
        %v1050 = vmul.f32 %v748, %v790
        %1053 = vrot.lane.b32.xlu0 %v1049, 125
        %v1054 = vpop.permute.xlu0 %1053
        %1055 = vrot.lane.b32.xlu0 %v1050, 125
        %v1056 = vpop.permute.xlu0 %1055
        %v1059 = vadd.f32 %v1047, %v1054
        %v1060 = vadd.f32 %v1048, %v1056
        %v1061 = vmul.f32 %v764, %v790
        %v1062 = vmul.f32 %v768, %v790
        %1065 = vrot.lane.b32.xlu0 %v1061, 124
        %v1066 = vpop.permute.xlu0 %1065
        %1067 = vrot.lane.b32.xlu0 %v1062, 124
        %v1068 = vpop.permute.xlu0 %1067
        %v1071 = vadd.f32 %v1059, %v1066
        %v1072 = vadd.f32 %v1060, %v1068
        %v1073 = vperm.slane %v543, 3
        %v1074 = vmul.f32 %v784, %v1073
        %v1075 = vmul.f32 %v788, %v1073
        %v1076 = vadd.f32 %v1071, %v1074
        %v1077 = vadd.f32 %v1072, %v1075
        %v1078 = vmul.f32 %v797, %v1073
        %v1079 = vmul.f32 %v801, %v1073
        %1082 = vrot.lane.b32.xlu0 %v1078, 127
        %v1083 = vpop.permute.xlu0 %1082
        %1084 = vrot.lane.b32.xlu0 %v1079, 127
        %v1085 = vpop.permute.xlu0 %1084
        %v1088 = vadd.f32 %v1076, %v1083
        %v1089 = vadd.f32 %v1077, %v1085
        %v1090 = vmul.f32 %v817, %v1073
        %v1091 = vmul.f32 %v821, %v1073
        %1094 = vrot.lane.b32.xlu0 %v1090, 126
        %v1095 = vpop.permute.xlu0 %1094
        %1096 = vrot.lane.b32.xlu0 %v1091, 126
        %v1097 = vpop.permute.xlu0 %1096
        %v1100 = vadd.f32 %v1088, %v1095
        %v1101 = vadd.f32 %v1089, %v1097
        %v1102 = vmul.f32 %v837, %v1073
        %v1103 = vmul.f32 %v841, %v1073
        %1106 = vrot.lane.b32.xlu0 %v1102, 125
        %v1107 = vpop.permute.xlu0 %1106
        %1108 = vrot.lane.b32.xlu0 %v1103, 125
        %v1109 = vpop.permute.xlu0 %1108
        %v1112 = vadd.f32 %v1100, %v1107
        %v1113 = vadd.f32 %v1101, %v1109
        %v1114 = vmul.f32 %v857, %v1073
        %v1115 = vmul.f32 %v861, %v1073
        %1118 = vrot.lane.b32.xlu0 %v1114, 124
        %v1119 = vpop.permute.xlu0 %1118
        %1120 = vrot.lane.b32.xlu0 %v1115, 124
        %v1121 = vpop.permute.xlu0 %1120
        %v1124 = vadd.f32 %v1112, %v1119
        %v1125 = vadd.f32 %v1113, %v1121
        %v1126 = vmax.f32 %v1124, 0.0
        %v1127 = vmax.f32 %v1125, 0.0
        %vm1128 = vcmask 818176
        %v1130 = vsel %vm1128, %v1126, 0
        %v1133 = vsel %vm1128, %v1127, 0
        %vm1135 = vcmask 1043456
        %v1137 = vsel %vm1135, %v560, 0
        %1139 = vmatpush.msra.mxu0 0.0
        %1140 = vmatpush.msra.mxu0 0.0
        %1141 = vmatpush.msra.mxu0 0.0
        %1142 = vmatpush.msra.mxu0 %v1137
        %1143 = vmatpush.msra.mxu0 %v559
        %1144 = vmatpush.msra.mxu0 %v558
        %1145 = vmatpush.msra.mxu0 %v557
        %1146 = vmatpush.msra.mxu0 %v556
        %1147 = vmatpush.msra.mxu0 %v555
        %1148 = vmatpush.msra.mxu0 %v554
        %1149 = vmatpush.msra.mxu0 %v553
        %1150 = vmatpush.msra.mxu0 %v552
        %1151 = vmatpush.msra.mxu0 %v551
        %1152 = vmatpush.msra.mxu0 %v550
        %1153 = vmatpush.msra.mxu0 %v549
        %1154 = vmatpush.msra.mxu0 %v548
        %1155 = vmatmul.f32.gmra.mxu0 %v1130
        %v1156 = vpop.f32.mrf.mxu0
        %v1157 = vadd.f32 0.0, %v1156
        %1158 = vmatmul.f32.gmra.mxu0 %v1133
        %v1159 = vpop.f32.mrf.mxu0
        %v1160 = vadd.f32 0.0, %v1159
        %1161 = vdwg.mxu0
        %1162 = vset.pattern.permute.xlu0 0
        %1163 = vperm.xlu0 %1162, %v544
        %v1164 = vpop.permute.xlu0 %1163
        %1166 = vset.pattern.permute.xlu0 0
        %1167 = vperm.xlu0 %1166, %v545
        %v1168 = vpop.permute.xlu0 %1167
        %v1170 = vmul.f32 %v1164, %v604
        %v1171 = vmul.f32 %v1168, %v604
        %v1172 = vadd.f32 %v587, %v1170
        %v1173 = vadd.f32 %v592, %v1171
        %1174 = vset.pattern.permute.xlu0 1
        %1175 = vperm.xlu0 %1174, %v544
        %v1176 = vpop.permute.xlu0 %1175
        %1178 = vset.pattern.permute.xlu0 1
        %1179 = vperm.xlu0 %1178, %v545
        %v1180 = vpop.permute.xlu0 %1179
        %v1182 = vmul.f32 %v1176, %v604
        %v1183 = vmul.f32 %v1180, %v604
        %1186 = vrot.lane.b32.xlu0 %v1182, 127
        %v1187 = vpop.permute.xlu0 %1186
        %1188 = vrot.lane.b32.xlu0 %v1183, 127
        %v1189 = vpop.permute.xlu0 %1188
        %v1192 = vadd.f32 %v1172, %v1187
        %v1193 = vadd.f32 %v1173, %v1189
        %1194 = vset.pattern.permute.xlu0 2
        %1195 = vperm.xlu0 %1194, %v544
        %v1196 = vpop.permute.xlu0 %1195
        %1198 = vset.pattern.permute.xlu0 2
        %1199 = vperm.xlu0 %1198, %v545
        %v1200 = vpop.permute.xlu0 %1199
        %v1202 = vmul.f32 %v1196, %v604
        %v1203 = vmul.f32 %v1200, %v604
        %1206 = vrot.lane.b32.xlu0 %v1202, 126
        %v1207 = vpop.permute.xlu0 %1206
        %1208 = vrot.lane.b32.xlu0 %v1203, 126
        %v1209 = vpop.permute.xlu0 %1208
        %v1212 = vadd.f32 %v1192, %v1207
        %v1213 = vadd.f32 %v1193, %v1209
        %1214 = vset.pattern.permute.xlu0 3
        %1215 = vperm.xlu0 %1214, %v544
        %v1216 = vpop.permute.xlu0 %1215
        %1218 = vset.pattern.permute.xlu0 3
        %1219 = vperm.xlu0 %1218, %v545
        %v1220 = vpop.permute.xlu0 %1219
        %v1222 = vmul.f32 %v1216, %v604
        %v1223 = vmul.f32 %v1220, %v604
        %1226 = vrot.lane.b32.xlu0 %v1222, 125
        %v1227 = vpop.permute.xlu0 %1226
        %1228 = vrot.lane.b32.xlu0 %v1223, 125
        %v1229 = vpop.permute.xlu0 %1228
        %v1232 = vadd.f32 %v1212, %v1227
        %v1233 = vadd.f32 %v1213, %v1229
        %1234 = vset.pattern.permute.xlu0 4
        %1235 = vperm.xlu0 %1234, %v544
        %v1236 = vpop.permute.xlu0 %1235
        %1238 = vset.pattern.permute.xlu0 4
        %1239 = vperm.xlu0 %1238, %v545
        %v1240 = vpop.permute.xlu0 %1239
        %v1242 = vmul.f32 %v1236, %v604
        %v1243 = vmul.f32 %v1240, %v604
        %1246 = vrot.lane.b32.xlu0 %v1242, 124
        %v1247 = vpop.permute.xlu0 %1246
        %1248 = vrot.lane.b32.xlu0 %v1243, 124
        %v1249 = vpop.permute.xlu0 %1248
        %v1252 = vadd.f32 %v1232, %v1247
        %v1253 = vadd.f32 %v1233, %v1249
        %v1254 = vmul.f32 %v879, %v697
        %v1255 = vmul.f32 %v883, %v697
        %v1256 = vadd.f32 %v1252, %v1254
        %v1257 = vadd.f32 %v1253, %v1255
        %v1258 = vmul.f32 %v891, %v697
        %v1259 = vmul.f32 %v895, %v697
        %1262 = vrot.lane.b32.xlu0 %v1258, 127
        %v1263 = vpop.permute.xlu0 %1262
        %1264 = vrot.lane.b32.xlu0 %v1259, 127
        %v1265 = vpop.permute.xlu0 %1264
        %v1268 = vadd.f32 %v1256, %v1263
        %v1269 = vadd.f32 %v1257, %v1265
        %v1270 = vmul.f32 %v911, %v697
        %v1271 = vmul.f32 %v915, %v697
        %1274 = vrot.lane.b32.xlu0 %v1270, 126
        %v1275 = vpop.permute.xlu0 %1274
        %1276 = vrot.lane.b32.xlu0 %v1271, 126
        %v1277 = vpop.permute.xlu0 %1276
        %v1280 = vadd.f32 %v1268, %v1275
        %v1281 = vadd.f32 %v1269, %v1277
        %v1282 = vmul.f32 %v931, %v697
        %v1283 = vmul.f32 %v935, %v697
        %1286 = vrot.lane.b32.xlu0 %v1282, 125
        %v1287 = vpop.permute.xlu0 %1286
        %1288 = vrot.lane.b32.xlu0 %v1283, 125
        %v1289 = vpop.permute.xlu0 %1288
        %v1292 = vadd.f32 %v1280, %v1287
        %v1293 = vadd.f32 %v1281, %v1289
        %v1294 = vmul.f32 %v951, %v697
        %v1295 = vmul.f32 %v955, %v697
        %1298 = vrot.lane.b32.xlu0 %v1294, 124
        %v1299 = vpop.permute.xlu0 %1298
        %1300 = vrot.lane.b32.xlu0 %v1295, 124
        %v1301 = vpop.permute.xlu0 %1300
        %v1304 = vadd.f32 %v1292, %v1299
        %v1305 = vadd.f32 %v1293, %v1301
        %v1306 = vmul.f32 %v597, %v790
        %v1307 = vmul.f32 %v602, %v790
        %v1308 = vadd.f32 %v1304, %v1306
        %v1309 = vadd.f32 %v1305, %v1307
        %v1310 = vmul.f32 %v611, %v790
        %v1311 = vmul.f32 %v615, %v790
        %1314 = vrot.lane.b32.xlu0 %v1310, 127
        %v1315 = vpop.permute.xlu0 %1314
        %1316 = vrot.lane.b32.xlu0 %v1311, 127
        %v1317 = vpop.permute.xlu0 %1316
        %v1320 = vadd.f32 %v1308, %v1315
        %v1321 = vadd.f32 %v1309, %v1317
        %v1322 = vmul.f32 %v631, %v790
        %v1323 = vmul.f32 %v635, %v790
        %1326 = vrot.lane.b32.xlu0 %v1322, 126
        %v1327 = vpop.permute.xlu0 %1326
        %1328 = vrot.lane.b32.xlu0 %v1323, 126
        %v1329 = vpop.permute.xlu0 %1328
        %v1332 = vadd.f32 %v1320, %v1327
        %v1333 = vadd.f32 %v1321, %v1329
        %v1334 = vmul.f32 %v651, %v790
        %v1335 = vmul.f32 %v655, %v790
        %1338 = vrot.lane.b32.xlu0 %v1334, 125
        %v1339 = vpop.permute.xlu0 %1338
        %1340 = vrot.lane.b32.xlu0 %v1335, 125
        %v1341 = vpop.permute.xlu0 %1340
        %v1344 = vadd.f32 %v1332, %v1339
        %v1345 = vadd.f32 %v1333, %v1341
        %v1346 = vmul.f32 %v671, %v790
        %v1347 = vmul.f32 %v675, %v790
        %1350 = vrot.lane.b32.xlu0 %v1346, 124
        %v1351 = vpop.permute.xlu0 %1350
        %1352 = vrot.lane.b32.xlu0 %v1347, 124
        %v1353 = vpop.permute.xlu0 %1352
        %v1356 = vadd.f32 %v1344, %v1351
        %v1357 = vadd.f32 %v1345, %v1353
        %v1358 = vmul.f32 %v691, %v1073
        %v1359 = vmul.f32 %v695, %v1073
        %v1360 = vadd.f32 %v1356, %v1358
        %v1361 = vadd.f32 %v1357, %v1359
        %v1362 = vmul.f32 %v704, %v1073
        %v1363 = vmul.f32 %v708, %v1073
        %1366 = vrot.lane.b32.xlu0 %v1362, 127
        %v1367 = vpop.permute.xlu0 %1366
        %1368 = vrot.lane.b32.xlu0 %v1363, 127
        %v1369 = vpop.permute.xlu0 %1368
        %v1372 = vadd.f32 %v1360, %v1367
        %v1373 = vadd.f32 %v1361, %v1369
        %v1374 = vmul.f32 %v724, %v1073
        %v1375 = vmul.f32 %v728, %v1073
        %1378 = vrot.lane.b32.xlu0 %v1374, 126
        %v1379 = vpop.permute.xlu0 %1378
        %1380 = vrot.lane.b32.xlu0 %v1375, 126
        %v1381 = vpop.permute.xlu0 %1380
        %v1384 = vadd.f32 %v1372, %v1379
        %v1385 = vadd.f32 %v1373, %v1381
        %v1386 = vmul.f32 %v744, %v1073
        %v1387 = vmul.f32 %v748, %v1073
        %1390 = vrot.lane.b32.xlu0 %v1386, 125
        %v1391 = vpop.permute.xlu0 %1390
        %1392 = vrot.lane.b32.xlu0 %v1387, 125
        %v1393 = vpop.permute.xlu0 %1392
        %v1396 = vadd.f32 %v1384, %v1391
        %v1397 = vadd.f32 %v1385, %v1393
        %v1398 = vmul.f32 %v764, %v1073
        %v1399 = vmul.f32 %v768, %v1073
        %1402 = vrot.lane.b32.xlu0 %v1398, 124
        %v1403 = vpop.permute.xlu0 %1402
        %1404 = vrot.lane.b32.xlu0 %v1399, 124
        %v1405 = vpop.permute.xlu0 %1404
        %v1408 = vadd.f32 %v1396, %v1403
        %v1409 = vadd.f32 %v1397, %v1405
        %v1410 = vmax.f32 %v1408, 0.0
        %v1411 = vmax.f32 %v1409, 0.0
        %v1412 = vmul.f32 %v1164, %v697
        %v1413 = vmul.f32 %v1168, %v697
        %v1414 = vadd.f32 %v587, %v1412
        %v1415 = vadd.f32 %v592, %v1413
        %v1416 = vmul.f32 %v1176, %v697
        %v1417 = vmul.f32 %v1180, %v697
        %1420 = vrot.lane.b32.xlu0 %v1416, 127
        %v1421 = vpop.permute.xlu0 %1420
        %1422 = vrot.lane.b32.xlu0 %v1417, 127
        %v1423 = vpop.permute.xlu0 %1422
        %v1426 = vadd.f32 %v1414, %v1421
        %v1427 = vadd.f32 %v1415, %v1423
        %v1428 = vmul.f32 %v1196, %v697
        %v1429 = vmul.f32 %v1200, %v697
        %1432 = vrot.lane.b32.xlu0 %v1428, 126
        %v1433 = vpop.permute.xlu0 %1432
        %1434 = vrot.lane.b32.xlu0 %v1429, 126
        %v1435 = vpop.permute.xlu0 %1434
        %v1438 = vadd.f32 %v1426, %v1433
        %v1439 = vadd.f32 %v1427, %v1435
        %v1440 = vmul.f32 %v1216, %v697
        %v1441 = vmul.f32 %v1220, %v697
        %1444 = vrot.lane.b32.xlu0 %v1440, 125
        %v1445 = vpop.permute.xlu0 %1444
        %1446 = vrot.lane.b32.xlu0 %v1441, 125
        %v1447 = vpop.permute.xlu0 %1446
        %v1450 = vadd.f32 %v1438, %v1445
        %v1451 = vadd.f32 %v1439, %v1447
        %v1452 = vmul.f32 %v1236, %v697
        %v1453 = vmul.f32 %v1240, %v697
        %1456 = vrot.lane.b32.xlu0 %v1452, 124
        %v1457 = vpop.permute.xlu0 %1456
        %1458 = vrot.lane.b32.xlu0 %v1453, 124
        %v1459 = vpop.permute.xlu0 %1458
        %v1462 = vadd.f32 %v1450, %v1457
        %v1463 = vadd.f32 %v1451, %v1459
        %v1464 = vmul.f32 %v879, %v790
        %v1465 = vmul.f32 %v883, %v790
        %v1466 = vadd.f32 %v1462, %v1464
        %v1467 = vadd.f32 %v1463, %v1465
        %v1468 = vmul.f32 %v891, %v790
        %v1469 = vmul.f32 %v895, %v790
        %1472 = vrot.lane.b32.xlu0 %v1468, 127
        %v1473 = vpop.permute.xlu0 %1472
        %1474 = vrot.lane.b32.xlu0 %v1469, 127
        %v1475 = vpop.permute.xlu0 %1474
        %v1478 = vadd.f32 %v1466, %v1473
        %v1479 = vadd.f32 %v1467, %v1475
        %v1480 = vmul.f32 %v911, %v790
        %v1481 = vmul.f32 %v915, %v790
        %1484 = vrot.lane.b32.xlu0 %v1480, 126
        %v1485 = vpop.permute.xlu0 %1484
        %1486 = vrot.lane.b32.xlu0 %v1481, 126
        %v1487 = vpop.permute.xlu0 %1486
        %v1490 = vadd.f32 %v1478, %v1485
        %v1491 = vadd.f32 %v1479, %v1487
        %v1492 = vmul.f32 %v931, %v790
        %v1493 = vmul.f32 %v935, %v790
        %1496 = vrot.lane.b32.xlu0 %v1492, 125
        %v1497 = vpop.permute.xlu0 %1496
        %1498 = vrot.lane.b32.xlu0 %v1493, 125
        %v1499 = vpop.permute.xlu0 %1498
        %v1502 = vadd.f32 %v1490, %v1497
        %v1503 = vadd.f32 %v1491, %v1499
        %v1504 = vmul.f32 %v951, %v790
        %v1505 = vmul.f32 %v955, %v790
        %1508 = vrot.lane.b32.xlu0 %v1504, 124
        %v1509 = vpop.permute.xlu0 %1508
        %1510 = vrot.lane.b32.xlu0 %v1505, 124
        %v1511 = vpop.permute.xlu0 %1510
        %v1514 = vadd.f32 %v1502, %v1509
        %v1515 = vadd.f32 %v1503, %v1511
        %v1516 = vmul.f32 %v597, %v1073
        %v1517 = vmul.f32 %v602, %v1073
        %v1518 = vadd.f32 %v1514, %v1516
        %v1519 = vadd.f32 %v1515, %v1517
        %v1520 = vmul.f32 %v611, %v1073
        %v1521 = vmul.f32 %v615, %v1073
        %1524 = vrot.lane.b32.xlu0 %v1520, 127
        %v1525 = vpop.permute.xlu0 %1524
        %1526 = vrot.lane.b32.xlu0 %v1521, 127
        %v1527 = vpop.permute.xlu0 %1526
        %v1530 = vadd.f32 %v1518, %v1525
        %v1531 = vadd.f32 %v1519, %v1527
        %v1532 = vmul.f32 %v631, %v1073
        %v1533 = vmul.f32 %v635, %v1073
        %1536 = vrot.lane.b32.xlu0 %v1532, 126
        %v1537 = vpop.permute.xlu0 %1536
        %1538 = vrot.lane.b32.xlu0 %v1533, 126
        %v1539 = vpop.permute.xlu0 %1538
        %v1542 = vadd.f32 %v1530, %v1537
        %v1543 = vadd.f32 %v1531, %v1539
        %v1544 = vmul.f32 %v651, %v1073
        %v1545 = vmul.f32 %v655, %v1073
        %1548 = vrot.lane.b32.xlu0 %v1544, 125
        %v1549 = vpop.permute.xlu0 %1548
        %1550 = vrot.lane.b32.xlu0 %v1545, 125
        %v1551 = vpop.permute.xlu0 %1550
        %v1554 = vadd.f32 %v1542, %v1549
        %v1555 = vadd.f32 %v1543, %v1551
        %v1556 = vmul.f32 %v671, %v1073
        %v1557 = vmul.f32 %v675, %v1073
        %1560 = vrot.lane.b32.xlu0 %v1556, 124
        %v1561 = vpop.permute.xlu0 %1560
        %1562 = vrot.lane.b32.xlu0 %v1557, 124
        %v1563 = vpop.permute.xlu0 %1562
        %v1566 = vadd.f32 %v1554, %v1561
        %v1567 = vadd.f32 %v1555, %v1563
        %v1568 = vmax.f32 %v1566, 0.0
        %v1569 = vmax.f32 %v1567, 0.0
        %v1571 = vsel %vm1128, %v1568, 0
        %v1574 = vsel %vm1128, %v1569, 0
        %1576 = vmatpush.msra.mxu0 0.0
        %1577 = vmatpush.msra.mxu0 0.0
        %1578 = vmatpush.msra.mxu0 0.0
        %1579 = vmatpush.msra.mxu0 %v1137
        %1580 = vmatpush.msra.mxu0 %v559
        %1581 = vmatpush.msra.mxu0 %v558
        %1582 = vmatpush.msra.mxu0 %v557
        %1583 = vmatpush.msra.mxu0 %v556
        %1584 = vmatpush.msra.mxu0 %v555
        %1585 = vmatpush.msra.mxu0 %v554
        %1586 = vmatpush.msra.mxu0 %v553
        %1587 = vmatpush.msra.mxu0 %v552
        %1588 = vmatpush.msra.mxu0 %v551
        %1589 = vmatpush.msra.mxu0 %v550
        %1590 = vmatpush.msra.mxu0 %v549
        %1591 = vmatpush.msra.mxu0 %v548
        %1592 = vmatmul.f32.gmra.mxu0 %v1571
        %v1593 = vpop.f32.mrf.mxu0
        %v1594 = vadd.f32 0.0, %v1593
        %1595 = vmatmul.f32.gmra.mxu0 %v1574
        %v1596 = vpop.f32.mrf.mxu0
        %v1597 = vadd.f32 0.0, %v1596
        %1598 = vdwg.mxu0
        %v1600 = vsel %vm1128, %v875, 0
        %v1603 = vsel %vm1128, %v876, 0
        %1605 = vmatpush.msra.mxu0 0.0
        %1606 = vmatpush.msra.mxu0 0.0
        %1607 = vmatpush.msra.mxu0 0.0
        %1608 = vmatpush.msra.mxu0 %v1137
        %1609 = vmatpush.msra.mxu0 %v559
        %1610 = vmatpush.msra.mxu0 %v558
        %1611 = vmatpush.msra.mxu0 %v557
        %1612 = vmatpush.msra.mxu0 %v556
        %1613 = vmatpush.msra.mxu0 %v555
        %1614 = vmatpush.msra.mxu0 %v554
        %1615 = vmatpush.msra.mxu0 %v553
        %1616 = vmatpush.msra.mxu0 %v552
        %1617 = vmatpush.msra.mxu0 %v551
        %1618 = vmatpush.msra.mxu0 %v550
        %1619 = vmatpush.msra.mxu0 %v549
        %1620 = vmatpush.msra.mxu0 %v548
        %1621 = vmatmul.f32.gmra.mxu0 %v1600
        %v1622 = vpop.f32.mrf.mxu0
        %v1623 = vadd.f32 %v1157, %v1622
        %1624 = vmatmul.f32.gmra.mxu0 %v1603
        %v1625 = vpop.f32.mrf.mxu0
        %v1626 = vadd.f32 %v1160, %v1625
        %1627 = vdwg.mxu0
        %v1628 = vmul.f32 %v1623, 0.5
        %v1629 = vmul.f32 %v1626, 0.5
        %v1631 = vsel %vm1128, %v1410, 0
        %v1634 = vsel %vm1128, %v1411, 0
        %1636 = vmatpush.msra.mxu0 0.0
        %1637 = vmatpush.msra.mxu0 0.0
        %1638 = vmatpush.msra.mxu0 0.0
        %1639 = vmatpush.msra.mxu0 %v1137
        %1640 = vmatpush.msra.mxu0 %v559
        %1641 = vmatpush.msra.mxu0 %v558
        %1642 = vmatpush.msra.mxu0 %v557
        %1643 = vmatpush.msra.mxu0 %v556
        %1644 = vmatpush.msra.mxu0 %v555
        %1645 = vmatpush.msra.mxu0 %v554
        %1646 = vmatpush.msra.mxu0 %v553
        %1647 = vmatpush.msra.mxu0 %v552
        %1648 = vmatpush.msra.mxu0 %v551
        %1649 = vmatpush.msra.mxu0 %v550
        %1650 = vmatpush.msra.mxu0 %v549
        %1651 = vmatpush.msra.mxu0 %v548
        %1652 = vmatmul.f32.gmra.mxu0 %v1631
        %v1653 = vpop.f32.mrf.mxu0
        %v1654 = vadd.f32 %v1594, %v1653
        %1655 = vmatmul.f32.gmra.mxu0 %v1634
        %v1656 = vpop.f32.mrf.mxu0
        %v1657 = vadd.f32 %v1597, %v1656
        %1658 = vdwg.mxu0
        %v1659 = vmul.f32 %v1654, 0.5
        %v1660 = vmul.f32 %v1657, 0.5
        %1662 = vset.pattern.permute.xlu0 0
        %1663 = vperm.xlu0 %1662, %v573
        %v1664 = vpop.permute.xlu0 %1663
        %1667 = vset.pattern.permute.xlu0 0
        %1668 = vperm.xlu0 %1667, %v574
        %v1669 = vpop.permute.xlu0 %1668
        %1672 = vset.pattern.permute.xlu0 0
        %1673 = vperm.xlu0 %1672, %v575
        %v1674 = vpop.permute.xlu0 %1673
        %1677 = vset.pattern.permute.xlu0 0
        %1678 = vperm.xlu0 %1677, %v576
        %v1679 = vpop.permute.xlu0 %1678
        %1683 = vrot.lane.b32.xlu0 %v1628, 127
        %v1684 = vpop.permute.xlu0 %1683
        %1685 = vrot.lane.b32.xlu0 %v1629, 127
        %v1686 = vpop.permute.xlu0 %1685
        %1689 = vrot.lane.b32.xlu0 %v1628, 126
        %v1690 = vpop.permute.xlu0 %1689
        %1691 = vrot.lane.b32.xlu0 %v1629, 126
        %v1692 = vpop.permute.xlu0 %1691
        %1695 = vrot.lane.b32.xlu0 %v1628, 125
        %v1696 = vpop.permute.xlu0 %1695
        %1697 = vrot.lane.b32.xlu0 %v1629, 125
        %v1698 = vpop.permute.xlu0 %1697
        %1701 = vrot.lane.b32.xlu0 %v1628, 124
        %v1702 = vpop.permute.xlu0 %1701
        %1703 = vrot.lane.b32.xlu0 %v1629, 124
        %v1704 = vpop.permute.xlu0 %1703
        %1711 = vrot.lane.b32.xlu0 %v562, 96
        %v1712 = vpop.permute.xlu0 %1711
        %1713 = vrot.lane.b32.xlu0 %v565, 96
        %v1714 = vpop.permute.xlu0 %1713
        %1715 = vrot.lane.b32.xlu0 %v568, 96
        %v1716 = vpop.permute.xlu0 %1715
        %1717 = vrot.lane.b32.xlu0 %v571, 96
        %v1718 = vpop.permute.xlu0 %1717
        %vm1719 = vcmask 654336
        %v1720 = vsel %vm1719, %v1712, 0
        %v1722 = vsel %vm1719, %v1714, 0
        %v1724 = vsel %vm1719, %v1716, 0
        %v1726 = vsel %vm1719, %v1718, 0
        %1728 = vmatpush.msra.mxu0 0.0
        %1729 = vmatpush.msra.mxu0 0.0
        %1730 = vmatpush.msra.mxu0 0.0
        %1731 = vmatpush.msra.mxu0 0.0
        %1732 = vmatpush.msra.mxu0 0.0
        %1733 = vmatpush.msra.mxu0 0.0
        %1734 = vmatpush.msra.mxu0 %v1704
        %1735 = vmatpush.msra.mxu0 %v1702
        %1736 = vmatpush.msra.mxu0 %v1698
        %1737 = vmatpush.msra.mxu0 %v1696
        %1738 = vmatpush.msra.mxu0 %v1692
        %1739 = vmatpush.msra.mxu0 %v1690
        %1740 = vmatpush.msra.mxu0 %v1686
        %1741 = vmatpush.msra.mxu0 %v1684
        %1742 = vmatpush.msra.mxu0 %v1629
        %1743 = vmatpush.msra.mxu0 %v1628
        %1744 = vmatmul.f32.gmra.mxu0 %v1720
        %v1745 = vpop.f32.mrf.mxu0
        %v1746 = vadd.f32 0.0, %v1745
        %1747 = vmatmul.f32.gmra.mxu0 %v1722
        %v1748 = vpop.f32.mrf.mxu0
        %v1749 = vadd.f32 0.0, %v1748
        %1750 = vmatmul.f32.gmra.mxu0 %v1724
        %v1751 = vpop.f32.mrf.mxu0
        %v1752 = vadd.f32 0.0, %v1751
        %1753 = vmatmul.f32.gmra.mxu0 %v1726
        %v1754 = vpop.f32.mrf.mxu0
        %v1755 = vadd.f32 0.0, %v1754
        %1756 = vdwg.mxu0
        %v1757 = vadd.f32 %v1664, %v1746
        %v1758 = vadd.f32 %v1669, %v1749
        %v1759 = vadd.f32 %v1674, %v1752
        %v1760 = vadd.f32 %v1679, %v1755
        %1763 = vrot.lane.b32.xlu0 %v1659, 127
        %v1764 = vpop.permute.xlu0 %1763
        %1765 = vrot.lane.b32.xlu0 %v1660, 127
        %v1766 = vpop.permute.xlu0 %1765
        %1769 = vrot.lane.b32.xlu0 %v1659, 126
        %v1770 = vpop.permute.xlu0 %1769
        %1771 = vrot.lane.b32.xlu0 %v1660, 126
        %v1772 = vpop.permute.xlu0 %1771
        %1775 = vrot.lane.b32.xlu0 %v1659, 125
        %v1776 = vpop.permute.xlu0 %1775
        %1777 = vrot.lane.b32.xlu0 %v1660, 125
        %v1778 = vpop.permute.xlu0 %1777
        %1781 = vrot.lane.b32.xlu0 %v1659, 124
        %v1782 = vpop.permute.xlu0 %1781
        %1783 = vrot.lane.b32.xlu0 %v1660, 124
        %v1784 = vpop.permute.xlu0 %1783
        %1791 = vrot.lane.b32.xlu0 %v562, 16
        %v1792 = vpop.permute.xlu0 %1791
        %1793 = vrot.lane.b32.xlu0 %v563, 16
        %v1794 = vpop.permute.xlu0 %1793
        %1795 = vrot.lane.b32.xlu0 %v565, 16
        %v1796 = vpop.permute.xlu0 %1795
        %1797 = vrot.lane.b32.xlu0 %v566, 16
        %v1798 = vpop.permute.xlu0 %1797
        %1799 = vrot.lane.b32.xlu0 %v568, 16
        %v1800 = vpop.permute.xlu0 %1799
        %1801 = vrot.lane.b32.xlu0 %v569, 16
        %v1802 = vpop.permute.xlu0 %1801
        %1803 = vrot.lane.b32.xlu0 %v571, 16
        %v1804 = vpop.permute.xlu0 %1803
        %1805 = vrot.lane.b32.xlu0 %v572, 16
        %v1806 = vpop.permute.xlu0 %1805
        %vm1807 = vcmask 130048
        %v1808 = vsel %vm1807, %v1792, %v1794
        %v1809 = vsel %vm1807, %v1796, %v1798
        %v1810 = vsel %vm1807, %v1800, %v1802
        %v1811 = vsel %vm1807, %v1804, %v1806
        %v1812 = vsel %vm1719, %v1808, 0
        %v1814 = vsel %vm1719, %v1809, 0
        %v1816 = vsel %vm1719, %v1810, 0
        %v1818 = vsel %vm1719, %v1811, 0
        %1820 = vmatpush.msra.mxu0 0.0
        %1821 = vmatpush.msra.mxu0 0.0
        %1822 = vmatpush.msra.mxu0 0.0
        %1823 = vmatpush.msra.mxu0 0.0
        %1824 = vmatpush.msra.mxu0 0.0
        %1825 = vmatpush.msra.mxu0 0.0
        %1826 = vmatpush.msra.mxu0 %v1784
        %1827 = vmatpush.msra.mxu0 %v1782
        %1828 = vmatpush.msra.mxu0 %v1778
        %1829 = vmatpush.msra.mxu0 %v1776
        %1830 = vmatpush.msra.mxu0 %v1772
        %1831 = vmatpush.msra.mxu0 %v1770
        %1832 = vmatpush.msra.mxu0 %v1766
        %1833 = vmatpush.msra.mxu0 %v1764
        %1834 = vmatpush.msra.mxu0 %v1660
        %1835 = vmatpush.msra.mxu0 %v1659
        %1836 = vmatmul.f32.gmra.mxu0 %v1812
        %v1837 = vpop.f32.mrf.mxu0
        %v1838 = vadd.f32 0.0, %v1837
        %1839 = vmatmul.f32.gmra.mxu0 %v1814
        %v1840 = vpop.f32.mrf.mxu0
        %v1841 = vadd.f32 0.0, %v1840
        %1842 = vmatmul.f32.gmra.mxu0 %v1816
        %v1843 = vpop.f32.mrf.mxu0
        %v1844 = vadd.f32 0.0, %v1843
        %1845 = vmatmul.f32.gmra.mxu0 %v1818
        %v1846 = vpop.f32.mrf.mxu0
        %v1847 = vadd.f32 0.0, %v1846
        %1848 = vdwg.mxu0
        %v1849 = vadd.f32 %v1757, %v1838
        %v1850 = vadd.f32 %v1758, %v1841
        %v1851 = vadd.f32 %v1759, %v1844
        %v1852 = vadd.f32 %v1760, %v1847
        %v1853 = vmax.f32 %v1849, 0.0
        %v1854 = vmax.f32 %v1850, 0.0
        %v1855 = vmax.f32 %v1851, 0.0
        %v1856 = vmax.f32 %v1852, 0.0
        %1861 = vrot.lane.b32.xlu0 %v561, 48
        %v1862 = vpop.permute.xlu0 %1861
        %1863 = vrot.lane.b32.xlu0 %v562, 48
        %v1864 = vpop.permute.xlu0 %1863
        %1865 = vrot.lane.b32.xlu0 %v564, 48
        %v1866 = vpop.permute.xlu0 %1865
        %1867 = vrot.lane.b32.xlu0 %v565, 48
        %v1868 = vpop.permute.xlu0 %1867
        %1869 = vrot.lane.b32.xlu0 %v567, 48
        %v1870 = vpop.permute.xlu0 %1869
        %1871 = vrot.lane.b32.xlu0 %v568, 48
        %v1872 = vpop.permute.xlu0 %1871
        %1873 = vrot.lane.b32.xlu0 %v570, 48
        %v1874 = vpop.permute.xlu0 %1873
        %1875 = vrot.lane.b32.xlu0 %v571, 48
        %v1876 = vpop.permute.xlu0 %1875
        %vm1877 = vcmask 392192
        %v1878 = vsel %vm1877, %v1862, %v1864
        %v1879 = vsel %vm1877, %v1866, %v1868
        %v1880 = vsel %vm1877, %v1870, %v1872
        %v1881 = vsel %vm1877, %v1874, %v1876
        %v1882 = vsel %vm1719, %v1878, 0
        %v1884 = vsel %vm1719, %v1879, 0
        %v1886 = vsel %vm1719, %v1880, 0
        %v1888 = vsel %vm1719, %v1881, 0
        %1890 = vmatpush.msra.mxu0 0.0
        %1891 = vmatpush.msra.mxu0 0.0
        %1892 = vmatpush.msra.mxu0 0.0
        %1893 = vmatpush.msra.mxu0 0.0
        %1894 = vmatpush.msra.mxu0 0.0
        %1895 = vmatpush.msra.mxu0 0.0
        %1896 = vmatpush.msra.mxu0 %v1704
        %1897 = vmatpush.msra.mxu0 %v1702
        %1898 = vmatpush.msra.mxu0 %v1698
        %1899 = vmatpush.msra.mxu0 %v1696
        %1900 = vmatpush.msra.mxu0 %v1692
        %1901 = vmatpush.msra.mxu0 %v1690
        %1902 = vmatpush.msra.mxu0 %v1686
        %1903 = vmatpush.msra.mxu0 %v1684
        %1904 = vmatpush.msra.mxu0 %v1629
        %1905 = vmatpush.msra.mxu0 %v1628
        %1906 = vmatmul.f32.gmra.mxu0 %v1882
        %v1907 = vpop.f32.mrf.mxu0
        %v1908 = vadd.f32 0.0, %v1907
        %1909 = vmatmul.f32.gmra.mxu0 %v1884
        %v1910 = vpop.f32.mrf.mxu0
        %v1911 = vadd.f32 0.0, %v1910
        %1912 = vmatmul.f32.gmra.mxu0 %v1886
        %v1913 = vpop.f32.mrf.mxu0
        %v1914 = vadd.f32 0.0, %v1913
        %1915 = vmatmul.f32.gmra.mxu0 %v1888
        %v1916 = vpop.f32.mrf.mxu0
        %v1917 = vadd.f32 0.0, %v1916
        %1918 = vdwg.mxu0
        %v1919 = vadd.f32 %v1664, %v1908
        %v1920 = vadd.f32 %v1669, %v1911
        %v1921 = vadd.f32 %v1674, %v1914
        %v1922 = vadd.f32 %v1679, %v1917
        %1923 = vmatpush.msra.mxu0 0.0
        %1924 = vmatpush.msra.mxu0 0.0
        %1925 = vmatpush.msra.mxu0 0.0
        %1926 = vmatpush.msra.mxu0 0.0
        %1927 = vmatpush.msra.mxu0 0.0
        %1928 = vmatpush.msra.mxu0 0.0
        %1929 = vmatpush.msra.mxu0 %v1784
        %1930 = vmatpush.msra.mxu0 %v1782
        %1931 = vmatpush.msra.mxu0 %v1778
        %1932 = vmatpush.msra.mxu0 %v1776
        %1933 = vmatpush.msra.mxu0 %v1772
        %1934 = vmatpush.msra.mxu0 %v1770
        %1935 = vmatpush.msra.mxu0 %v1766
        %1936 = vmatpush.msra.mxu0 %v1764
        %1937 = vmatpush.msra.mxu0 %v1660
        %1938 = vmatpush.msra.mxu0 %v1659
        %1939 = vmatmul.f32.gmra.mxu0 %v1720
        %v1940 = vpop.f32.mrf.mxu0
        %v1941 = vadd.f32 0.0, %v1940
        %1942 = vmatmul.f32.gmra.mxu0 %v1722
        %v1943 = vpop.f32.mrf.mxu0
        %v1944 = vadd.f32 0.0, %v1943
        %1945 = vmatmul.f32.gmra.mxu0 %v1724
        %v1946 = vpop.f32.mrf.mxu0
        %v1947 = vadd.f32 0.0, %v1946
        %1948 = vmatmul.f32.gmra.mxu0 %v1726
        %v1949 = vpop.f32.mrf.mxu0
        %v1950 = vadd.f32 0.0, %v1949
        %1951 = vdwg.mxu0
        %v1952 = vadd.f32 %v1919, %v1941
        %v1953 = vadd.f32 %v1920, %v1944
        %v1954 = vadd.f32 %v1921, %v1947
        %v1955 = vadd.f32 %v1922, %v1950
        %v1956 = vmax.f32 %v1952, 0.0
        %v1957 = vmax.f32 %v1953, 0.0
        %v1958 = vmax.f32 %v1954, 0.0
        %v1959 = vmax.f32 %v1955, 0.0
        %vm1960 = vcmask 408576
        %v1962 = vsel %vm1960, %v1956, 0
        %v1965 = vsel %vm1960, %v1957, 0
        %v1968 = vsel %vm1960, %v1958, 0
        %v1971 = vsel %vm1960, %v1959, 0
        %vm1973 = vcmask 1041408
        %v1975 = vsel %vm1973, %v583, 0
        %1977 = vmatpush.msra.mxu0 0.0
        %1978 = vmatpush.msra.mxu0 0.0
        %1979 = vmatpush.msra.mxu0 0.0
        %1980 = vmatpush.msra.mxu0 0.0
        %1981 = vmatpush.msra.mxu0 0.0
        %1982 = vmatpush.msra.mxu0 0.0
        %1983 = vmatpush.msra.mxu0 0.0
        %1984 = vmatpush.msra.mxu0 0.0
        %1985 = vmatpush.msra.mxu0 0.0
        %1986 = vmatpush.msra.mxu0 %v1975
        %1987 = vmatpush.msra.mxu0 %v582
        %1988 = vmatpush.msra.mxu0 %v581
        %1989 = vmatpush.msra.mxu0 %v580
        %1990 = vmatpush.msra.mxu0 %v579
        %1991 = vmatpush.msra.mxu0 %v578
        %1992 = vmatpush.msra.mxu0 %v577
        %1993 = vmatmul.f32.gmra.mxu0 %v1962
        %v1994 = vpop.f32.mrf.mxu0
        %v1995 = vadd.f32 0.0, %v1994
        %1996 = vmatmul.f32.gmra.mxu0 %v1965
        %v1997 = vpop.f32.mrf.mxu0
        %v1998 = vadd.f32 0.0, %v1997
        %1999 = vmatmul.f32.gmra.mxu0 %v1968
        %v2000 = vpop.f32.mrf.mxu0
        %v2001 = vadd.f32 0.0, %v2000
        %2002 = vmatmul.f32.gmra.mxu0 %v1971
        %v2003 = vpop.f32.mrf.mxu0
        %v2004 = vadd.f32 0.0, %v2003
        %2005 = vdwg.mxu0
        %v2007 = vsel %vm1960, %v1853, 0
        %v2010 = vsel %vm1960, %v1854, 0
        %v2013 = vsel %vm1960, %v1855, 0
        %v2016 = vsel %vm1960, %v1856, 0
        %2018 = vmatpush.msra.mxu0 0.0
        %2019 = vmatpush.msra.mxu0 0.0
        %2020 = vmatpush.msra.mxu0 0.0
        %2021 = vmatpush.msra.mxu0 0.0
        %2022 = vmatpush.msra.mxu0 0.0
        %2023 = vmatpush.msra.mxu0 0.0
        %2024 = vmatpush.msra.mxu0 0.0
        %2025 = vmatpush.msra.mxu0 0.0
        %2026 = vmatpush.msra.mxu0 0.0
        %2027 = vmatpush.msra.mxu0 %v1975
        %2028 = vmatpush.msra.mxu0 %v582
        %2029 = vmatpush.msra.mxu0 %v581
        %2030 = vmatpush.msra.mxu0 %v580
        %2031 = vmatpush.msra.mxu0 %v579
        %2032 = vmatpush.msra.mxu0 %v578
        %2033 = vmatpush.msra.mxu0 %v577
        %2034 = vmatmul.f32.gmra.mxu0 %v2007
        %v2035 = vpop.f32.mrf.mxu0
        %v2036 = vadd.f32 %v1995, %v2035
        %2037 = vmatmul.f32.gmra.mxu0 %v2010
        %v2038 = vpop.f32.mrf.mxu0
        %v2039 = vadd.f32 %v1998, %v2038
        %2040 = vmatmul.f32.gmra.mxu0 %v2013
        %v2041 = vpop.f32.mrf.mxu0
        %v2042 = vadd.f32 %v2001, %v2041
        %2043 = vmatmul.f32.gmra.mxu0 %v2016
        %v2044 = vpop.f32.mrf.mxu0
        %v2045 = vadd.f32 %v2004, %v2044
        %2046 = vdwg.mxu0
        %v2047 = vmul.f32 %v2036, 0.5
        %v2048 = vmul.f32 %v2039, 0.5
        %v2049 = vmul.f32 %v2042, 0.5
        %v2050 = vmul.f32 %v2045, 0.5
        %v2051 = vld [vmem:[%s8] sm:$0x3]
        %v2052 = vld [vmem:[%s7] sm:$0xff]
        %v2053 = vld [vmem:[%s7 + $0x8] sm:$0xff]
        %v2054 = vld [vmem:[%s7 + $0x10] sm:$0xff]
        %v2055 = vld [vmem:[%s7 + $0x18] sm:$0xff]
        %v2056 = vld [vmem:[%s7 + $0x20] sm:$0xff]
        %v2057 = vld [vmem:[%s7 + $0x28] sm:$0xff]
        %v2058 = vld [vmem:[%s7 + $0x30] sm:$0x1]
        %v2059 = vld [vmem:[%s7 + $0x38] sm:$0x1]
        %vm2060 = vcmask 203776
        %v2062 = vsel %vm2060, %v2047, 0
        %vm2064 = vcmask 1040384
        %v2066 = vsel %vm2064, %v2058, 0
        %v2069 = vsel %vm2064, %v2059, 0
        %2071 = vmatpush.msra.mxu0 0.0
        %2072 = vmatpush.msra.mxu0 0.0
        %2073 = vmatpush.msra.mxu0 0.0
        %2074 = vmatpush.msra.mxu0 0.0
        %2075 = vmatpush.msra.mxu0 0.0
        %2076 = vmatpush.msra.mxu0 0.0
        %2077 = vmatpush.msra.mxu0 0.0
        %2078 = vmatpush.msra.mxu0 0.0
        %2079 = vmatpush.msra.mxu0 0.0
        %2080 = vmatpush.msra.mxu0 0.0
        %2081 = vmatpush.msra.mxu0 0.0
        %2082 = vmatpush.msra.mxu0 0.0
        %2083 = vmatpush.msra.mxu0 %v2066
        %2084 = vmatpush.msra.mxu0 %v2056
        %2085 = vmatpush.msra.mxu0 %v2054
        %2086 = vmatpush.msra.mxu0 %v2052
        %2087 = vmatmul.f32.gmra.mxu0 %v2062
        %v2088 = vpop.f32.mrf.mxu0
        %v2089 = vadd.f32 0.0, %v2088
        %2090 = vdwg.mxu0
        %2091 = vmatpush.msra.mxu0 0.0
        %2092 = vmatpush.msra.mxu0 0.0
        %2093 = vmatpush.msra.mxu0 0.0
        %2094 = vmatpush.msra.mxu0 0.0
        %2095 = vmatpush.msra.mxu0 0.0
        %2096 = vmatpush.msra.mxu0 0.0
        %2097 = vmatpush.msra.mxu0 0.0
        %2098 = vmatpush.msra.mxu0 0.0
        %2099 = vmatpush.msra.mxu0 0.0
        %2100 = vmatpush.msra.mxu0 0.0
        %2101 = vmatpush.msra.mxu0 0.0
        %2102 = vmatpush.msra.mxu0 0.0
        %2103 = vmatpush.msra.mxu0 %v2069
        %2104 = vmatpush.msra.mxu0 %v2057
        %2105 = vmatpush.msra.mxu0 %v2055
        %2106 = vmatpush.msra.mxu0 %v2053
        %2107 = vmatmul.f32.gmra.mxu0 %v2062
        %v2108 = vpop.f32.mrf.mxu0
        %v2109 = vadd.f32 0.0, %v2108
        %2110 = vdwg.mxu0
        %v2113 = vrot.slane %v2109, 7
        %v2114 = vsel %vm2064, %v2089, %v2113
        %v2116 = vadd.f32 %v2051, %v2114
        %s2117 = scalar_lea.vmem %s7, 64
        %v2118 = vld [vmem:[%s2117] sm:$0xff]
        %v2119 = vld [vmem:[%s2117 + $0x8] sm:$0xff]
        %v2120 = vld [vmem:[%s2117 + $0x10] sm:$0xff]
        %v2121 = vld [vmem:[%s2117 + $0x18] sm:$0xff]
        %v2122 = vld [vmem:[%s2117 + $0x20] sm:$0xff]
        %v2123 = vld [vmem:[%s2117 + $0x28] sm:$0xff]
        %v2124 = vld [vmem:[%s2117 + $0x30] sm:$0x1]
        %v2125 = vld [vmem:[%s2117 + $0x38] sm:$0x1]
        %v2126 = vrot.slane %v2047, 1
        %v2127 = vsel %vm2060, %v2126, 0
        %v2130 = vsel %vm2064, %v2124, 0
        %v2133 = vsel %vm2064, %v2125, 0
        %2135 = vmatpush.msra.mxu0 0.0
        %2136 = vmatpush.msra.mxu0 0.0
        %2137 = vmatpush.msra.mxu0 0.0
        %2138 = vmatpush.msra.mxu0 0.0
        %2139 = vmatpush.msra.mxu0 0.0
        %2140 = vmatpush.msra.mxu0 0.0
        %2141 = vmatpush.msra.mxu0 0.0
        %2142 = vmatpush.msra.mxu0 0.0
        %2143 = vmatpush.msra.mxu0 0.0
        %2144 = vmatpush.msra.mxu0 0.0
        %2145 = vmatpush.msra.mxu0 0.0
        %2146 = vmatpush.msra.mxu0 0.0
        %2147 = vmatpush.msra.mxu0 %v2130
        %2148 = vmatpush.msra.mxu0 %v2122
        %2149 = vmatpush.msra.mxu0 %v2120
        %2150 = vmatpush.msra.mxu0 %v2118
        %2151 = vmatmul.f32.gmra.mxu0 %v2127
        %v2152 = vpop.f32.mrf.mxu0
        %v2153 = vadd.f32 0.0, %v2152
        %2154 = vdwg.mxu0
        %2155 = vmatpush.msra.mxu0 0.0
        %2156 = vmatpush.msra.mxu0 0.0
        %2157 = vmatpush.msra.mxu0 0.0
        %2158 = vmatpush.msra.mxu0 0.0
        %2159 = vmatpush.msra.mxu0 0.0
        %2160 = vmatpush.msra.mxu0 0.0
        %2161 = vmatpush.msra.mxu0 0.0
        %2162 = vmatpush.msra.mxu0 0.0
        %2163 = vmatpush.msra.mxu0 0.0
        %2164 = vmatpush.msra.mxu0 0.0
        %2165 = vmatpush.msra.mxu0 0.0
        %2166 = vmatpush.msra.mxu0 0.0
        %2167 = vmatpush.msra.mxu0 %v2133
        %2168 = vmatpush.msra.mxu0 %v2123
        %2169 = vmatpush.msra.mxu0 %v2121
        %2170 = vmatpush.msra.mxu0 %v2119
        %2171 = vmatmul.f32.gmra.mxu0 %v2127
        %v2172 = vpop.f32.mrf.mxu0
        %v2173 = vadd.f32 0.0, %v2172
        %2174 = vdwg.mxu0
        %v2177 = vrot.slane %v2173, 7
        %v2178 = vsel %vm2064, %v2153, %v2177
        %v2180 = vadd.f32 %v2116, %v2178
        %s2181 = scalar_lea.vmem %s7, 128
        %v2182 = vld [vmem:[%s2181] sm:$0xff]
        %v2183 = vld [vmem:[%s2181 + $0x8] sm:$0xff]
        %v2184 = vld [vmem:[%s2181 + $0x10] sm:$0xff]
        %v2185 = vld [vmem:[%s2181 + $0x18] sm:$0xff]
        %v2186 = vld [vmem:[%s2181 + $0x20] sm:$0xff]
        %v2187 = vld [vmem:[%s2181 + $0x28] sm:$0xff]
        %v2188 = vld [vmem:[%s2181 + $0x30] sm:$0x1]
        %v2189 = vld [vmem:[%s2181 + $0x38] sm:$0x1]
        %v2190 = vrot.slane %v2047, 2
        %v2191 = vsel %vm2060, %v2190, 0
        %v2194 = vsel %vm2064, %v2188, 0
        %v2197 = vsel %vm2064, %v2189, 0
        %2199 = vmatpush.msra.mxu0 0.0
        %2200 = vmatpush.msra.mxu0 0.0
        %2201 = vmatpush.msra.mxu0 0.0
        %2202 = vmatpush.msra.mxu0 0.0
        %2203 = vmatpush.msra.mxu0 0.0
        %2204 = vmatpush.msra.mxu0 0.0
        %2205 = vmatpush.msra.mxu0 0.0
        %2206 = vmatpush.msra.mxu0 0.0
        %2207 = vmatpush.msra.mxu0 0.0
        %2208 = vmatpush.msra.mxu0 0.0
        %2209 = vmatpush.msra.mxu0 0.0
        %2210 = vmatpush.msra.mxu0 0.0
        %2211 = vmatpush.msra.mxu0 %v2194
        %2212 = vmatpush.msra.mxu0 %v2186
        %2213 = vmatpush.msra.mxu0 %v2184
        %2214 = vmatpush.msra.mxu0 %v2182
        %2215 = vmatmul.f32.gmra.mxu0 %v2191
        %v2216 = vpop.f32.mrf.mxu0
        %v2217 = vadd.f32 0.0, %v2216
        %2218 = vdwg.mxu0
        %2219 = vmatpush.msra.mxu0 0.0
        %2220 = vmatpush.msra.mxu0 0.0
        %2221 = vmatpush.msra.mxu0 0.0
        %2222 = vmatpush.msra.mxu0 0.0
        %2223 = vmatpush.msra.mxu0 0.0
        %2224 = vmatpush.msra.mxu0 0.0
        %2225 = vmatpush.msra.mxu0 0.0
        %2226 = vmatpush.msra.mxu0 0.0
        %2227 = vmatpush.msra.mxu0 0.0
        %2228 = vmatpush.msra.mxu0 0.0
        %2229 = vmatpush.msra.mxu0 0.0
        %2230 = vmatpush.msra.mxu0 0.0
        %2231 = vmatpush.msra.mxu0 %v2197
        %2232 = vmatpush.msra.mxu0 %v2187
        %2233 = vmatpush.msra.mxu0 %v2185
        %2234 = vmatpush.msra.mxu0 %v2183
        %2235 = vmatmul.f32.gmra.mxu0 %v2191
        %v2236 = vpop.f32.mrf.mxu0
        %v2237 = vadd.f32 0.0, %v2236
        %2238 = vdwg.mxu0
        %v2241 = vrot.slane %v2237, 7
        %v2242 = vsel %vm2064, %v2217, %v2241
        %v2244 = vadd.f32 %v2180, %v2242
        %s2245 = scalar_lea.vmem %s7, 192
        %v2246 = vld [vmem:[%s2245] sm:$0xff]
        %v2247 = vld [vmem:[%s2245 + $0x8] sm:$0xff]
        %v2248 = vld [vmem:[%s2245 + $0x10] sm:$0xff]
        %v2249 = vld [vmem:[%s2245 + $0x18] sm:$0xff]
        %v2250 = vld [vmem:[%s2245 + $0x20] sm:$0xff]
        %v2251 = vld [vmem:[%s2245 + $0x28] sm:$0xff]
        %v2252 = vld [vmem:[%s2245 + $0x30] sm:$0x1]
        %v2253 = vld [vmem:[%s2245 + $0x38] sm:$0x1]
        %v2254 = vrot.slane %v2047, 3
        %v2255 = vsel %vm2060, %v2254, 0
        %v2258 = vsel %vm2064, %v2252, 0
        %v2261 = vsel %vm2064, %v2253, 0
        %2263 = vmatpush.msra.mxu0 0.0
        %2264 = vmatpush.msra.mxu0 0.0
        %2265 = vmatpush.msra.mxu0 0.0
        %2266 = vmatpush.msra.mxu0 0.0
        %2267 = vmatpush.msra.mxu0 0.0
        %2268 = vmatpush.msra.mxu0 0.0
        %2269 = vmatpush.msra.mxu0 0.0
        %2270 = vmatpush.msra.mxu0 0.0
        %2271 = vmatpush.msra.mxu0 0.0
        %2272 = vmatpush.msra.mxu0 0.0
        %2273 = vmatpush.msra.mxu0 0.0
        %2274 = vmatpush.msra.mxu0 0.0
        %2275 = vmatpush.msra.mxu0 %v2258
        %2276 = vmatpush.msra.mxu0 %v2250
        %2277 = vmatpush.msra.mxu0 %v2248
        %2278 = vmatpush.msra.mxu0 %v2246
        %2279 = vmatmul.f32.gmra.mxu0 %v2255
        %v2280 = vpop.f32.mrf.mxu0
        %v2281 = vadd.f32 0.0, %v2280
        %2282 = vdwg.mxu0
        %2283 = vmatpush.msra.mxu0 0.0
        %2284 = vmatpush.msra.mxu0 0.0
        %2285 = vmatpush.msra.mxu0 0.0
        %2286 = vmatpush.msra.mxu0 0.0
        %2287 = vmatpush.msra.mxu0 0.0
        %2288 = vmatpush.msra.mxu0 0.0
        %2289 = vmatpush.msra.mxu0 0.0
        %2290 = vmatpush.msra.mxu0 0.0
        %2291 = vmatpush.msra.mxu0 0.0
        %2292 = vmatpush.msra.mxu0 0.0
        %2293 = vmatpush.msra.mxu0 0.0
        %2294 = vmatpush.msra.mxu0 0.0
        %2295 = vmatpush.msra.mxu0 %v2261
        %2296 = vmatpush.msra.mxu0 %v2251
        %2297 = vmatpush.msra.mxu0 %v2249
        %2298 = vmatpush.msra.mxu0 %v2247
        %2299 = vmatmul.f32.gmra.mxu0 %v2255
        %v2300 = vpop.f32.mrf.mxu0
        %v2301 = vadd.f32 0.0, %v2300
        %2302 = vdwg.mxu0
        %v2305 = vrot.slane %v2301, 7
        %v2306 = vsel %vm2064, %v2281, %v2305
        %v2308 = vadd.f32 %v2244, %v2306
        %s2309 = scalar_lea.vmem %s7, 256
        %v2310 = vld [vmem:[%s2309] sm:$0xff]
        %v2311 = vld [vmem:[%s2309 + $0x8] sm:$0xff]
        %v2312 = vld [vmem:[%s2309 + $0x10] sm:$0xff]
        %v2313 = vld [vmem:[%s2309 + $0x18] sm:$0xff]
        %v2314 = vld [vmem:[%s2309 + $0x20] sm:$0xff]
        %v2315 = vld [vmem:[%s2309 + $0x28] sm:$0xff]
        %v2316 = vld [vmem:[%s2309 + $0x30] sm:$0x1]
        %v2317 = vld [vmem:[%s2309 + $0x38] sm:$0x1]
        %v2318 = vrot.slane %v2047, 4
        %v2319 = vsel %vm2060, %v2318, 0
        %v2322 = vsel %vm2064, %v2316, 0
        %v2325 = vsel %vm2064, %v2317, 0
        %2327 = vmatpush.msra.mxu0 0.0
        %2328 = vmatpush.msra.mxu0 0.0
        %2329 = vmatpush.msra.mxu0 0.0
        %2330 = vmatpush.msra.mxu0 0.0
        %2331 = vmatpush.msra.mxu0 0.0
        %2332 = vmatpush.msra.mxu0 0.0
        %2333 = vmatpush.msra.mxu0 0.0
        %2334 = vmatpush.msra.mxu0 0.0
        %2335 = vmatpush.msra.mxu0 0.0
        %2336 = vmatpush.msra.mxu0 0.0
        %2337 = vmatpush.msra.mxu0 0.0
        %2338 = vmatpush.msra.mxu0 0.0
        %2339 = vmatpush.msra.mxu0 %v2322
        %2340 = vmatpush.msra.mxu0 %v2314
        %2341 = vmatpush.msra.mxu0 %v2312
        %2342 = vmatpush.msra.mxu0 %v2310
        %2343 = vmatmul.f32.gmra.mxu0 %v2319
        %v2344 = vpop.f32.mrf.mxu0
        %v2345 = vadd.f32 0.0, %v2344
        %2346 = vdwg.mxu0
        %2347 = vmatpush.msra.mxu0 0.0
        %2348 = vmatpush.msra.mxu0 0.0
        %2349 = vmatpush.msra.mxu0 0.0
        %2350 = vmatpush.msra.mxu0 0.0
        %2351 = vmatpush.msra.mxu0 0.0
        %2352 = vmatpush.msra.mxu0 0.0
        %2353 = vmatpush.msra.mxu0 0.0
        %2354 = vmatpush.msra.mxu0 0.0
        %2355 = vmatpush.msra.mxu0 0.0
        %2356 = vmatpush.msra.mxu0 0.0
        %2357 = vmatpush.msra.mxu0 0.0
        %2358 = vmatpush.msra.mxu0 0.0
        %2359 = vmatpush.msra.mxu0 %v2325
        %2360 = vmatpush.msra.mxu0 %v2315
        %2361 = vmatpush.msra.mxu0 %v2313
        %2362 = vmatpush.msra.mxu0 %v2311
        %2363 = vmatmul.f32.gmra.mxu0 %v2319
        %v2364 = vpop.f32.mrf.mxu0
        %v2365 = vadd.f32 0.0, %v2364
        %2366 = vdwg.mxu0
        %v2369 = vrot.slane %v2365, 7
        %v2370 = vsel %vm2064, %v2345, %v2369
        %v2372 = vadd.f32 %v2308, %v2370
        %s2373 = scalar_lea.vmem %s7, 320
        %v2374 = vld [vmem:[%s2373] sm:$0xff]
        %v2375 = vld [vmem:[%s2373 + $0x8] sm:$0xff]
        %v2376 = vld [vmem:[%s2373 + $0x10] sm:$0xff]
        %v2377 = vld [vmem:[%s2373 + $0x18] sm:$0xff]
        %v2378 = vld [vmem:[%s2373 + $0x20] sm:$0xff]
        %v2379 = vld [vmem:[%s2373 + $0x28] sm:$0xff]
        %v2380 = vld [vmem:[%s2373 + $0x30] sm:$0x1]
        %v2381 = vld [vmem:[%s2373 + $0x38] sm:$0x1]
        %v2382 = vrot.slane %v2047, 5
        %v2383 = vsel %vm2060, %v2382, 0
        %v2386 = vsel %vm2064, %v2380, 0
        %v2389 = vsel %vm2064, %v2381, 0
        %2391 = vmatpush.msra.mxu0 0.0
        %2392 = vmatpush.msra.mxu0 0.0
        %2393 = vmatpush.msra.mxu0 0.0
        %2394 = vmatpush.msra.mxu0 0.0
        %2395 = vmatpush.msra.mxu0 0.0
        %2396 = vmatpush.msra.mxu0 0.0
        %2397 = vmatpush.msra.mxu0 0.0
        %2398 = vmatpush.msra.mxu0 0.0
        %2399 = vmatpush.msra.mxu0 0.0
        %2400 = vmatpush.msra.mxu0 0.0
        %2401 = vmatpush.msra.mxu0 0.0
        %2402 = vmatpush.msra.mxu0 0.0
        %2403 = vmatpush.msra.mxu0 %v2386
        %2404 = vmatpush.msra.mxu0 %v2378
        %2405 = vmatpush.msra.mxu0 %v2376
        %2406 = vmatpush.msra.mxu0 %v2374
        %2407 = vmatmul.f32.gmra.mxu0 %v2383
        %v2408 = vpop.f32.mrf.mxu0
        %v2409 = vadd.f32 0.0, %v2408
        %2410 = vdwg.mxu0
        %2411 = vmatpush.msra.mxu0 0.0
        %2412 = vmatpush.msra.mxu0 0.0
        %2413 = vmatpush.msra.mxu0 0.0
        %2414 = vmatpush.msra.mxu0 0.0
        %2415 = vmatpush.msra.mxu0 0.0
        %2416 = vmatpush.msra.mxu0 0.0
        %2417 = vmatpush.msra.mxu0 0.0
        %2418 = vmatpush.msra.mxu0 0.0
        %2419 = vmatpush.msra.mxu0 0.0
        %2420 = vmatpush.msra.mxu0 0.0
        %2421 = vmatpush.msra.mxu0 0.0
        %2422 = vmatpush.msra.mxu0 0.0
        %2423 = vmatpush.msra.mxu0 %v2389
        %2424 = vmatpush.msra.mxu0 %v2379
        %2425 = vmatpush.msra.mxu0 %v2377
        %2426 = vmatpush.msra.mxu0 %v2375
        %2427 = vmatmul.f32.gmra.mxu0 %v2383
        %v2428 = vpop.f32.mrf.mxu0
        %v2429 = vadd.f32 0.0, %v2428
        %2430 = vdwg.mxu0
        %v2433 = vrot.slane %v2429, 7
        %v2434 = vsel %vm2064, %v2409, %v2433
        %v2436 = vadd.f32 %v2372, %v2434
        %s2437 = scalar_lea.vmem %s7, 384
        %v2438 = vld [vmem:[%s2437] sm:$0xff]
        %v2439 = vld [vmem:[%s2437 + $0x8] sm:$0xff]
        %v2440 = vld [vmem:[%s2437 + $0x10] sm:$0xff]
        %v2441 = vld [vmem:[%s2437 + $0x18] sm:$0xff]
        %v2442 = vld [vmem:[%s2437 + $0x20] sm:$0xff]
        %v2443 = vld [vmem:[%s2437 + $0x28] sm:$0xff]
        %v2444 = vld [vmem:[%s2437 + $0x30] sm:$0x1]
        %v2445 = vld [vmem:[%s2437 + $0x38] sm:$0x1]
        %v2446 = vrot.slane %v2047, 6
        %v2447 = vsel %vm2060, %v2446, 0
        %v2450 = vsel %vm2064, %v2444, 0
        %v2453 = vsel %vm2064, %v2445, 0
        %2455 = vmatpush.msra.mxu0 0.0
        %2456 = vmatpush.msra.mxu0 0.0
        %2457 = vmatpush.msra.mxu0 0.0
        %2458 = vmatpush.msra.mxu0 0.0
        %2459 = vmatpush.msra.mxu0 0.0
        %2460 = vmatpush.msra.mxu0 0.0
        %2461 = vmatpush.msra.mxu0 0.0
        %2462 = vmatpush.msra.mxu0 0.0
        %2463 = vmatpush.msra.mxu0 0.0
        %2464 = vmatpush.msra.mxu0 0.0
        %2465 = vmatpush.msra.mxu0 0.0
        %2466 = vmatpush.msra.mxu0 0.0
        %2467 = vmatpush.msra.mxu0 %v2450
        %2468 = vmatpush.msra.mxu0 %v2442
        %2469 = vmatpush.msra.mxu0 %v2440
        %2470 = vmatpush.msra.mxu0 %v2438
        %2471 = vmatmul.f32.gmra.mxu0 %v2447
        %v2472 = vpop.f32.mrf.mxu0
        %v2473 = vadd.f32 0.0, %v2472
        %2474 = vdwg.mxu0
        %2475 = vmatpush.msra.mxu0 0.0
        %2476 = vmatpush.msra.mxu0 0.0
        %2477 = vmatpush.msra.mxu0 0.0
        %2478 = vmatpush.msra.mxu0 0.0
        %2479 = vmatpush.msra.mxu0 0.0
        %2480 = vmatpush.msra.mxu0 0.0
        %2481 = vmatpush.msra.mxu0 0.0
        %2482 = vmatpush.msra.mxu0 0.0
        %2483 = vmatpush.msra.mxu0 0.0
        %2484 = vmatpush.msra.mxu0 0.0
        %2485 = vmatpush.msra.mxu0 0.0
        %2486 = vmatpush.msra.mxu0 0.0
        %2487 = vmatpush.msra.mxu0 %v2453
        %2488 = vmatpush.msra.mxu0 %v2443
        %2489 = vmatpush.msra.mxu0 %v2441
        %2490 = vmatpush.msra.mxu0 %v2439
        %2491 = vmatmul.f32.gmra.mxu0 %v2447
        %v2492 = vpop.f32.mrf.mxu0
        %v2493 = vadd.f32 0.0, %v2492
        %2494 = vdwg.mxu0
        %v2497 = vrot.slane %v2493, 7
        %v2498 = vsel %vm2064, %v2473, %v2497
        %v2500 = vadd.f32 %v2436, %v2498
        %s2501 = scalar_lea.vmem %s7, 448
        %v2502 = vld [vmem:[%s2501] sm:$0xff]
        %v2503 = vld [vmem:[%s2501 + $0x8] sm:$0xff]
        %v2504 = vld [vmem:[%s2501 + $0x10] sm:$0xff]
        %v2505 = vld [vmem:[%s2501 + $0x18] sm:$0xff]
        %v2506 = vld [vmem:[%s2501 + $0x20] sm:$0xff]
        %v2507 = vld [vmem:[%s2501 + $0x28] sm:$0xff]
        %v2508 = vld [vmem:[%s2501 + $0x30] sm:$0x1]
        %v2509 = vld [vmem:[%s2501 + $0x38] sm:$0x1]
        %v2510 = vrot.slane %v2047, 7
        %v2511 = vsel %vm2060, %v2510, 0
        %v2514 = vsel %vm2064, %v2508, 0
        %v2517 = vsel %vm2064, %v2509, 0
        %2519 = vmatpush.msra.mxu0 0.0
        %2520 = vmatpush.msra.mxu0 0.0
        %2521 = vmatpush.msra.mxu0 0.0
        %2522 = vmatpush.msra.mxu0 0.0
        %2523 = vmatpush.msra.mxu0 0.0
        %2524 = vmatpush.msra.mxu0 0.0
        %2525 = vmatpush.msra.mxu0 0.0
        %2526 = vmatpush.msra.mxu0 0.0
        %2527 = vmatpush.msra.mxu0 0.0
        %2528 = vmatpush.msra.mxu0 0.0
        %2529 = vmatpush.msra.mxu0 0.0
        %2530 = vmatpush.msra.mxu0 0.0
        %2531 = vmatpush.msra.mxu0 %v2514
        %2532 = vmatpush.msra.mxu0 %v2506
        %2533 = vmatpush.msra.mxu0 %v2504
        %2534 = vmatpush.msra.mxu0 %v2502
        %2535 = vmatmul.f32.gmra.mxu0 %v2511
        %v2536 = vpop.f32.mrf.mxu0
        %v2537 = vadd.f32 0.0, %v2536
        %2538 = vdwg.mxu0
        %2539 = vmatpush.msra.mxu0 0.0
        %2540 = vmatpush.msra.mxu0 0.0
        %2541 = vmatpush.msra.mxu0 0.0
        %2542 = vmatpush.msra.mxu0 0.0
        %2543 = vmatpush.msra.mxu0 0.0
        %2544 = vmatpush.msra.mxu0 0.0
        %2545 = vmatpush.msra.mxu0 0.0
        %2546 = vmatpush.msra.mxu0 0.0
        %2547 = vmatpush.msra.mxu0 0.0
        %2548 = vmatpush.msra.mxu0 0.0
        %2549 = vmatpush.msra.mxu0 0.0
        %2550 = vmatpush.msra.mxu0 0.0
        %2551 = vmatpush.msra.mxu0 %v2517
        %2552 = vmatpush.msra.mxu0 %v2507
        %2553 = vmatpush.msra.mxu0 %v2505
        %2554 = vmatpush.msra.mxu0 %v2503
        %2555 = vmatmul.f32.gmra.mxu0 %v2511
        %v2556 = vpop.f32.mrf.mxu0
        %v2557 = vadd.f32 0.0, %v2556
        %2558 = vdwg.mxu0
        %v2561 = vrot.slane %v2557, 7
        %v2562 = vsel %vm2064, %v2537, %v2561
        %v2564 = vadd.f32 %v2500, %v2562
        %s2565 = scalar_lea.vmem %s7, 512
        %v2566 = vld [vmem:[%s2565] sm:$0xff]
        %v2567 = vld [vmem:[%s2565 + $0x8] sm:$0xff]
        %v2568 = vld [vmem:[%s2565 + $0x10] sm:$0xff]
        %v2569 = vld [vmem:[%s2565 + $0x18] sm:$0xff]
        %v2570 = vld [vmem:[%s2565 + $0x20] sm:$0xff]
        %v2571 = vld [vmem:[%s2565 + $0x28] sm:$0xff]
        %v2572 = vld [vmem:[%s2565 + $0x30] sm:$0x1]
        %v2573 = vld [vmem:[%s2565 + $0x38] sm:$0x1]
        %v2575 = vsel %vm2060, %v2048, 0
        %v2578 = vsel %vm2064, %v2572, 0
        %v2581 = vsel %vm2064, %v2573, 0
        %2583 = vmatpush.msra.mxu0 0.0
        %2584 = vmatpush.msra.mxu0 0.0
        %2585 = vmatpush.msra.mxu0 0.0
        %2586 = vmatpush.msra.mxu0 0.0
        %2587 = vmatpush.msra.mxu0 0.0
        %2588 = vmatpush.msra.mxu0 0.0
        %2589 = vmatpush.msra.mxu0 0.0
        %2590 = vmatpush.msra.mxu0 0.0
        %2591 = vmatpush.msra.mxu0 0.0
        %2592 = vmatpush.msra.mxu0 0.0
        %2593 = vmatpush.msra.mxu0 0.0
        %2594 = vmatpush.msra.mxu0 0.0
        %2595 = vmatpush.msra.mxu0 %v2578
        %2596 = vmatpush.msra.mxu0 %v2570
        %2597 = vmatpush.msra.mxu0 %v2568
        %2598 = vmatpush.msra.mxu0 %v2566
        %2599 = vmatmul.f32.gmra.mxu0 %v2575
        %v2600 = vpop.f32.mrf.mxu0
        %v2601 = vadd.f32 0.0, %v2600
        %2602 = vdwg.mxu0
        %2603 = vmatpush.msra.mxu0 0.0
        %2604 = vmatpush.msra.mxu0 0.0
        %2605 = vmatpush.msra.mxu0 0.0
        %2606 = vmatpush.msra.mxu0 0.0
        %2607 = vmatpush.msra.mxu0 0.0
        %2608 = vmatpush.msra.mxu0 0.0
        %2609 = vmatpush.msra.mxu0 0.0
        %2610 = vmatpush.msra.mxu0 0.0
        %2611 = vmatpush.msra.mxu0 0.0
        %2612 = vmatpush.msra.mxu0 0.0
        %2613 = vmatpush.msra.mxu0 0.0
        %2614 = vmatpush.msra.mxu0 0.0
        %2615 = vmatpush.msra.mxu0 %v2581
        %2616 = vmatpush.msra.mxu0 %v2571
        %2617 = vmatpush.msra.mxu0 %v2569
        %2618 = vmatpush.msra.mxu0 %v2567
        %2619 = vmatmul.f32.gmra.mxu0 %v2575
        %v2620 = vpop.f32.mrf.mxu0
        %v2621 = vadd.f32 0.0, %v2620
        %2622 = vdwg.mxu0
        %v2625 = vrot.slane %v2621, 7
        %v2626 = vsel %vm2064, %v2601, %v2625
        %v2628 = vadd.f32 %v2564, %v2626
        %s2629 = scalar_lea.vmem %s7, 576
        %v2630 = vld [vmem:[%s2629] sm:$0xff]
        %v2631 = vld [vmem:[%s2629 + $0x8] sm:$0xff]
        %v2632 = vld [vmem:[%s2629 + $0x10] sm:$0xff]
        %v2633 = vld [vmem:[%s2629 + $0x18] sm:$0xff]
        %v2634 = vld [vmem:[%s2629 + $0x20] sm:$0xff]
        %v2635 = vld [vmem:[%s2629 + $0x28] sm:$0xff]
        %v2636 = vld [vmem:[%s2629 + $0x30] sm:$0x1]
        %v2637 = vld [vmem:[%s2629 + $0x38] sm:$0x1]
        %v2638 = vrot.slane %v2048, 1
        %v2639 = vsel %vm2060, %v2638, 0
        %v2642 = vsel %vm2064, %v2636, 0
        %v2645 = vsel %vm2064, %v2637, 0
        %2647 = vmatpush.msra.mxu0 0.0
        %2648 = vmatpush.msra.mxu0 0.0
        %2649 = vmatpush.msra.mxu0 0.0
        %2650 = vmatpush.msra.mxu0 0.0
        %2651 = vmatpush.msra.mxu0 0.0
        %2652 = vmatpush.msra.mxu0 0.0
        %2653 = vmatpush.msra.mxu0 0.0
        %2654 = vmatpush.msra.mxu0 0.0
        %2655 = vmatpush.msra.mxu0 0.0
        %2656 = vmatpush.msra.mxu0 0.0
        %2657 = vmatpush.msra.mxu0 0.0
        %2658 = vmatpush.msra.mxu0 0.0
        %2659 = vmatpush.msra.mxu0 %v2642
        %2660 = vmatpush.msra.mxu0 %v2634
        %2661 = vmatpush.msra.mxu0 %v2632
        %2662 = vmatpush.msra.mxu0 %v2630
        %2663 = vmatmul.f32.gmra.mxu0 %v2639
        %v2664 = vpop.f32.mrf.mxu0
        %v2665 = vadd.f32 0.0, %v2664
        %2666 = vdwg.mxu0
        %2667 = vmatpush.msra.mxu0 0.0
        %2668 = vmatpush.msra.mxu0 0.0
        %2669 = vmatpush.msra.mxu0 0.0
        %2670 = vmatpush.msra.mxu0 0.0
        %2671 = vmatpush.msra.mxu0 0.0
        %2672 = vmatpush.msra.mxu0 0.0
        %2673 = vmatpush.msra.mxu0 0.0
        %2674 = vmatpush.msra.mxu0 0.0
        %2675 = vmatpush.msra.mxu0 0.0
        %2676 = vmatpush.msra.mxu0 0.0
        %2677 = vmatpush.msra.mxu0 0.0
        %2678 = vmatpush.msra.mxu0 0.0
        %2679 = vmatpush.msra.mxu0 %v2645
        %2680 = vmatpush.msra.mxu0 %v2635
        %2681 = vmatpush.msra.mxu0 %v2633
        %2682 = vmatpush.msra.mxu0 %v2631
        %2683 = vmatmul.f32.gmra.mxu0 %v2639
        %v2684 = vpop.f32.mrf.mxu0
        %v2685 = vadd.f32 0.0, %v2684
        %2686 = vdwg.mxu0
        %v2689 = vrot.slane %v2685, 7
        %v2690 = vsel %vm2064, %v2665, %v2689
        %v2692 = vadd.f32 %v2628, %v2690
        %s2693 = scalar_lea.vmem %s7, 640
        %v2694 = vld [vmem:[%s2693] sm:$0xff]
        %v2695 = vld [vmem:[%s2693 + $0x8] sm:$0xff]
        %v2696 = vld [vmem:[%s2693 + $0x10] sm:$0xff]
        %v2697 = vld [vmem:[%s2693 + $0x18] sm:$0xff]
        %v2698 = vld [vmem:[%s2693 + $0x20] sm:$0xff]
        %v2699 = vld [vmem:[%s2693 + $0x28] sm:$0xff]
        %v2700 = vld [vmem:[%s2693 + $0x30] sm:$0x1]
        %v2701 = vld [vmem:[%s2693 + $0x38] sm:$0x1]
        %v2702 = vrot.slane %v2048, 2
        %v2703 = vsel %vm2060, %v2702, 0
        %v2706 = vsel %vm2064, %v2700, 0
        %v2709 = vsel %vm2064, %v2701, 0
        %2711 = vmatpush.msra.mxu0 0.0
        %2712 = vmatpush.msra.mxu0 0.0
        %2713 = vmatpush.msra.mxu0 0.0
        %2714 = vmatpush.msra.mxu0 0.0
        %2715 = vmatpush.msra.mxu0 0.0
        %2716 = vmatpush.msra.mxu0 0.0
        %2717 = vmatpush.msra.mxu0 0.0
        %2718 = vmatpush.msra.mxu0 0.0
        %2719 = vmatpush.msra.mxu0 0.0
        %2720 = vmatpush.msra.mxu0 0.0
        %2721 = vmatpush.msra.mxu0 0.0
        %2722 = vmatpush.msra.mxu0 0.0
        %2723 = vmatpush.msra.mxu0 %v2706
        %2724 = vmatpush.msra.mxu0 %v2698
        %2725 = vmatpush.msra.mxu0 %v2696
        %2726 = vmatpush.msra.mxu0 %v2694
        %2727 = vmatmul.f32.gmra.mxu0 %v2703
        %v2728 = vpop.f32.mrf.mxu0
        %v2729 = vadd.f32 0.0, %v2728
        %2730 = vdwg.mxu0
        %2731 = vmatpush.msra.mxu0 0.0
        %2732 = vmatpush.msra.mxu0 0.0
        %2733 = vmatpush.msra.mxu0 0.0
        %2734 = vmatpush.msra.mxu0 0.0
        %2735 = vmatpush.msra.mxu0 0.0
        %2736 = vmatpush.msra.mxu0 0.0
        %2737 = vmatpush.msra.mxu0 0.0
        %2738 = vmatpush.msra.mxu0 0.0
        %2739 = vmatpush.msra.mxu0 0.0
        %2740 = vmatpush.msra.mxu0 0.0
        %2741 = vmatpush.msra.mxu0 0.0
        %2742 = vmatpush.msra.mxu0 0.0
        %2743 = vmatpush.msra.mxu0 %v2709
        %2744 = vmatpush.msra.mxu0 %v2699
        %2745 = vmatpush.msra.mxu0 %v2697
        %2746 = vmatpush.msra.mxu0 %v2695
        %2747 = vmatmul.f32.gmra.mxu0 %v2703
        %v2748 = vpop.f32.mrf.mxu0
        %v2749 = vadd.f32 0.0, %v2748
        %2750 = vdwg.mxu0
        %v2753 = vrot.slane %v2749, 7
        %v2754 = vsel %vm2064, %v2729, %v2753
        %v2756 = vadd.f32 %v2692, %v2754
        %s2757 = scalar_lea.vmem %s7, 704
        %v2758 = vld [vmem:[%s2757] sm:$0xff]
        %v2759 = vld [vmem:[%s2757 + $0x8] sm:$0xff]
        %v2760 = vld [vmem:[%s2757 + $0x10] sm:$0xff]
        %v2761 = vld [vmem:[%s2757 + $0x18] sm:$0xff]
        %v2762 = vld [vmem:[%s2757 + $0x20] sm:$0xff]
        %v2763 = vld [vmem:[%s2757 + $0x28] sm:$0xff]
        %v2764 = vld [vmem:[%s2757 + $0x30] sm:$0x1]
        %v2765 = vld [vmem:[%s2757 + $0x38] sm:$0x1]
        %v2766 = vrot.slane %v2048, 3
        %v2767 = vsel %vm2060, %v2766, 0
        %v2770 = vsel %vm2064, %v2764, 0
        %v2773 = vsel %vm2064, %v2765, 0
        %2775 = vmatpush.msra.mxu0 0.0
        %2776 = vmatpush.msra.mxu0 0.0
        %2777 = vmatpush.msra.mxu0 0.0
        %2778 = vmatpush.msra.mxu0 0.0
        %2779 = vmatpush.msra.mxu0 0.0
        %2780 = vmatpush.msra.mxu0 0.0
        %2781 = vmatpush.msra.mxu0 0.0
        %2782 = vmatpush.msra.mxu0 0.0
        %2783 = vmatpush.msra.mxu0 0.0
        %2784 = vmatpush.msra.mxu0 0.0
        %2785 = vmatpush.msra.mxu0 0.0
        %2786 = vmatpush.msra.mxu0 0.0
        %2787 = vmatpush.msra.mxu0 %v2770
        %2788 = vmatpush.msra.mxu0 %v2762
        %2789 = vmatpush.msra.mxu0 %v2760
        %2790 = vmatpush.msra.mxu0 %v2758
        %2791 = vmatmul.f32.gmra.mxu0 %v2767
        %v2792 = vpop.f32.mrf.mxu0
        %v2793 = vadd.f32 0.0, %v2792
        %2794 = vdwg.mxu0
        %2795 = vmatpush.msra.mxu0 0.0
        %2796 = vmatpush.msra.mxu0 0.0
        %2797 = vmatpush.msra.mxu0 0.0
        %2798 = vmatpush.msra.mxu0 0.0
        %2799 = vmatpush.msra.mxu0 0.0
        %2800 = vmatpush.msra.mxu0 0.0
        %2801 = vmatpush.msra.mxu0 0.0
        %2802 = vmatpush.msra.mxu0 0.0
        %2803 = vmatpush.msra.mxu0 0.0
        %2804 = vmatpush.msra.mxu0 0.0
        %2805 = vmatpush.msra.mxu0 0.0
        %2806 = vmatpush.msra.mxu0 0.0
        %2807 = vmatpush.msra.mxu0 %v2773
        %2808 = vmatpush.msra.mxu0 %v2763
        %2809 = vmatpush.msra.mxu0 %v2761
        %2810 = vmatpush.msra.mxu0 %v2759
        %2811 = vmatmul.f32.gmra.mxu0 %v2767
        %v2812 = vpop.f32.mrf.mxu0
        %v2813 = vadd.f32 0.0, %v2812
        %2814 = vdwg.mxu0
        %v2817 = vrot.slane %v2813, 7
        %v2818 = vsel %vm2064, %v2793, %v2817
        %v2820 = vadd.f32 %v2756, %v2818
        %s2821 = scalar_lea.vmem %s7, 768
        %v2822 = vld [vmem:[%s2821] sm:$0xff]
        %v2823 = vld [vmem:[%s2821 + $0x8] sm:$0xff]
        %v2824 = vld [vmem:[%s2821 + $0x10] sm:$0xff]
        %v2825 = vld [vmem:[%s2821 + $0x18] sm:$0xff]
        %v2826 = vld [vmem:[%s2821 + $0x20] sm:$0xff]
        %v2827 = vld [vmem:[%s2821 + $0x28] sm:$0xff]
        %v2828 = vld [vmem:[%s2821 + $0x30] sm:$0x1]
        %v2829 = vld [vmem:[%s2821 + $0x38] sm:$0x1]
        %v2830 = vrot.slane %v2048, 4
        %v2831 = vsel %vm2060, %v2830, 0
        %v2834 = vsel %vm2064, %v2828, 0
        %v2837 = vsel %vm2064, %v2829, 0
        %2839 = vmatpush.msra.mxu0 0.0
        %2840 = vmatpush.msra.mxu0 0.0
        %2841 = vmatpush.msra.mxu0 0.0
        %2842 = vmatpush.msra.mxu0 0.0
        %2843 = vmatpush.msra.mxu0 0.0
        %2844 = vmatpush.msra.mxu0 0.0
        %2845 = vmatpush.msra.mxu0 0.0
        %2846 = vmatpush.msra.mxu0 0.0
        %2847 = vmatpush.msra.mxu0 0.0
        %2848 = vmatpush.msra.mxu0 0.0
        %2849 = vmatpush.msra.mxu0 0.0
        %2850 = vmatpush.msra.mxu0 0.0
        %2851 = vmatpush.msra.mxu0 %v2834
        %2852 = vmatpush.msra.mxu0 %v2826
        %2853 = vmatpush.msra.mxu0 %v2824
        %2854 = vmatpush.msra.mxu0 %v2822
        %2855 = vmatmul.f32.gmra.mxu0 %v2831
        %v2856 = vpop.f32.mrf.mxu0
        %v2857 = vadd.f32 0.0, %v2856
        %2858 = vdwg.mxu0
        %2859 = vmatpush.msra.mxu0 0.0
        %2860 = vmatpush.msra.mxu0 0.0
        %2861 = vmatpush.msra.mxu0 0.0
        %2862 = vmatpush.msra.mxu0 0.0
        %2863 = vmatpush.msra.mxu0 0.0
        %2864 = vmatpush.msra.mxu0 0.0
        %2865 = vmatpush.msra.mxu0 0.0
        %2866 = vmatpush.msra.mxu0 0.0
        %2867 = vmatpush.msra.mxu0 0.0
        %2868 = vmatpush.msra.mxu0 0.0
        %2869 = vmatpush.msra.mxu0 0.0
        %2870 = vmatpush.msra.mxu0 0.0
        %2871 = vmatpush.msra.mxu0 %v2837
        %2872 = vmatpush.msra.mxu0 %v2827
        %2873 = vmatpush.msra.mxu0 %v2825
        %2874 = vmatpush.msra.mxu0 %v2823
        %2875 = vmatmul.f32.gmra.mxu0 %v2831
        %v2876 = vpop.f32.mrf.mxu0
        %v2877 = vadd.f32 0.0, %v2876
        %2878 = vdwg.mxu0
        %v2881 = vrot.slane %v2877, 7
        %v2882 = vsel %vm2064, %v2857, %v2881
        %v2884 = vadd.f32 %v2820, %v2882
        %s2885 = scalar_lea.vmem %s7, 832
        %v2886 = vld [vmem:[%s2885] sm:$0xff]
        %v2887 = vld [vmem:[%s2885 + $0x8] sm:$0xff]
        %v2888 = vld [vmem:[%s2885 + $0x10] sm:$0xff]
        %v2889 = vld [vmem:[%s2885 + $0x18] sm:$0xff]
        %v2890 = vld [vmem:[%s2885 + $0x20] sm:$0xff]
        %v2891 = vld [vmem:[%s2885 + $0x28] sm:$0xff]
        %v2892 = vld [vmem:[%s2885 + $0x30] sm:$0x1]
        %v2893 = vld [vmem:[%s2885 + $0x38] sm:$0x1]
        %v2894 = vrot.slane %v2048, 5
        %v2895 = vsel %vm2060, %v2894, 0
        %v2898 = vsel %vm2064, %v2892, 0
        %v2901 = vsel %vm2064, %v2893, 0
        %2903 = vmatpush.msra.mxu0 0.0
        %2904 = vmatpush.msra.mxu0 0.0
        %2905 = vmatpush.msra.mxu0 0.0
        %2906 = vmatpush.msra.mxu0 0.0
        %2907 = vmatpush.msra.mxu0 0.0
        %2908 = vmatpush.msra.mxu0 0.0
        %2909 = vmatpush.msra.mxu0 0.0
        %2910 = vmatpush.msra.mxu0 0.0
        %2911 = vmatpush.msra.mxu0 0.0
        %2912 = vmatpush.msra.mxu0 0.0
        %2913 = vmatpush.msra.mxu0 0.0
        %2914 = vmatpush.msra.mxu0 0.0
        %2915 = vmatpush.msra.mxu0 %v2898
        %2916 = vmatpush.msra.mxu0 %v2890
        %2917 = vmatpush.msra.mxu0 %v2888
        %2918 = vmatpush.msra.mxu0 %v2886
        %2919 = vmatmul.f32.gmra.mxu0 %v2895
        %v2920 = vpop.f32.mrf.mxu0
        %v2921 = vadd.f32 0.0, %v2920
        %2922 = vdwg.mxu0
        %2923 = vmatpush.msra.mxu0 0.0
        %2924 = vmatpush.msra.mxu0 0.0
        %2925 = vmatpush.msra.mxu0 0.0
        %2926 = vmatpush.msra.mxu0 0.0
        %2927 = vmatpush.msra.mxu0 0.0
        %2928 = vmatpush.msra.mxu0 0.0
        %2929 = vmatpush.msra.mxu0 0.0
        %2930 = vmatpush.msra.mxu0 0.0
        %2931 = vmatpush.msra.mxu0 0.0
        %2932 = vmatpush.msra.mxu0 0.0
        %2933 = vmatpush.msra.mxu0 0.0
        %2934 = vmatpush.msra.mxu0 0.0
        %2935 = vmatpush.msra.mxu0 %v2901
        %2936 = vmatpush.msra.mxu0 %v2891
        %2937 = vmatpush.msra.mxu0 %v2889
        %2938 = vmatpush.msra.mxu0 %v2887
        %2939 = vmatmul.f32.gmra.mxu0 %v2895
        %v2940 = vpop.f32.mrf.mxu0
        %v2941 = vadd.f32 0.0, %v2940
        %2942 = vdwg.mxu0
        %v2945 = vrot.slane %v2941, 7
        %v2946 = vsel %vm2064, %v2921, %v2945
        %v2948 = vadd.f32 %v2884, %v2946
        %s2949 = scalar_lea.vmem %s7, 896
        %v2950 = vld [vmem:[%s2949] sm:$0xff]
        %v2951 = vld [vmem:[%s2949 + $0x8] sm:$0xff]
        %v2952 = vld [vmem:[%s2949 + $0x10] sm:$0xff]
        %v2953 = vld [vmem:[%s2949 + $0x18] sm:$0xff]
        %v2954 = vld [vmem:[%s2949 + $0x20] sm:$0xff]
        %v2955 = vld [vmem:[%s2949 + $0x28] sm:$0xff]
        %v2956 = vld [vmem:[%s2949 + $0x30] sm:$0x1]
        %v2957 = vld [vmem:[%s2949 + $0x38] sm:$0x1]
        %v2958 = vrot.slane %v2048, 6
        %v2959 = vsel %vm2060, %v2958, 0
        %v2962 = vsel %vm2064, %v2956, 0
        %v2965 = vsel %vm2064, %v2957, 0
        %2967 = vmatpush.msra.mxu0 0.0
        %2968 = vmatpush.msra.mxu0 0.0
        %2969 = vmatpush.msra.mxu0 0.0
        %2970 = vmatpush.msra.mxu0 0.0
        %2971 = vmatpush.msra.mxu0 0.0
        %2972 = vmatpush.msra.mxu0 0.0
        %2973 = vmatpush.msra.mxu0 0.0
        %2974 = vmatpush.msra.mxu0 0.0
        %2975 = vmatpush.msra.mxu0 0.0
        %2976 = vmatpush.msra.mxu0 0.0
        %2977 = vmatpush.msra.mxu0 0.0
        %2978 = vmatpush.msra.mxu0 0.0
        %2979 = vmatpush.msra.mxu0 %v2962
        %2980 = vmatpush.msra.mxu0 %v2954
        %2981 = vmatpush.msra.mxu0 %v2952
        %2982 = vmatpush.msra.mxu0 %v2950
        %2983 = vmatmul.f32.gmra.mxu0 %v2959
        %v2984 = vpop.f32.mrf.mxu0
        %v2985 = vadd.f32 0.0, %v2984
        %2986 = vdwg.mxu0
        %2987 = vmatpush.msra.mxu0 0.0
        %2988 = vmatpush.msra.mxu0 0.0
        %2989 = vmatpush.msra.mxu0 0.0
        %2990 = vmatpush.msra.mxu0 0.0
        %2991 = vmatpush.msra.mxu0 0.0
        %2992 = vmatpush.msra.mxu0 0.0
        %2993 = vmatpush.msra.mxu0 0.0
        %2994 = vmatpush.msra.mxu0 0.0
        %2995 = vmatpush.msra.mxu0 0.0
        %2996 = vmatpush.msra.mxu0 0.0
        %2997 = vmatpush.msra.mxu0 0.0
        %2998 = vmatpush.msra.mxu0 0.0
        %2999 = vmatpush.msra.mxu0 %v2965
        %3000 = vmatpush.msra.mxu0 %v2955
        %3001 = vmatpush.msra.mxu0 %v2953
        %3002 = vmatpush.msra.mxu0 %v2951
        %3003 = vmatmul.f32.gmra.mxu0 %v2959
        %v3004 = vpop.f32.mrf.mxu0
        %v3005 = vadd.f32 0.0, %v3004
        %3006 = vdwg.mxu0
        %v3009 = vrot.slane %v3005, 7
        %v3010 = vsel %vm2064, %v2985, %v3009
        %v3012 = vadd.f32 %v2948, %v3010
        %s3013 = scalar_lea.vmem %s7, 960
        %v3014 = vld [vmem:[%s3013] sm:$0xff]
        %v3015 = vld [vmem:[%s3013 + $0x8] sm:$0xff]
        %v3016 = vld [vmem:[%s3013 + $0x10] sm:$0xff]
        %v3017 = vld [vmem:[%s3013 + $0x18] sm:$0xff]
        %v3018 = vld [vmem:[%s3013 + $0x20] sm:$0xff]
        %v3019 = vld [vmem:[%s3013 + $0x28] sm:$0xff]
        %v3020 = vld [vmem:[%s3013 + $0x30] sm:$0x1]
        %v3021 = vld [vmem:[%s3013 + $0x38] sm:$0x1]
        %v3022 = vrot.slane %v2048, 7
        %v3023 = vsel %vm2060, %v3022, 0
        %v3026 = vsel %vm2064, %v3020, 0
        %v3029 = vsel %vm2064, %v3021, 0
        %3031 = vmatpush.msra.mxu0 0.0
        %3032 = vmatpush.msra.mxu0 0.0
        %3033 = vmatpush.msra.mxu0 0.0
        %3034 = vmatpush.msra.mxu0 0.0
        %3035 = vmatpush.msra.mxu0 0.0
        %3036 = vmatpush.msra.mxu0 0.0
        %3037 = vmatpush.msra.mxu0 0.0
        %3038 = vmatpush.msra.mxu0 0.0
        %3039 = vmatpush.msra.mxu0 0.0
        %3040 = vmatpush.msra.mxu0 0.0
        %3041 = vmatpush.msra.mxu0 0.0
        %3042 = vmatpush.msra.mxu0 0.0
        %3043 = vmatpush.msra.mxu0 %v3026
        %3044 = vmatpush.msra.mxu0 %v3018
        %3045 = vmatpush.msra.mxu0 %v3016
        %3046 = vmatpush.msra.mxu0 %v3014
        %3047 = vmatmul.f32.gmra.mxu0 %v3023
        %v3048 = vpop.f32.mrf.mxu0
        %v3049 = vadd.f32 0.0, %v3048
        %3050 = vdwg.mxu0
        %3051 = vmatpush.msra.mxu0 0.0
        %3052 = vmatpush.msra.mxu0 0.0
        %3053 = vmatpush.msra.mxu0 0.0
        %3054 = vmatpush.msra.mxu0 0.0
        %3055 = vmatpush.msra.mxu0 0.0
        %3056 = vmatpush.msra.mxu0 0.0
        %3057 = vmatpush.msra.mxu0 0.0
        %3058 = vmatpush.msra.mxu0 0.0
        %3059 = vmatpush.msra.mxu0 0.0
        %3060 = vmatpush.msra.mxu0 0.0
        %3061 = vmatpush.msra.mxu0 0.0
        %3062 = vmatpush.msra.mxu0 0.0
        %3063 = vmatpush.msra.mxu0 %v3029
        %3064 = vmatpush.msra.mxu0 %v3019
        %3065 = vmatpush.msra.mxu0 %v3017
        %3066 = vmatpush.msra.mxu0 %v3015
        %3067 = vmatmul.f32.gmra.mxu0 %v3023
        %v3068 = vpop.f32.mrf.mxu0
        %v3069 = vadd.f32 0.0, %v3068
        %3070 = vdwg.mxu0
        %v3073 = vrot.slane %v3069, 7
        %v3074 = vsel %vm2064, %v3049, %v3073
        %v3076 = vadd.f32 %v3012, %v3074
        %s3077 = scalar_lea.vmem %s7, 1024
        %v3078 = vld [vmem:[%s3077] sm:$0xff]
        %v3079 = vld [vmem:[%s3077 + $0x8] sm:$0xff]
        %v3080 = vld [vmem:[%s3077 + $0x10] sm:$0xff]
        %v3081 = vld [vmem:[%s3077 + $0x18] sm:$0xff]
        %v3082 = vld [vmem:[%s3077 + $0x20] sm:$0xff]
        %v3083 = vld [vmem:[%s3077 + $0x28] sm:$0xff]
        %v3084 = vld [vmem:[%s3077 + $0x30] sm:$0x1]
        %v3085 = vld [vmem:[%s3077 + $0x38] sm:$0x1]
        %v3087 = vsel %vm2060, %v2049, 0
        %v3090 = vsel %vm2064, %v3084, 0
        %v3093 = vsel %vm2064, %v3085, 0
        %3095 = vmatpush.msra.mxu0 0.0
        %3096 = vmatpush.msra.mxu0 0.0
        %3097 = vmatpush.msra.mxu0 0.0
        %3098 = vmatpush.msra.mxu0 0.0
        %3099 = vmatpush.msra.mxu0 0.0
        %3100 = vmatpush.msra.mxu0 0.0
        %3101 = vmatpush.msra.mxu0 0.0
        %3102 = vmatpush.msra.mxu0 0.0
        %3103 = vmatpush.msra.mxu0 0.0
        %3104 = vmatpush.msra.mxu0 0.0
        %3105 = vmatpush.msra.mxu0 0.0
        %3106 = vmatpush.msra.mxu0 0.0
        %3107 = vmatpush.msra.mxu0 %v3090
        %3108 = vmatpush.msra.mxu0 %v3082
        %3109 = vmatpush.msra.mxu0 %v3080
        %3110 = vmatpush.msra.mxu0 %v3078
        %3111 = vmatmul.f32.gmra.mxu0 %v3087
        %v3112 = vpop.f32.mrf.mxu0
        %v3113 = vadd.f32 0.0, %v3112
        %3114 = vdwg.mxu0
        %3115 = vmatpush.msra.mxu0 0.0
        %3116 = vmatpush.msra.mxu0 0.0
        %3117 = vmatpush.msra.mxu0 0.0
        %3118 = vmatpush.msra.mxu0 0.0
        %3119 = vmatpush.msra.mxu0 0.0
        %3120 = vmatpush.msra.mxu0 0.0
        %3121 = vmatpush.msra.mxu0 0.0
        %3122 = vmatpush.msra.mxu0 0.0
        %3123 = vmatpush.msra.mxu0 0.0
        %3124 = vmatpush.msra.mxu0 0.0
        %3125 = vmatpush.msra.mxu0 0.0
        %3126 = vmatpush.msra.mxu0 0.0
        %3127 = vmatpush.msra.mxu0 %v3093
        %3128 = vmatpush.msra.mxu0 %v3083
        %3129 = vmatpush.msra.mxu0 %v3081
        %3130 = vmatpush.msra.mxu0 %v3079
        %3131 = vmatmul.f32.gmra.mxu0 %v3087
        %v3132 = vpop.f32.mrf.mxu0
        %v3133 = vadd.f32 0.0, %v3132
        %3134 = vdwg.mxu0
        %v3137 = vrot.slane %v3133, 7
        %v3138 = vsel %vm2064, %v3113, %v3137
        %v3140 = vadd.f32 %v3076, %v3138
        %s3141 = scalar_lea.vmem %s7, 1088
        %v3142 = vld [vmem:[%s3141] sm:$0xff]
        %v3143 = vld [vmem:[%s3141 + $0x8] sm:$0xff]
        %v3144 = vld [vmem:[%s3141 + $0x10] sm:$0xff]
        %v3145 = vld [vmem:[%s3141 + $0x18] sm:$0xff]
        %v3146 = vld [vmem:[%s3141 + $0x20] sm:$0xff]
        %v3147 = vld [vmem:[%s3141 + $0x28] sm:$0xff]
        %v3148 = vld [vmem:[%s3141 + $0x30] sm:$0x1]
        %v3149 = vld [vmem:[%s3141 + $0x38] sm:$0x1]
        %v3150 = vrot.slane %v2049, 1
        %v3151 = vsel %vm2060, %v3150, 0
        %v3154 = vsel %vm2064, %v3148, 0
        %v3157 = vsel %vm2064, %v3149, 0
        %3159 = vmatpush.msra.mxu0 0.0
        %3160 = vmatpush.msra.mxu0 0.0
        %3161 = vmatpush.msra.mxu0 0.0
        %3162 = vmatpush.msra.mxu0 0.0
        %3163 = vmatpush.msra.mxu0 0.0
        %3164 = vmatpush.msra.mxu0 0.0
        %3165 = vmatpush.msra.mxu0 0.0
        %3166 = vmatpush.msra.mxu0 0.0
        %3167 = vmatpush.msra.mxu0 0.0
        %3168 = vmatpush.msra.mxu0 0.0
        %3169 = vmatpush.msra.mxu0 0.0
        %3170 = vmatpush.msra.mxu0 0.0
        %3171 = vmatpush.msra.mxu0 %v3154
        %3172 = vmatpush.msra.mxu0 %v3146
        %3173 = vmatpush.msra.mxu0 %v3144
        %3174 = vmatpush.msra.mxu0 %v3142
        %3175 = vmatmul.f32.gmra.mxu0 %v3151
        %v3176 = vpop.f32.mrf.mxu0
        %v3177 = vadd.f32 0.0, %v3176
        %3178 = vdwg.mxu0
        %3179 = vmatpush.msra.mxu0 0.0
        %3180 = vmatpush.msra.mxu0 0.0
        %3181 = vmatpush.msra.mxu0 0.0
        %3182 = vmatpush.msra.mxu0 0.0
        %3183 = vmatpush.msra.mxu0 0.0
        %3184 = vmatpush.msra.mxu0 0.0
        %3185 = vmatpush.msra.mxu0 0.0
        %3186 = vmatpush.msra.mxu0 0.0
        %3187 = vmatpush.msra.mxu0 0.0
        %3188 = vmatpush.msra.mxu0 0.0
        %3189 = vmatpush.msra.mxu0 0.0
        %3190 = vmatpush.msra.mxu0 0.0
        %3191 = vmatpush.msra.mxu0 %v3157
        %3192 = vmatpush.msra.mxu0 %v3147
        %3193 = vmatpush.msra.mxu0 %v3145
        %3194 = vmatpush.msra.mxu0 %v3143
        %3195 = vmatmul.f32.gmra.mxu0 %v3151
        %v3196 = vpop.f32.mrf.mxu0
        %v3197 = vadd.f32 0.0, %v3196
        %3198 = vdwg.mxu0
        %v3201 = vrot.slane %v3197, 7
        %v3202 = vsel %vm2064, %v3177, %v3201
        %v3204 = vadd.f32 %v3140, %v3202
        %s3205 = scalar_lea.vmem %s7, 1152
        %v3206 = vld [vmem:[%s3205] sm:$0xff]
        %v3207 = vld [vmem:[%s3205 + $0x8] sm:$0xff]
        %v3208 = vld [vmem:[%s3205 + $0x10] sm:$0xff]
        %v3209 = vld [vmem:[%s3205 + $0x18] sm:$0xff]
        %v3210 = vld [vmem:[%s3205 + $0x20] sm:$0xff]
        %v3211 = vld [vmem:[%s3205 + $0x28] sm:$0xff]
        %v3212 = vld [vmem:[%s3205 + $0x30] sm:$0x1]
        %v3213 = vld [vmem:[%s3205 + $0x38] sm:$0x1]
        %v3214 = vrot.slane %v2049, 2
        %v3215 = vsel %vm2060, %v3214, 0
        %v3218 = vsel %vm2064, %v3212, 0
        %v3221 = vsel %vm2064, %v3213, 0
        %3223 = vmatpush.msra.mxu0 0.0
        %3224 = vmatpush.msra.mxu0 0.0
        %3225 = vmatpush.msra.mxu0 0.0
        %3226 = vmatpush.msra.mxu0 0.0
        %3227 = vmatpush.msra.mxu0 0.0
        %3228 = vmatpush.msra.mxu0 0.0
        %3229 = vmatpush.msra.mxu0 0.0
        %3230 = vmatpush.msra.mxu0 0.0
        %3231 = vmatpush.msra.mxu0 0.0
        %3232 = vmatpush.msra.mxu0 0.0
        %3233 = vmatpush.msra.mxu0 0.0
        %3234 = vmatpush.msra.mxu0 0.0
        %3235 = vmatpush.msra.mxu0 %v3218
        %3236 = vmatpush.msra.mxu0 %v3210
        %3237 = vmatpush.msra.mxu0 %v3208
        %3238 = vmatpush.msra.mxu0 %v3206
        %3239 = vmatmul.f32.gmra.mxu0 %v3215
        %v3240 = vpop.f32.mrf.mxu0
        %v3241 = vadd.f32 0.0, %v3240
        %3242 = vdwg.mxu0
        %3243 = vmatpush.msra.mxu0 0.0
        %3244 = vmatpush.msra.mxu0 0.0
        %3245 = vmatpush.msra.mxu0 0.0
        %3246 = vmatpush.msra.mxu0 0.0
        %3247 = vmatpush.msra.mxu0 0.0
        %3248 = vmatpush.msra.mxu0 0.0
        %3249 = vmatpush.msra.mxu0 0.0
        %3250 = vmatpush.msra.mxu0 0.0
        %3251 = vmatpush.msra.mxu0 0.0
        %3252 = vmatpush.msra.mxu0 0.0
        %3253 = vmatpush.msra.mxu0 0.0
        %3254 = vmatpush.msra.mxu0 0.0
        %3255 = vmatpush.msra.mxu0 %v3221
        %3256 = vmatpush.msra.mxu0 %v3211
        %3257 = vmatpush.msra.mxu0 %v3209
        %3258 = vmatpush.msra.mxu0 %v3207
        %3259 = vmatmul.f32.gmra.mxu0 %v3215
        %v3260 = vpop.f32.mrf.mxu0
        %v3261 = vadd.f32 0.0, %v3260
        %3262 = vdwg.mxu0
        %v3265 = vrot.slane %v3261, 7
        %v3266 = vsel %vm2064, %v3241, %v3265
        %v3268 = vadd.f32 %v3204, %v3266
        %s3269 = scalar_lea.vmem %s7, 1216
        %v3270 = vld [vmem:[%s3269] sm:$0xff]
        %v3271 = vld [vmem:[%s3269 + $0x8] sm:$0xff]
        %v3272 = vld [vmem:[%s3269 + $0x10] sm:$0xff]
        %v3273 = vld [vmem:[%s3269 + $0x18] sm:$0xff]
        %v3274 = vld [vmem:[%s3269 + $0x20] sm:$0xff]
        %v3275 = vld [vmem:[%s3269 + $0x28] sm:$0xff]
        %v3276 = vld [vmem:[%s3269 + $0x30] sm:$0x1]
        %v3277 = vld [vmem:[%s3269 + $0x38] sm:$0x1]
        %v3278 = vrot.slane %v2049, 3
        %v3279 = vsel %vm2060, %v3278, 0
        %v3282 = vsel %vm2064, %v3276, 0
        %v3285 = vsel %vm2064, %v3277, 0
        %3287 = vmatpush.msra.mxu0 0.0
        %3288 = vmatpush.msra.mxu0 0.0
        %3289 = vmatpush.msra.mxu0 0.0
        %3290 = vmatpush.msra.mxu0 0.0
        %3291 = vmatpush.msra.mxu0 0.0
        %3292 = vmatpush.msra.mxu0 0.0
        %3293 = vmatpush.msra.mxu0 0.0
        %3294 = vmatpush.msra.mxu0 0.0
        %3295 = vmatpush.msra.mxu0 0.0
        %3296 = vmatpush.msra.mxu0 0.0
        %3297 = vmatpush.msra.mxu0 0.0
        %3298 = vmatpush.msra.mxu0 0.0
        %3299 = vmatpush.msra.mxu0 %v3282
        %3300 = vmatpush.msra.mxu0 %v3274
        %3301 = vmatpush.msra.mxu0 %v3272
        %3302 = vmatpush.msra.mxu0 %v3270
        %3303 = vmatmul.f32.gmra.mxu0 %v3279
        %v3304 = vpop.f32.mrf.mxu0
        %v3305 = vadd.f32 0.0, %v3304
        %3306 = vdwg.mxu0
        %3307 = vmatpush.msra.mxu0 0.0
        %3308 = vmatpush.msra.mxu0 0.0
        %3309 = vmatpush.msra.mxu0 0.0
        %3310 = vmatpush.msra.mxu0 0.0
        %3311 = vmatpush.msra.mxu0 0.0
        %3312 = vmatpush.msra.mxu0 0.0
        %3313 = vmatpush.msra.mxu0 0.0
        %3314 = vmatpush.msra.mxu0 0.0
        %3315 = vmatpush.msra.mxu0 0.0
        %3316 = vmatpush.msra.mxu0 0.0
        %3317 = vmatpush.msra.mxu0 0.0
        %3318 = vmatpush.msra.mxu0 0.0
        %3319 = vmatpush.msra.mxu0 %v3285
        %3320 = vmatpush.msra.mxu0 %v3275
        %3321 = vmatpush.msra.mxu0 %v3273
        %3322 = vmatpush.msra.mxu0 %v3271
        %3323 = vmatmul.f32.gmra.mxu0 %v3279
        %v3324 = vpop.f32.mrf.mxu0
        %v3325 = vadd.f32 0.0, %v3324
        %3326 = vdwg.mxu0
        %v3329 = vrot.slane %v3325, 7
        %v3330 = vsel %vm2064, %v3305, %v3329
        %v3332 = vadd.f32 %v3268, %v3330
        %s3333 = scalar_lea.vmem %s7, 1280
        %v3334 = vld [vmem:[%s3333] sm:$0xff]
        %v3335 = vld [vmem:[%s3333 + $0x8] sm:$0xff]
        %v3336 = vld [vmem:[%s3333 + $0x10] sm:$0xff]
        %v3337 = vld [vmem:[%s3333 + $0x18] sm:$0xff]
        %v3338 = vld [vmem:[%s3333 + $0x20] sm:$0xff]
        %v3339 = vld [vmem:[%s3333 + $0x28] sm:$0xff]
        %v3340 = vld [vmem:[%s3333 + $0x30] sm:$0x1]
        %v3341 = vld [vmem:[%s3333 + $0x38] sm:$0x1]
        %v3342 = vrot.slane %v2049, 4
        %v3343 = vsel %vm2060, %v3342, 0
        %v3346 = vsel %vm2064, %v3340, 0
        %v3349 = vsel %vm2064, %v3341, 0
        %3351 = vmatpush.msra.mxu0 0.0
        %3352 = vmatpush.msra.mxu0 0.0
        %3353 = vmatpush.msra.mxu0 0.0
        %3354 = vmatpush.msra.mxu0 0.0
        %3355 = vmatpush.msra.mxu0 0.0
        %3356 = vmatpush.msra.mxu0 0.0
        %3357 = vmatpush.msra.mxu0 0.0
        %3358 = vmatpush.msra.mxu0 0.0
        %3359 = vmatpush.msra.mxu0 0.0
        %3360 = vmatpush.msra.mxu0 0.0
        %3361 = vmatpush.msra.mxu0 0.0
        %3362 = vmatpush.msra.mxu0 0.0
        %3363 = vmatpush.msra.mxu0 %v3346
        %3364 = vmatpush.msra.mxu0 %v3338
        %3365 = vmatpush.msra.mxu0 %v3336
        %3366 = vmatpush.msra.mxu0 %v3334
        %3367 = vmatmul.f32.gmra.mxu0 %v3343
        %v3368 = vpop.f32.mrf.mxu0
        %v3369 = vadd.f32 0.0, %v3368
        %3370 = vdwg.mxu0
        %3371 = vmatpush.msra.mxu0 0.0
        %3372 = vmatpush.msra.mxu0 0.0
        %3373 = vmatpush.msra.mxu0 0.0
        %3374 = vmatpush.msra.mxu0 0.0
        %3375 = vmatpush.msra.mxu0 0.0
        %3376 = vmatpush.msra.mxu0 0.0
        %3377 = vmatpush.msra.mxu0 0.0
        %3378 = vmatpush.msra.mxu0 0.0
        %3379 = vmatpush.msra.mxu0 0.0
        %3380 = vmatpush.msra.mxu0 0.0
        %3381 = vmatpush.msra.mxu0 0.0
        %3382 = vmatpush.msra.mxu0 0.0
        %3383 = vmatpush.msra.mxu0 %v3349
        %3384 = vmatpush.msra.mxu0 %v3339
        %3385 = vmatpush.msra.mxu0 %v3337
        %3386 = vmatpush.msra.mxu0 %v3335
        %3387 = vmatmul.f32.gmra.mxu0 %v3343
        %v3388 = vpop.f32.mrf.mxu0
        %v3389 = vadd.f32 0.0, %v3388
        %3390 = vdwg.mxu0
        %v3393 = vrot.slane %v3389, 7
        %v3394 = vsel %vm2064, %v3369, %v3393
        %v3396 = vadd.f32 %v3332, %v3394
        %s3397 = scalar_lea.vmem %s7, 1344
        %v3398 = vld [vmem:[%s3397] sm:$0xff]
        %v3399 = vld [vmem:[%s3397 + $0x8] sm:$0xff]
        %v3400 = vld [vmem:[%s3397 + $0x10] sm:$0xff]
        %v3401 = vld [vmem:[%s3397 + $0x18] sm:$0xff]
        %v3402 = vld [vmem:[%s3397 + $0x20] sm:$0xff]
        %v3403 = vld [vmem:[%s3397 + $0x28] sm:$0xff]
        %v3404 = vld [vmem:[%s3397 + $0x30] sm:$0x1]
        %v3405 = vld [vmem:[%s3397 + $0x38] sm:$0x1]
        %v3406 = vrot.slane %v2049, 5
        %v3407 = vsel %vm2060, %v3406, 0
        %v3410 = vsel %vm2064, %v3404, 0
        %v3413 = vsel %vm2064, %v3405, 0
        %3415 = vmatpush.msra.mxu0 0.0
        %3416 = vmatpush.msra.mxu0 0.0
        %3417 = vmatpush.msra.mxu0 0.0
        %3418 = vmatpush.msra.mxu0 0.0
        %3419 = vmatpush.msra.mxu0 0.0
        %3420 = vmatpush.msra.mxu0 0.0
        %3421 = vmatpush.msra.mxu0 0.0
        %3422 = vmatpush.msra.mxu0 0.0
        %3423 = vmatpush.msra.mxu0 0.0
        %3424 = vmatpush.msra.mxu0 0.0
        %3425 = vmatpush.msra.mxu0 0.0
        %3426 = vmatpush.msra.mxu0 0.0
        %3427 = vmatpush.msra.mxu0 %v3410
        %3428 = vmatpush.msra.mxu0 %v3402
        %3429 = vmatpush.msra.mxu0 %v3400
        %3430 = vmatpush.msra.mxu0 %v3398
        %3431 = vmatmul.f32.gmra.mxu0 %v3407
        %v3432 = vpop.f32.mrf.mxu0
        %v3433 = vadd.f32 0.0, %v3432
        %3434 = vdwg.mxu0
        %3435 = vmatpush.msra.mxu0 0.0
        %3436 = vmatpush.msra.mxu0 0.0
        %3437 = vmatpush.msra.mxu0 0.0
        %3438 = vmatpush.msra.mxu0 0.0
        %3439 = vmatpush.msra.mxu0 0.0
        %3440 = vmatpush.msra.mxu0 0.0
        %3441 = vmatpush.msra.mxu0 0.0
        %3442 = vmatpush.msra.mxu0 0.0
        %3443 = vmatpush.msra.mxu0 0.0
        %3444 = vmatpush.msra.mxu0 0.0
        %3445 = vmatpush.msra.mxu0 0.0
        %3446 = vmatpush.msra.mxu0 0.0
        %3447 = vmatpush.msra.mxu0 %v3413
        %3448 = vmatpush.msra.mxu0 %v3403
        %3449 = vmatpush.msra.mxu0 %v3401
        %3450 = vmatpush.msra.mxu0 %v3399
        %3451 = vmatmul.f32.gmra.mxu0 %v3407
        %v3452 = vpop.f32.mrf.mxu0
        %v3453 = vadd.f32 0.0, %v3452
        %3454 = vdwg.mxu0
        %v3457 = vrot.slane %v3453, 7
        %v3458 = vsel %vm2064, %v3433, %v3457
        %v3460 = vadd.f32 %v3396, %v3458
        %s3461 = scalar_lea.vmem %s7, 1408
        %v3462 = vld [vmem:[%s3461] sm:$0xff]
        %v3463 = vld [vmem:[%s3461 + $0x8] sm:$0xff]
        %v3464 = vld [vmem:[%s3461 + $0x10] sm:$0xff]
        %v3465 = vld [vmem:[%s3461 + $0x18] sm:$0xff]
        %v3466 = vld [vmem:[%s3461 + $0x20] sm:$0xff]
        %v3467 = vld [vmem:[%s3461 + $0x28] sm:$0xff]
        %v3468 = vld [vmem:[%s3461 + $0x30] sm:$0x1]
        %v3469 = vld [vmem:[%s3461 + $0x38] sm:$0x1]
        %v3470 = vrot.slane %v2049, 6
        %v3471 = vsel %vm2060, %v3470, 0
        %v3474 = vsel %vm2064, %v3468, 0
        %v3477 = vsel %vm2064, %v3469, 0
        %3479 = vmatpush.msra.mxu0 0.0
        %3480 = vmatpush.msra.mxu0 0.0
        %3481 = vmatpush.msra.mxu0 0.0
        %3482 = vmatpush.msra.mxu0 0.0
        %3483 = vmatpush.msra.mxu0 0.0
        %3484 = vmatpush.msra.mxu0 0.0
        %3485 = vmatpush.msra.mxu0 0.0
        %3486 = vmatpush.msra.mxu0 0.0
        %3487 = vmatpush.msra.mxu0 0.0
        %3488 = vmatpush.msra.mxu0 0.0
        %3489 = vmatpush.msra.mxu0 0.0
        %3490 = vmatpush.msra.mxu0 0.0
        %3491 = vmatpush.msra.mxu0 %v3474
        %3492 = vmatpush.msra.mxu0 %v3466
        %3493 = vmatpush.msra.mxu0 %v3464
        %3494 = vmatpush.msra.mxu0 %v3462
        %3495 = vmatmul.f32.gmra.mxu0 %v3471
        %v3496 = vpop.f32.mrf.mxu0
        %v3497 = vadd.f32 0.0, %v3496
        %3498 = vdwg.mxu0
        %3499 = vmatpush.msra.mxu0 0.0
        %3500 = vmatpush.msra.mxu0 0.0
        %3501 = vmatpush.msra.mxu0 0.0
        %3502 = vmatpush.msra.mxu0 0.0
        %3503 = vmatpush.msra.mxu0 0.0
        %3504 = vmatpush.msra.mxu0 0.0
        %3505 = vmatpush.msra.mxu0 0.0
        %3506 = vmatpush.msra.mxu0 0.0
        %3507 = vmatpush.msra.mxu0 0.0
        %3508 = vmatpush.msra.mxu0 0.0
        %3509 = vmatpush.msra.mxu0 0.0
        %3510 = vmatpush.msra.mxu0 0.0
        %3511 = vmatpush.msra.mxu0 %v3477
        %3512 = vmatpush.msra.mxu0 %v3467
        %3513 = vmatpush.msra.mxu0 %v3465
        %3514 = vmatpush.msra.mxu0 %v3463
        %3515 = vmatmul.f32.gmra.mxu0 %v3471
        %v3516 = vpop.f32.mrf.mxu0
        %v3517 = vadd.f32 0.0, %v3516
        %3518 = vdwg.mxu0
        %v3521 = vrot.slane %v3517, 7
        %v3522 = vsel %vm2064, %v3497, %v3521
        %v3524 = vadd.f32 %v3460, %v3522
        %s3525 = scalar_lea.vmem %s7, 1472
        %v3526 = vld [vmem:[%s3525] sm:$0xff]
        %v3527 = vld [vmem:[%s3525 + $0x8] sm:$0xff]
        %v3528 = vld [vmem:[%s3525 + $0x10] sm:$0xff]
        %v3529 = vld [vmem:[%s3525 + $0x18] sm:$0xff]
        %v3530 = vld [vmem:[%s3525 + $0x20] sm:$0xff]
        %v3531 = vld [vmem:[%s3525 + $0x28] sm:$0xff]
        %v3532 = vld [vmem:[%s3525 + $0x30] sm:$0x1]
        %v3533 = vld [vmem:[%s3525 + $0x38] sm:$0x1]
        %v3534 = vrot.slane %v2049, 7
        %v3535 = vsel %vm2060, %v3534, 0
        %v3538 = vsel %vm2064, %v3532, 0
        %v3541 = vsel %vm2064, %v3533, 0
        %3543 = vmatpush.msra.mxu0 0.0
        %3544 = vmatpush.msra.mxu0 0.0
        %3545 = vmatpush.msra.mxu0 0.0
        %3546 = vmatpush.msra.mxu0 0.0
        %3547 = vmatpush.msra.mxu0 0.0
        %3548 = vmatpush.msra.mxu0 0.0
        %3549 = vmatpush.msra.mxu0 0.0
        %3550 = vmatpush.msra.mxu0 0.0
        %3551 = vmatpush.msra.mxu0 0.0
        %3552 = vmatpush.msra.mxu0 0.0
        %3553 = vmatpush.msra.mxu0 0.0
        %3554 = vmatpush.msra.mxu0 0.0
        %3555 = vmatpush.msra.mxu0 %v3538
        %3556 = vmatpush.msra.mxu0 %v3530
        %3557 = vmatpush.msra.mxu0 %v3528
        %3558 = vmatpush.msra.mxu0 %v3526
        %3559 = vmatmul.f32.gmra.mxu0 %v3535
        %v3560 = vpop.f32.mrf.mxu0
        %v3561 = vadd.f32 0.0, %v3560
        %3562 = vdwg.mxu0
        %3563 = vmatpush.msra.mxu0 0.0
        %3564 = vmatpush.msra.mxu0 0.0
        %3565 = vmatpush.msra.mxu0 0.0
        %3566 = vmatpush.msra.mxu0 0.0
        %3567 = vmatpush.msra.mxu0 0.0
        %3568 = vmatpush.msra.mxu0 0.0
        %3569 = vmatpush.msra.mxu0 0.0
        %3570 = vmatpush.msra.mxu0 0.0
        %3571 = vmatpush.msra.mxu0 0.0
        %3572 = vmatpush.msra.mxu0 0.0
        %3573 = vmatpush.msra.mxu0 0.0
        %3574 = vmatpush.msra.mxu0 0.0
        %3575 = vmatpush.msra.mxu0 %v3541
        %3576 = vmatpush.msra.mxu0 %v3531
        %3577 = vmatpush.msra.mxu0 %v3529
        %3578 = vmatpush.msra.mxu0 %v3527
        %3579 = vmatmul.f32.gmra.mxu0 %v3535
        %v3580 = vpop.f32.mrf.mxu0
        %v3581 = vadd.f32 0.0, %v3580
        %3582 = vdwg.mxu0
        %v3585 = vrot.slane %v3581, 7
        %v3586 = vsel %vm2064, %v3561, %v3585
        %v3588 = vadd.f32 %v3524, %v3586
        %s3589 = scalar_lea.vmem %s7, 1536
        %v3590 = vld [vmem:[%s3589] sm:$0xff]
        %v3591 = vld [vmem:[%s3589 + $0x8] sm:$0xff]
        %v3592 = vld [vmem:[%s3589 + $0x10] sm:$0xff]
        %v3593 = vld [vmem:[%s3589 + $0x18] sm:$0xff]
        %v3594 = vld [vmem:[%s3589 + $0x20] sm:$0xff]
        %v3595 = vld [vmem:[%s3589 + $0x28] sm:$0xff]
        %v3596 = vld [vmem:[%s3589 + $0x30] sm:$0x1]
        %v3597 = vld [vmem:[%s3589 + $0x38] sm:$0x1]
        %v3599 = vsel %vm2060, %v2050, 0
        %v3602 = vsel %vm2064, %v3596, 0
        %v3605 = vsel %vm2064, %v3597, 0
        %3607 = vmatpush.msra.mxu0 0.0
        %3608 = vmatpush.msra.mxu0 0.0
        %3609 = vmatpush.msra.mxu0 0.0
        %3610 = vmatpush.msra.mxu0 0.0
        %3611 = vmatpush.msra.mxu0 0.0
        %3612 = vmatpush.msra.mxu0 0.0
        %3613 = vmatpush.msra.mxu0 0.0
        %3614 = vmatpush.msra.mxu0 0.0
        %3615 = vmatpush.msra.mxu0 0.0
        %3616 = vmatpush.msra.mxu0 0.0
        %3617 = vmatpush.msra.mxu0 0.0
        %3618 = vmatpush.msra.mxu0 0.0
        %3619 = vmatpush.msra.mxu0 %v3602
        %3620 = vmatpush.msra.mxu0 %v3594
        %3621 = vmatpush.msra.mxu0 %v3592
        %3622 = vmatpush.msra.mxu0 %v3590
        %3623 = vmatmul.f32.gmra.mxu0 %v3599
        %v3624 = vpop.f32.mrf.mxu0
        %v3625 = vadd.f32 0.0, %v3624
        %3626 = vdwg.mxu0
        %3627 = vmatpush.msra.mxu0 0.0
        %3628 = vmatpush.msra.mxu0 0.0
        %3629 = vmatpush.msra.mxu0 0.0
        %3630 = vmatpush.msra.mxu0 0.0
        %3631 = vmatpush.msra.mxu0 0.0
        %3632 = vmatpush.msra.mxu0 0.0
        %3633 = vmatpush.msra.mxu0 0.0
        %3634 = vmatpush.msra.mxu0 0.0
        %3635 = vmatpush.msra.mxu0 0.0
        %3636 = vmatpush.msra.mxu0 0.0
        %3637 = vmatpush.msra.mxu0 0.0
        %3638 = vmatpush.msra.mxu0 0.0
        %3639 = vmatpush.msra.mxu0 %v3605
        %3640 = vmatpush.msra.mxu0 %v3595
        %3641 = vmatpush.msra.mxu0 %v3593
        %3642 = vmatpush.msra.mxu0 %v3591
        %3643 = vmatmul.f32.gmra.mxu0 %v3599
        %v3644 = vpop.f32.mrf.mxu0
        %v3645 = vadd.f32 0.0, %v3644
        %3646 = vdwg.mxu0
        %v3649 = vrot.slane %v3645, 7
        %v3650 = vsel %vm2064, %v3625, %v3649
        %v3652 = vadd.f32 %v3588, %v3650
        %s3653 = scalar_lea.vmem %s7, 1600
        %v3654 = vld [vmem:[%s3653] sm:$0xff]
        %v3655 = vld [vmem:[%s3653 + $0x8] sm:$0xff]
        %v3656 = vld [vmem:[%s3653 + $0x10] sm:$0xff]
        %v3657 = vld [vmem:[%s3653 + $0x18] sm:$0xff]
        %v3658 = vld [vmem:[%s3653 + $0x20] sm:$0xff]
        %v3659 = vld [vmem:[%s3653 + $0x28] sm:$0xff]
        %v3660 = vld [vmem:[%s3653 + $0x30] sm:$0x1]
        %v3661 = vld [vmem:[%s3653 + $0x38] sm:$0x1]
        %v3662 = vrot.slane %v2050, 1
        %v3663 = vsel %vm2060, %v3662, 0
        %v3666 = vsel %vm2064, %v3660, 0
        %v3669 = vsel %vm2064, %v3661, 0
        %3671 = vmatpush.msra.mxu0 0.0
        %3672 = vmatpush.msra.mxu0 0.0
        %3673 = vmatpush.msra.mxu0 0.0
        %3674 = vmatpush.msra.mxu0 0.0
        %3675 = vmatpush.msra.mxu0 0.0
        %3676 = vmatpush.msra.mxu0 0.0
        %3677 = vmatpush.msra.mxu0 0.0
        %3678 = vmatpush.msra.mxu0 0.0
        %3679 = vmatpush.msra.mxu0 0.0
        %3680 = vmatpush.msra.mxu0 0.0
        %3681 = vmatpush.msra.mxu0 0.0
        %3682 = vmatpush.msra.mxu0 0.0
        %3683 = vmatpush.msra.mxu0 %v3666
        %3684 = vmatpush.msra.mxu0 %v3658
        %3685 = vmatpush.msra.mxu0 %v3656
        %3686 = vmatpush.msra.mxu0 %v3654
        %3687 = vmatmul.f32.gmra.mxu0 %v3663
        %v3688 = vpop.f32.mrf.mxu0
        %v3689 = vadd.f32 0.0, %v3688
        %3690 = vdwg.mxu0
        %3691 = vmatpush.msra.mxu0 0.0
        %3692 = vmatpush.msra.mxu0 0.0
        %3693 = vmatpush.msra.mxu0 0.0
        %3694 = vmatpush.msra.mxu0 0.0
        %3695 = vmatpush.msra.mxu0 0.0
        %3696 = vmatpush.msra.mxu0 0.0
        %3697 = vmatpush.msra.mxu0 0.0
        %3698 = vmatpush.msra.mxu0 0.0
        %3699 = vmatpush.msra.mxu0 0.0
        %3700 = vmatpush.msra.mxu0 0.0
        %3701 = vmatpush.msra.mxu0 0.0
        %3702 = vmatpush.msra.mxu0 0.0
        %3703 = vmatpush.msra.mxu0 %v3669
        %3704 = vmatpush.msra.mxu0 %v3659
        %3705 = vmatpush.msra.mxu0 %v3657
        %3706 = vmatpush.msra.mxu0 %v3655
        %3707 = vmatmul.f32.gmra.mxu0 %v3663
        %v3708 = vpop.f32.mrf.mxu0
        %v3709 = vadd.f32 0.0, %v3708
        %3710 = vdwg.mxu0
        %v3713 = vrot.slane %v3709, 7
        %v3714 = vsel %vm2064, %v3689, %v3713
        %v3716 = vadd.f32 %v3652, %v3714
        %s3717 = scalar_lea.vmem %s7, 1664
        %v3718 = vld [vmem:[%s3717] sm:$0xff]
        %v3719 = vld [vmem:[%s3717 + $0x8] sm:$0xff]
        %v3720 = vld [vmem:[%s3717 + $0x10] sm:$0xff]
        %v3721 = vld [vmem:[%s3717 + $0x18] sm:$0xff]
        %v3722 = vld [vmem:[%s3717 + $0x20] sm:$0xff]
        %v3723 = vld [vmem:[%s3717 + $0x28] sm:$0xff]
        %v3724 = vld [vmem:[%s3717 + $0x30] sm:$0x1]
        %v3725 = vld [vmem:[%s3717 + $0x38] sm:$0x1]
        %v3726 = vrot.slane %v2050, 2
        %v3727 = vsel %vm2060, %v3726, 0
        %v3730 = vsel %vm2064, %v3724, 0
        %v3733 = vsel %vm2064, %v3725, 0
        %3735 = vmatpush.msra.mxu0 0.0
        %3736 = vmatpush.msra.mxu0 0.0
        %3737 = vmatpush.msra.mxu0 0.0
        %3738 = vmatpush.msra.mxu0 0.0
        %3739 = vmatpush.msra.mxu0 0.0
        %3740 = vmatpush.msra.mxu0 0.0
        %3741 = vmatpush.msra.mxu0 0.0
        %3742 = vmatpush.msra.mxu0 0.0
        %3743 = vmatpush.msra.mxu0 0.0
        %3744 = vmatpush.msra.mxu0 0.0
        %3745 = vmatpush.msra.mxu0 0.0
        %3746 = vmatpush.msra.mxu0 0.0
        %3747 = vmatpush.msra.mxu0 %v3730
        %3748 = vmatpush.msra.mxu0 %v3722
        %3749 = vmatpush.msra.mxu0 %v3720
        %3750 = vmatpush.msra.mxu0 %v3718
        %3751 = vmatmul.f32.gmra.mxu0 %v3727
        %v3752 = vpop.f32.mrf.mxu0
        %v3753 = vadd.f32 0.0, %v3752
        %3754 = vdwg.mxu0
        %3755 = vmatpush.msra.mxu0 0.0
        %3756 = vmatpush.msra.mxu0 0.0
        %3757 = vmatpush.msra.mxu0 0.0
        %3758 = vmatpush.msra.mxu0 0.0
        %3759 = vmatpush.msra.mxu0 0.0
        %3760 = vmatpush.msra.mxu0 0.0
        %3761 = vmatpush.msra.mxu0 0.0
        %3762 = vmatpush.msra.mxu0 0.0
        %3763 = vmatpush.msra.mxu0 0.0
        %3764 = vmatpush.msra.mxu0 0.0
        %3765 = vmatpush.msra.mxu0 0.0
        %3766 = vmatpush.msra.mxu0 0.0
        %3767 = vmatpush.msra.mxu0 %v3733
        %3768 = vmatpush.msra.mxu0 %v3723
        %3769 = vmatpush.msra.mxu0 %v3721
        %3770 = vmatpush.msra.mxu0 %v3719
        %3771 = vmatmul.f32.gmra.mxu0 %v3727
        %v3772 = vpop.f32.mrf.mxu0
        %v3773 = vadd.f32 0.0, %v3772
        %3774 = vdwg.mxu0
        %v3777 = vrot.slane %v3773, 7
        %v3778 = vsel %vm2064, %v3753, %v3777
        %v3780 = vadd.f32 %v3716, %v3778
        %s3781 = scalar_lea.vmem %s7, 1728
        %v3782 = vld [vmem:[%s3781] sm:$0xff]
        %v3783 = vld [vmem:[%s3781 + $0x8] sm:$0xff]
        %v3784 = vld [vmem:[%s3781 + $0x10] sm:$0xff]
        %v3785 = vld [vmem:[%s3781 + $0x18] sm:$0xff]
        %v3786 = vld [vmem:[%s3781 + $0x20] sm:$0xff]
        %v3787 = vld [vmem:[%s3781 + $0x28] sm:$0xff]
        %v3788 = vld [vmem:[%s3781 + $0x30] sm:$0x1]
        %v3789 = vld [vmem:[%s3781 + $0x38] sm:$0x1]
        %v3790 = vrot.slane %v2050, 3
        %v3791 = vsel %vm2060, %v3790, 0
        %v3794 = vsel %vm2064, %v3788, 0
        %v3797 = vsel %vm2064, %v3789, 0
        %3799 = vmatpush.msra.mxu0 0.0
        %3800 = vmatpush.msra.mxu0 0.0
        %3801 = vmatpush.msra.mxu0 0.0
        %3802 = vmatpush.msra.mxu0 0.0
        %3803 = vmatpush.msra.mxu0 0.0
        %3804 = vmatpush.msra.mxu0 0.0
        %3805 = vmatpush.msra.mxu0 0.0
        %3806 = vmatpush.msra.mxu0 0.0
        %3807 = vmatpush.msra.mxu0 0.0
        %3808 = vmatpush.msra.mxu0 0.0
        %3809 = vmatpush.msra.mxu0 0.0
        %3810 = vmatpush.msra.mxu0 0.0
        %3811 = vmatpush.msra.mxu0 %v3794
        %3812 = vmatpush.msra.mxu0 %v3786
        %3813 = vmatpush.msra.mxu0 %v3784
        %3814 = vmatpush.msra.mxu0 %v3782
        %3815 = vmatmul.f32.gmra.mxu0 %v3791
        %v3816 = vpop.f32.mrf.mxu0
        %v3817 = vadd.f32 0.0, %v3816
        %3818 = vdwg.mxu0
        %3819 = vmatpush.msra.mxu0 0.0
        %3820 = vmatpush.msra.mxu0 0.0
        %3821 = vmatpush.msra.mxu0 0.0
        %3822 = vmatpush.msra.mxu0 0.0
        %3823 = vmatpush.msra.mxu0 0.0
        %3824 = vmatpush.msra.mxu0 0.0
        %3825 = vmatpush.msra.mxu0 0.0
        %3826 = vmatpush.msra.mxu0 0.0
        %3827 = vmatpush.msra.mxu0 0.0
        %3828 = vmatpush.msra.mxu0 0.0
        %3829 = vmatpush.msra.mxu0 0.0
        %3830 = vmatpush.msra.mxu0 0.0
        %3831 = vmatpush.msra.mxu0 %v3797
        %3832 = vmatpush.msra.mxu0 %v3787
        %3833 = vmatpush.msra.mxu0 %v3785
        %3834 = vmatpush.msra.mxu0 %v3783
        %3835 = vmatmul.f32.gmra.mxu0 %v3791
        %v3836 = vpop.f32.mrf.mxu0
        %v3837 = vadd.f32 0.0, %v3836
        %3838 = vdwg.mxu0
        %v3841 = vrot.slane %v3837, 7
        %v3842 = vsel %vm2064, %v3817, %v3841
        %v3844 = vadd.f32 %v3780, %v3842
        %s3845 = scalar_lea.vmem %s7, 1792
        %v3846 = vld [vmem:[%s3845] sm:$0xff]
        %v3847 = vld [vmem:[%s3845 + $0x8] sm:$0xff]
        %v3848 = vld [vmem:[%s3845 + $0x10] sm:$0xff]
        %v3849 = vld [vmem:[%s3845 + $0x18] sm:$0xff]
        %v3850 = vld [vmem:[%s3845 + $0x20] sm:$0xff]
        %v3851 = vld [vmem:[%s3845 + $0x28] sm:$0xff]
        %v3852 = vld [vmem:[%s3845 + $0x30] sm:$0x1]
        %v3853 = vld [vmem:[%s3845 + $0x38] sm:$0x1]
        %v3854 = vrot.slane %v2050, 4
        %v3855 = vsel %vm2060, %v3854, 0
        %v3858 = vsel %vm2064, %v3852, 0
        %v3861 = vsel %vm2064, %v3853, 0
        %3863 = vmatpush.msra.mxu0 0.0
        %3864 = vmatpush.msra.mxu0 0.0
        %3865 = vmatpush.msra.mxu0 0.0
        %3866 = vmatpush.msra.mxu0 0.0
        %3867 = vmatpush.msra.mxu0 0.0
        %3868 = vmatpush.msra.mxu0 0.0
        %3869 = vmatpush.msra.mxu0 0.0
        %3870 = vmatpush.msra.mxu0 0.0
        %3871 = vmatpush.msra.mxu0 0.0
        %3872 = vmatpush.msra.mxu0 0.0
        %3873 = vmatpush.msra.mxu0 0.0
        %3874 = vmatpush.msra.mxu0 0.0
        %3875 = vmatpush.msra.mxu0 %v3858
        %3876 = vmatpush.msra.mxu0 %v3850
        %3877 = vmatpush.msra.mxu0 %v3848
        %3878 = vmatpush.msra.mxu0 %v3846
        %3879 = vmatmul.f32.gmra.mxu0 %v3855
        %v3880 = vpop.f32.mrf.mxu0
        %v3881 = vadd.f32 0.0, %v3880
        %3882 = vdwg.mxu0
        %3883 = vmatpush.msra.mxu0 0.0
        %3884 = vmatpush.msra.mxu0 0.0
        %3885 = vmatpush.msra.mxu0 0.0
        %3886 = vmatpush.msra.mxu0 0.0
        %3887 = vmatpush.msra.mxu0 0.0
        %3888 = vmatpush.msra.mxu0 0.0
        %3889 = vmatpush.msra.mxu0 0.0
        %3890 = vmatpush.msra.mxu0 0.0
        %3891 = vmatpush.msra.mxu0 0.0
        %3892 = vmatpush.msra.mxu0 0.0
        %3893 = vmatpush.msra.mxu0 0.0
        %3894 = vmatpush.msra.mxu0 0.0
        %3895 = vmatpush.msra.mxu0 %v3861
        %3896 = vmatpush.msra.mxu0 %v3851
        %3897 = vmatpush.msra.mxu0 %v3849
        %3898 = vmatpush.msra.mxu0 %v3847
        %3899 = vmatmul.f32.gmra.mxu0 %v3855
        %v3900 = vpop.f32.mrf.mxu0
        %v3901 = vadd.f32 0.0, %v3900
        %3902 = vdwg.mxu0
        %v3905 = vrot.slane %v3901, 7
        %v3906 = vsel %vm2064, %v3881, %v3905
        %v3908 = vadd.f32 %v3844, %v3906
        %s3909 = scalar_lea.vmem %s7, 1856
        %v3910 = vld [vmem:[%s3909] sm:$0xff]
        %v3911 = vld [vmem:[%s3909 + $0x8] sm:$0xff]
        %v3912 = vld [vmem:[%s3909 + $0x10] sm:$0xff]
        %v3913 = vld [vmem:[%s3909 + $0x18] sm:$0xff]
        %v3914 = vld [vmem:[%s3909 + $0x20] sm:$0xff]
        %v3915 = vld [vmem:[%s3909 + $0x28] sm:$0xff]
        %v3916 = vld [vmem:[%s3909 + $0x30] sm:$0x1]
        %v3917 = vld [vmem:[%s3909 + $0x38] sm:$0x1]
        %v3918 = vrot.slane %v2050, 5
        %v3919 = vsel %vm2060, %v3918, 0
        %v3922 = vsel %vm2064, %v3916, 0
        %v3925 = vsel %vm2064, %v3917, 0
        %3927 = vmatpush.msra.mxu0 0.0
        %3928 = vmatpush.msra.mxu0 0.0
        %3929 = vmatpush.msra.mxu0 0.0
        %3930 = vmatpush.msra.mxu0 0.0
        %3931 = vmatpush.msra.mxu0 0.0
        %3932 = vmatpush.msra.mxu0 0.0
        %3933 = vmatpush.msra.mxu0 0.0
        %3934 = vmatpush.msra.mxu0 0.0
        %3935 = vmatpush.msra.mxu0 0.0
        %3936 = vmatpush.msra.mxu0 0.0
        %3937 = vmatpush.msra.mxu0 0.0
        %3938 = vmatpush.msra.mxu0 0.0
        %3939 = vmatpush.msra.mxu0 %v3922
        %3940 = vmatpush.msra.mxu0 %v3914
        %3941 = vmatpush.msra.mxu0 %v3912
        %3942 = vmatpush.msra.mxu0 %v3910
        %3943 = vmatmul.f32.gmra.mxu0 %v3919
        %v3944 = vpop.f32.mrf.mxu0
        %v3945 = vadd.f32 0.0, %v3944
        %3946 = vdwg.mxu0
        %3947 = vmatpush.msra.mxu0 0.0
        %3948 = vmatpush.msra.mxu0 0.0
        %3949 = vmatpush.msra.mxu0 0.0
        %3950 = vmatpush.msra.mxu0 0.0
        %3951 = vmatpush.msra.mxu0 0.0
        %3952 = vmatpush.msra.mxu0 0.0
        %3953 = vmatpush.msra.mxu0 0.0
        %3954 = vmatpush.msra.mxu0 0.0
        %3955 = vmatpush.msra.mxu0 0.0
        %3956 = vmatpush.msra.mxu0 0.0
        %3957 = vmatpush.msra.mxu0 0.0
        %3958 = vmatpush.msra.mxu0 0.0
        %3959 = vmatpush.msra.mxu0 %v3925
        %3960 = vmatpush.msra.mxu0 %v3915
        %3961 = vmatpush.msra.mxu0 %v3913
        %3962 = vmatpush.msra.mxu0 %v3911
        %3963 = vmatmul.f32.gmra.mxu0 %v3919
        %v3964 = vpop.f32.mrf.mxu0
        %v3965 = vadd.f32 0.0, %v3964
        %3966 = vdwg.mxu0
        %v3969 = vrot.slane %v3965, 7
        %v3970 = vsel %vm2064, %v3945, %v3969
        %v3972 = vadd.f32 %v3908, %v3970
        %s3973 = scalar_lea.vmem %s7, 1920
        %v3974 = vld [vmem:[%s3973] sm:$0xff]
        %v3975 = vld [vmem:[%s3973 + $0x8] sm:$0xff]
        %v3976 = vld [vmem:[%s3973 + $0x10] sm:$0xff]
        %v3977 = vld [vmem:[%s3973 + $0x18] sm:$0xff]
        %v3978 = vld [vmem:[%s3973 + $0x20] sm:$0xff]
        %v3979 = vld [vmem:[%s3973 + $0x28] sm:$0xff]
        %v3980 = vld [vmem:[%s3973 + $0x30] sm:$0x1]
        %v3981 = vld [vmem:[%s3973 + $0x38] sm:$0x1]
        %v3982 = vrot.slane %v2050, 6
        %v3983 = vsel %vm2060, %v3982, 0
        %v3986 = vsel %vm2064, %v3980, 0
        %v3989 = vsel %vm2064, %v3981, 0
        %3991 = vmatpush.msra.mxu0 0.0
        %3992 = vmatpush.msra.mxu0 0.0
        %3993 = vmatpush.msra.mxu0 0.0
        %3994 = vmatpush.msra.mxu0 0.0
        %3995 = vmatpush.msra.mxu0 0.0
        %3996 = vmatpush.msra.mxu0 0.0
        %3997 = vmatpush.msra.mxu0 0.0
        %3998 = vmatpush.msra.mxu0 0.0
        %3999 = vmatpush.msra.mxu0 0.0
        %4000 = vmatpush.msra.mxu0 0.0
        %4001 = vmatpush.msra.mxu0 0.0
        %4002 = vmatpush.msra.mxu0 0.0
        %4003 = vmatpush.msra.mxu0 %v3986
        %4004 = vmatpush.msra.mxu0 %v3978
        %4005 = vmatpush.msra.mxu0 %v3976
        %4006 = vmatpush.msra.mxu0 %v3974
        %4007 = vmatmul.f32.gmra.mxu0 %v3983
        %v4008 = vpop.f32.mrf.mxu0
        %v4009 = vadd.f32 0.0, %v4008
        %4010 = vdwg.mxu0
        %4011 = vmatpush.msra.mxu0 0.0
        %4012 = vmatpush.msra.mxu0 0.0
        %4013 = vmatpush.msra.mxu0 0.0
        %4014 = vmatpush.msra.mxu0 0.0
        %4015 = vmatpush.msra.mxu0 0.0
        %4016 = vmatpush.msra.mxu0 0.0
        %4017 = vmatpush.msra.mxu0 0.0
        %4018 = vmatpush.msra.mxu0 0.0
        %4019 = vmatpush.msra.mxu0 0.0
        %4020 = vmatpush.msra.mxu0 0.0
        %4021 = vmatpush.msra.mxu0 0.0
        %4022 = vmatpush.msra.mxu0 0.0
        %4023 = vmatpush.msra.mxu0 %v3989
        %4024 = vmatpush.msra.mxu0 %v3979
        %4025 = vmatpush.msra.mxu0 %v3977
        %4026 = vmatpush.msra.mxu0 %v3975
        %4027 = vmatmul.f32.gmra.mxu0 %v3983
        %v4028 = vpop.f32.mrf.mxu0
        %v4029 = vadd.f32 0.0, %v4028
        %4030 = vdwg.mxu0
        %v4033 = vrot.slane %v4029, 7
        %v4034 = vsel %vm2064, %v4009, %v4033
        %v4036 = vadd.f32 %v3972, %v4034
        %s4037 = scalar_lea.vmem %s7, 1984
        %v4038 = vld [vmem:[%s4037] sm:$0xff]
        %v4039 = vld [vmem:[%s4037 + $0x8] sm:$0xff]
        %v4040 = vld [vmem:[%s4037 + $0x10] sm:$0xff]
        %v4041 = vld [vmem:[%s4037 + $0x18] sm:$0xff]
        %v4042 = vld [vmem:[%s4037 + $0x20] sm:$0xff]
        %v4043 = vld [vmem:[%s4037 + $0x28] sm:$0xff]
        %v4044 = vld [vmem:[%s4037 + $0x30] sm:$0x1]
        %v4045 = vld [vmem:[%s4037 + $0x38] sm:$0x1]
        %v4046 = vrot.slane %v2050, 7
        %v4047 = vsel %vm2060, %v4046, 0
        %v4050 = vsel %vm2064, %v4044, 0
        %v4053 = vsel %vm2064, %v4045, 0
        %4055 = vmatpush.msra.mxu0 0.0
        %4056 = vmatpush.msra.mxu0 0.0
        %4057 = vmatpush.msra.mxu0 0.0
        %4058 = vmatpush.msra.mxu0 0.0
        %4059 = vmatpush.msra.mxu0 0.0
        %4060 = vmatpush.msra.mxu0 0.0
        %4061 = vmatpush.msra.mxu0 0.0
        %4062 = vmatpush.msra.mxu0 0.0
        %4063 = vmatpush.msra.mxu0 0.0
        %4064 = vmatpush.msra.mxu0 0.0
        %4065 = vmatpush.msra.mxu0 0.0
        %4066 = vmatpush.msra.mxu0 0.0
        %4067 = vmatpush.msra.mxu0 %v4050
        %4068 = vmatpush.msra.mxu0 %v4042
        %4069 = vmatpush.msra.mxu0 %v4040
        %4070 = vmatpush.msra.mxu0 %v4038
        %4071 = vmatmul.f32.gmra.mxu0 %v4047
        %v4072 = vpop.f32.mrf.mxu0
        %v4073 = vadd.f32 0.0, %v4072
        %4074 = vdwg.mxu0
        %4075 = vmatpush.msra.mxu0 0.0
        %4076 = vmatpush.msra.mxu0 0.0
        %4077 = vmatpush.msra.mxu0 0.0
        %4078 = vmatpush.msra.mxu0 0.0
        %4079 = vmatpush.msra.mxu0 0.0
        %4080 = vmatpush.msra.mxu0 0.0
        %4081 = vmatpush.msra.mxu0 0.0
        %4082 = vmatpush.msra.mxu0 0.0
        %4083 = vmatpush.msra.mxu0 0.0
        %4084 = vmatpush.msra.mxu0 0.0
        %4085 = vmatpush.msra.mxu0 0.0
        %4086 = vmatpush.msra.mxu0 0.0
        %4087 = vmatpush.msra.mxu0 %v4053
        %4088 = vmatpush.msra.mxu0 %v4043
        %4089 = vmatpush.msra.mxu0 %v4041
        %4090 = vmatpush.msra.mxu0 %v4039
        %4091 = vmatmul.f32.gmra.mxu0 %v4047
        %v4092 = vpop.f32.mrf.mxu0
        %v4093 = vadd.f32 0.0, %v4092
        %4094 = vdwg.mxu0
        %v4097 = vrot.slane %v4093, 7
        %v4098 = vsel %vm2064, %v4073, %v4097
        %v4100 = vadd.f32 %v4036, %v4098
        %v4101 = vld [vmem:[%s9] sm:$0x3]
        %v4102 = vmul.f32 %v4100, %v4101
        %v4103 = vld [vmem:[%s10] sm:$0x3]
        %v4104 = vadd.f32 %v4102, %v4103
        %v4105 = vmax.f32 %v4104, 0.0
        %v4106 = vld [vmem:[%s11] sm:$0xff]
        %v4107 = vld [vmem:[%s11 + $0x8] sm:$0xff]
        %v4108 = vld [vmem:[%s11 + $0x10] sm:$0xff]
        %v4109 = vld [vmem:[%s11 + $0x18] sm:$0xff]
        %v4110 = vld [vmem:[%s11 + $0x20] sm:$0xff]
        %v4111 = vld [vmem:[%s11 + $0x28] sm:$0xff]
        %v4112 = vld [vmem:[%s11 + $0x30] sm:$0xff]
        %v4113 = vld [vmem:[%s11 + $0x38] sm:$0xff]
        %v4114 = vld [vmem:[%s11 + $0x40] sm:$0xff]
        %v4115 = vld [vmem:[%s11 + $0x48] sm:$0xff]
        %v4116 = vld [vmem:[%s11 + $0x50] sm:$0xff]
        %v4117 = vld [vmem:[%s11 + $0x58] sm:$0xff]
        %v4118 = vld [vmem:[%s11 + $0x60] sm:$0xff]
        %v4119 = vld [vmem:[%s11 + $0x68] sm:$0xff]
        %v4120 = vld [vmem:[%s11 + $0x70] sm:$0xff]
        %v4121 = vld [vmem:[%s11 + $0x78] sm:$0xff]
        %v4122 = vld [vmem:[%s11 + $0x80] sm:$0xff]
        %v4123 = vld [vmem:[%s11 + $0x88] sm:$0xff]
        %v4124 = vld [vmem:[%s11 + $0x90] sm:$0xff]
        %v4125 = vld [vmem:[%s11 + $0x98] sm:$0xff]
        %v4126 = vld [vmem:[%s11 + $0xa0] sm:$0xff]
        %v4127 = vld [vmem:[%s11 + $0xa8] sm:$0xff]
        %v4128 = vld [vmem:[%s11 + $0xb0] sm:$0xff]
        %v4129 = vld [vmem:[%s11 + $0xb8] sm:$0xff]
        %v4130 = vld [vmem:[%s11 + $0xc0] sm:$0xff]
        %v4131 = vld [vmem:[%s11 + $0xc8] sm:$0xff]
        %v4132 = vld [vmem:[%s11 + $0xd0] sm:$0xff]
        %v4133 = vld [vmem:[%s11 + $0xd8] sm:$0xff]
        %v4134 = vld [vmem:[%s11 + $0xe0] sm:$0xff]
        %v4135 = vld [vmem:[%s11 + $0xe8] sm:$0xff]
        %v4136 = vld [vmem:[%s11 + $0xf0] sm:$0xff]
        %v4137 = vld [vmem:[%s11 + $0xf8] sm:$0xff]
        %v4138 = vld [vmem:[%s12] sm:$0x1]
        %v4140 = vperm.slane %v4105, 0
        %v4141 = vperm.slane %v4105, 1
        %4144 = vmatpush.msra.mxu0 %v4121
        %4145 = vmatpush.msra.mxu0 %v4120
        %4146 = vmatpush.msra.mxu0 %v4119
        %4147 = vmatpush.msra.mxu0 %v4118
        %4148 = vmatpush.msra.mxu0 %v4117
        %4149 = vmatpush.msra.mxu0 %v4116
        %4150 = vmatpush.msra.mxu0 %v4115
        %4151 = vmatpush.msra.mxu0 %v4114
        %4152 = vmatpush.msra.mxu0 %v4113
        %4153 = vmatpush.msra.mxu0 %v4112
        %4154 = vmatpush.msra.mxu0 %v4111
        %4155 = vmatpush.msra.mxu0 %v4110
        %4156 = vmatpush.msra.mxu0 %v4109
        %4157 = vmatpush.msra.mxu0 %v4108
        %4158 = vmatpush.msra.mxu0 %v4107
        %4159 = vmatpush.msra.mxu0 %v4106
        %4160 = vmatmul.f32.gmra.mxu0 %v4140
        %v4161 = vpop.f32.mrf.mxu0
        %v4162 = vadd.f32 %v4138, %v4161
        %4163 = vdwg.mxu0
        %4164 = vmatpush.msra.mxu0 %v4137
        %4165 = vmatpush.msra.mxu0 %v4136
        %4166 = vmatpush.msra.mxu0 %v4135
        %4167 = vmatpush.msra.mxu0 %v4134
        %4168 = vmatpush.msra.mxu0 %v4133
        %4169 = vmatpush.msra.mxu0 %v4132
        %4170 = vmatpush.msra.mxu0 %v4131
        %4171 = vmatpush.msra.mxu0 %v4130
        %4172 = vmatpush.msra.mxu0 %v4129
        %4173 = vmatpush.msra.mxu0 %v4128
        %4174 = vmatpush.msra.mxu0 %v4127
        %4175 = vmatpush.msra.mxu0 %v4126
        %4176 = vmatpush.msra.mxu0 %v4125
        %4177 = vmatpush.msra.mxu0 %v4124
        %4178 = vmatpush.msra.mxu0 %v4123
        %4179 = vmatpush.msra.mxu0 %v4122
        %4180 = vmatmul.f32.gmra.mxu0 %v4141
        %v4181 = vpop.f32.mrf.mxu0
        %v4182 = vadd.f32 %v4162, %v4181
        %4183 = vdwg.mxu0
        %v4184 = vld [vmem:[%s13] sm:$0x1]
        %v4185 = vmul.f32 %v4182, %v4184
        %v4186 = vld [vmem:[%s14] sm:$0x1]
        %v4187 = vadd.f32 %v4185, %v4186
        %v4188 = vmax.f32 %v4187, 0.0
        %v4189 = vld [vmem:[%s15] sm:$0xff]
        %v4190 = vld [vmem:[%s15 + $0x8] sm:$0xff]
        %v4191 = vld [vmem:[%s15 + $0x10] sm:$0xff]
        %v4192 = vld [vmem:[%s15 + $0x18] sm:$0xff]
        %v4193 = vld [vmem:[%s15 + $0x20] sm:$0xff]
        %v4194 = vld [vmem:[%s15 + $0x28] sm:$0xff]
        %v4195 = vld [vmem:[%s15 + $0x30] sm:$0xff]
        %v4196 = vld [vmem:[%s15 + $0x38] sm:$0xff]
        %v4197 = vld [vmem:[%s15 + $0x40] sm:$0xff]
        %v4198 = vld [vmem:[%s15 + $0x48] sm:$0xff]
        %v4199 = vld [vmem:[%s15 + $0x50] sm:$0xff]
        %v4200 = vld [vmem:[%s15 + $0x58] sm:$0xff]
        %v4201 = vld [vmem:[%s15 + $0x60] sm:$0xff]
        %v4202 = vld [vmem:[%s15 + $0x68] sm:$0xff]
        %v4203 = vld [vmem:[%s15 + $0x70] sm:$0xff]
        %v4204 = vld [vmem:[%s15 + $0x78] sm:$0xff]
        %v4205 = vld [vmem:[%s16] sm:$0x1]
        %4206 = vmatpush.msra.mxu0 %v4204
        %4207 = vmatpush.msra.mxu0 %v4203
        %4208 = vmatpush.msra.mxu0 %v4202
        %4209 = vmatpush.msra.mxu0 %v4201
        %4210 = vmatpush.msra.mxu0 %v4200
        %4211 = vmatpush.msra.mxu0 %v4199
        %4212 = vmatpush.msra.mxu0 %v4198
        %4213 = vmatpush.msra.mxu0 %v4197
        %4214 = vmatpush.msra.mxu0 %v4196
        %4215 = vmatpush.msra.mxu0 %v4195
        %4216 = vmatpush.msra.mxu0 %v4194
        %4217 = vmatpush.msra.mxu0 %v4193
        %4218 = vmatpush.msra.mxu0 %v4192
        %4219 = vmatpush.msra.mxu0 %v4191
        %4220 = vmatpush.msra.mxu0 %v4190
        %4221 = vmatpush.msra.mxu0 %v4189
        %4222 = vmatmul.f32.gmra.mxu0 %v4188
        %v4223 = vpop.f32.mrf.mxu0
        %v4224 = vadd.f32 %v4205, %v4223
        %4225 = vdwg.mxu0
        %vm4226 = vcmask 516096
        %4227 = vst.msk [vmem:[%s538] sm:$0x1] %vm4226, %v4224
        %s4228 = sand.u32 %s401, 1
        %s4229 = scalar_lea.sflag [#allocation3], %s4228
        %s4230 = sand.u32 %s401, 1
        %s4231 = scalar_lea.vmem [#allocation2], %s4230
        // Predicated region
        $region89: #{cnn_forward.1} parent=87 // pred_check
          %p4232 = pneg %p411
        $region90: #{cnn_forward.1} parent=87 // pred_check_branch
          %4234 = sbr.rel (%p4232) target = $region92
        $region91: #{cnn_forward.1} parent=87 // pred_region
          %4236 = vsyncadd %s4229, 0
          %s4237 = scalar_lea.hbm %s17, %s31
          %s4239 = sshll.u32 %s4231, 4
          %s4240 = int_to_ptr.vmem [resolvable:$true] %s4239
          %s4241 = sshll.u32 %s4237, 4
          %s4242 = int_to_ptr.hbm [resolvable:$true] %s4241
          %4244 = dma.vmem_to_hbm [thread:$0]  %s4240, 16, %s4242, %s4229
        $region92: #{cnn_forward.1} parent=87 // pred_fallthru
          _
      $region88: #{cnn_forward.1} parent=5 // pred_fallthru
        _
      %p4245 = scmp.le.s32.totalorder 2, %s26
      // Predicated region
      $region93: #{cnn_forward.1} parent=5 // pred_check
        %p4246 = pneg %p4245
      $region94: #{cnn_forward.1} parent=5 // pred_check_branch
        %4248 = sbr.rel (%p4246) target = $region96
      $region95: #{cnn_forward.1} parent=5 // pred_region
        %s4249 = ssub.s32 %s26, 2
        // Predicated region
        $region97: #{cnn_forward.1} parent=95 // pred_check
          %p4250 = pneg %p417
        $region98: #{cnn_forward.1} parent=95 // pred_check_branch
          %4252 = sbr.rel (%p4250) target = $region100
        $region99: #{cnn_forward.1} parent=95 // pred_region
          %s4253 = sand.u32 %s402, 1
          %s4254 = scalar_lea.sflag [#allocation3], %s4253
          %s4255 = sand.u32 %s402, 1
          %s4256 = scalar_lea.vmem [#allocation2], %s4255
          %4258 = dma.done %s4254, 16
        $region100: #{cnn_forward.1} parent=95 // pred_fallthru
          _
      $region96: #{cnn_forward.1} parent=5 // pred_fallthru
        _
    $region6: #{cnn_forward.1} parent=1 // loop_footer
      %s30 = sadd.s32 1, %s26
    $region7: #{cnn_forward.1} parent=1 // loop_footer_branch
      %25 = sbr.rel target = $region3
    $region8: #{cnn_forward.1} parent=1 // loop_exit
      _
    %4259 = vsyncpa [#allocation3], 1
    %s4260 = scalar_lea.sflag [#allocation3], 1
    %4261 = vsyncpa %s4260, 1

</llo_original>
